<compile_context>
chip_gen: v7x
topology: tpu7x:2x2x1
jax: 0.10.0
libtpu: 0.0.40
codegen_flags: <defaults>
</compile_context>

<pallas_src>
import functools
import math

import jax
import jax.numpy as jnp
from jax.experimental import pallas as pl
from jax.experimental.pallas import tpu as pltpu


def mha_kernel(xq_ref, xk_ref, xv_ref,
               wq_ref, wk_ref, wv_ref, wm_ref,
               bq_ref, bk_ref, bv_ref, bm_ref,
               o_ref,
               k_scr, v_scr,
               *, num_heads, head_dim):
    """One (batch, q-tile) grid step; all heads processed inside.

    xq_ref:          (1, TQ, C) bf16 channels-last queries
    xk_ref, xv_ref:  (1, N,  C) bf16 channels-last keys / values
                     (block index constant within a batch -> DMA'd once/batch)
    wq/wk/wv_ref:    (C, C) bf16 projection weights, head-major output columns
                     (1/sqrt(head_dim) folded into wq)
    wm_ref:          (C, C) bf16 merge weight, head-major input rows
    bq/bk/bv_ref:    (1, C) f32 projection biases (head-major)
    bm_ref:          (1, C) f32 merge bias
    o_ref:           (1, TQ, C) f32 output (written exactly once per step)
    k_scr, v_scr:    (N, C) bf16 VMEM scratch: per-batch projected K / V,
                     persisted across the q-tile grid axis.
    """
    qi = pl.program_id(1)

    # ---- K/V projections: once per batch (q-tile axis is innermost). -------
    @pl.when(qi == 0)
    def _():
        k = jnp.dot(xk_ref[0], wk_ref[...],
                    preferred_element_type=jnp.float32) + bk_ref[...]
        v = jnp.dot(xv_ref[0], wv_ref[...],
                    preferred_element_type=jnp.float32) + bv_ref[...]
        k_scr[...] = k.astype(jnp.bfloat16)
        v_scr[...] = v.astype(jnp.bfloat16)

    # ---- Q projection for this tile (full MXU width; scale folded in). -----
    q = jnp.dot(xq_ref[0], wq_ref[...],
                preferred_element_type=jnp.float32) + bq_ref[...]   # (TQ, C)
    q = q.astype(jnp.bfloat16)

    # ---- Per-head attention + merge accumulation (heads unrolled). ---------
    acc = None
    for h in range(num_heads):
        sl = slice(h * head_dim, (h + 1) * head_dim)
        q_h = q[:, sl]                                              # (TQ, dim)
        k_h = k_scr[:, sl]                                          # (N,  dim)
        v_h = v_scr[:, sl]                                          # (N,  dim)

        # scores[n, m] = <q_n, k_m> (scale already folded into wq/bq);
        # contract the last axes directly -> no materialized k.T.
        s = jax.lax.dot_general(q_h, k_h, (((1,), (1,)), ((), ())),
                                preferred_element_type=jnp.float32)  # (TQ, N)

        # Numerically stable softmax in f32; normalization deferred past PV.
        s = s - jnp.max(s, axis=-1, keepdims=True)
        p = jnp.exp(s)
        l = jnp.sum(p, axis=-1, keepdims=True)                       # (TQ, 1)

        o_h = jnp.dot(p.astype(jnp.bfloat16), v_h,
                      preferred_element_type=jnp.float32)            # (TQ, dim)
        o_h = o_h * pl.reciprocal(l, approx=False)

        # Fold this head's merge contribution into the in-register accumulator
        # (sublane-aligned row slice of the resident merge weight).
        contrib = jnp.dot(o_h.astype(jnp.bfloat16), wm_ref[sl, :],
                          preferred_element_type=jnp.float32)        # (TQ, C)
        acc = contrib if acc is None else acc + contrib

    o_ref[0] = acc + bm_ref[...]


def _vmem_budget_bytes():
    """~75% of per-core VMEM (v5e/v6e: 128 MiB, v7x: 64 MiB), capped at 96 MiB."""
    cap = 64 * 1024 * 1024
    try:
        info = pltpu.get_tpu_info()
        cap = int(getattr(info, "vmem_capacity_bytes", cap)) or cap
    except Exception:
        pass
    return min(int(cap) * 3 // 4, 96 * 1024 * 1024)


def _vmem_estimate_bytes(tq, n, c):
    """Rough live-bytes estimate for one grid step (double-buffered blocks)."""
    score = tq * n * (4 + 4 + 2)          # s (f32), exp(s) (f32), bf16 copy for PV
    kv_scratch = 2 * n * c * 2            # projected K/V scratch (bf16)
    q_tmp = tq * c * (4 + 2)              # q f32 + bf16
    acc = tq * c * 4                      # merge accumulator (f32)
    io = 2 * (tq * c * 2) + 2 * 2 * (n * c * 2) + 2 * (tq * c * 4)
    weights = 4 * c * c * 2 + 5 * c * 4
    return score + kv_scratch + q_tmp + acc + io + weights


def _pick_block_q(n, c, budget):
    cands = sorted({t for t in (n, 4096, 2048, 1024, 512, 256, 128, 64, 32, 16, 8)
                    if t <= n and n % t == 0}, reverse=True)
    for t in cands:
        if _vmem_estimate_bytes(t, n, c) <= 0.8 * budget:
            return t
    return cands[-1]


def multi_headed_attention(query, key, value, params, num_heads, *, block_q=None):
    """query/key/value: (B, d_model, N) float32 (PyTorch NCW layout).

    params = [(wq, bq), (wk, bk), (wv, bv), (wm, bm)], each w: (C, C), b: (C,).
    Returns (B, d_model, N) float32, matching MultiHeadedAttention.forward.
    """
    (wq, bq), (wk, bk), (wv, bv), (wm, bm) = params
    B, d_model, N = query.shape
    assert d_model % num_heads == 0
    head_dim = d_model // num_heads
    scale = 1.0 / math.sqrt(head_dim)

    # PyTorch `.view(B, dim, H, N)` maps channel c = d*H + h; the kernel wants
    # head-major channels c' = h*dim + d.  perm[c'] = d*H + h.
    perm = jnp.arange(d_model).reshape(head_dim, num_heads).T.reshape(-1)

    # Full projection weights (C_in, C_out') with head-major output columns;
    # 1/sqrt(head_dim) folded into the query projection (weights + bias).
    wq_k = (wq[perm, :].T * scale).astype(jnp.bfloat16)
    wk_k = wk[perm, :].T.astype(jnp.bfloat16)
    wv_k = wv[perm, :].T.astype(jnp.bfloat16)
    # Merge weight (C_in', C_out) with head-major input rows.
    wm_k = wm[:, perm].T.astype(jnp.bfloat16)

    # Biases stay f32 (added after f32 accumulation).
    bq_k = (bq[perm] * scale)[None, :].astype(jnp.float32)
    bk_k = bk[perm][None, :].astype(jnp.float32)
    bv_k = bv[perm][None, :].astype(jnp.float32)
    bm_k = bm[None, :].astype(jnp.float32)

    # (B, C, N) -> (B, N, C) channels-last, bf16 MXU operands.
    xq = jnp.transpose(query, (0, 2, 1)).astype(jnp.bfloat16)
    xk = jnp.transpose(key, (0, 2, 1)).astype(jnp.bfloat16)
    xv = jnp.transpose(value, (0, 2, 1)).astype(jnp.bfloat16)

    budget = _vmem_budget_bytes()
    tq = block_q if block_q is not None else _pick_block_q(N, d_model, budget)
    assert N % tq == 0, (N, tq)
    num_q_tiles = N // tq

    kernel = functools.partial(mha_kernel, num_heads=num_heads, head_dim=head_dim)

    q_spec = pl.BlockSpec((1, tq, d_model), lambda b, qi: (b, qi, 0))
    kv_spec = pl.BlockSpec((1, N, d_model), lambda b, qi: (b, 0, 0))
    w_spec = pl.BlockSpec((d_model, d_model), lambda b, qi: (0, 0))
    bias_spec = pl.BlockSpec((1, d_model), lambda b, qi: (0, 0))
    out_spec = pl.BlockSpec((1, tq, d_model), lambda b, qi: (b, qi, 0))

    out = pl.pallas_call(
        kernel,
        out_shape=jax.ShapeDtypeStruct((B, N, d_model), jnp.float32),
        grid_spec=pltpu.PrefetchScalarGridSpec(
            num_scalar_prefetch=0,
            grid=(B, num_q_tiles),
            in_specs=[q_spec, kv_spec, kv_spec,
                      w_spec, w_spec, w_spec, w_spec,
                      bias_spec, bias_spec, bias_spec, bias_spec],
            out_specs=out_spec,
            scratch_shapes=[pltpu.VMEM((N, d_model), jnp.bfloat16),
                            pltpu.VMEM((N, d_model), jnp.bfloat16)]),
        compiler_params=pltpu.CompilerParams(
            # q-tile axis must stay "arbitrary": the K/V scratch filled at
            # qi == 0 is reused by later q-tiles of the same batch.
            dimension_semantics=("parallel", "arbitrary"),
            vmem_limit_bytes=budget,
        ),
    )(xq, xk, xv, wq_k, wk_k, wv_k, wm_k, bq_k, bk_k, bv_k, bm_k)

    # Back to PyTorch layout (B, d_model, N).
    return jnp.transpose(out, (0, 2, 1))


def reference(query, key, value, params, num_heads):
    """Pure-JAX f32 reproduction of the PyTorch forward, for verification."""
    (wq, bq), (wk, bk), (wv, bv), (wm, bm) = params
    B, d_model, N = query.shape
    head_dim = d_model // num_heads

    def conv1x1(x, w, b):
        return jnp.einsum('oi,bin->bon', w, x) + b[None, :, None]

    q = conv1x1(query, wq, bq).reshape(B, head_dim, num_heads, N)
    k = conv1x1(key, wk, bk).reshape(B, head_dim, num_heads, N)
    v = conv1x1(value, wv, bv).reshape(B, head_dim, num_heads, N)

    scores = jnp.einsum('bdhn,bdhm->bhnm', q, k) / head_dim ** 0.5
    prob = jax.nn.softmax(scores, axis=-1)
    x = jnp.einsum('bhnm,bdhm->bdhn', prob, v).reshape(B, d_model, N)
    return conv1x1(x, wm, bm)


if __name__ == "__main__":
    # SuperGlue-like config, kept small: d_model=256, 4 heads (dim=64), N=256.
    B, d_model, N = 2, 256, 256
    num_heads = 4

    key0 = jax.random.PRNGKey(0)
    keys = jax.random.split(key0, 12)

    # Deterministic synthetic parameters: 4 Conv1d(d_model, d_model, 1) layers
    # (proj_q, proj_k, proj_v, merge).  Conv1d weight (O, I, 1) -> (O, I).
    init = 1.0 / math.sqrt(d_model)
    params = []
    for i in range(4):
        w = jax.random.uniform(keys[2 * i], (d_model, d_model),
                               minval=-init, maxval=init, dtype=jnp.float32)
        b = jax.random.uniform(keys[2 * i + 1], (d_model,),
                               minval=-init, maxval=init, dtype=jnp.float32)
        params.append((w, b))

    query = jax.random.normal(keys[8], (B, d_model, N), dtype=jnp.float32)
    key_t = jax.random.normal(keys[9], (B, d_model, N), dtype=jnp.float32)
    value = jax.random.normal(keys[10], (B, d_model, N), dtype=jnp.float32)

    # block_q=128 -> 2 q-tiles per batch: exercises the per-batch K/V-scratch
    # reuse path (qi > 0) and the batch-boundary refresh.
    out = multi_headed_attention(query, key_t, value, params, num_heads,
                                 block_q=128)
    out = jax.block_until_ready(out)

    ref = reference(query, key_t, value, params, num_heads)
    assert out.shape == (B, d_model, N)
    # bf16 matmul operands (f32 accumulation) -> loosened tolerance vs the
    # f32 reference (intentional precision contract).
    err = float(jnp.max(jnp.abs(out - ref)))
    assert jnp.allclose(out, ref, atol=3e-2, rtol=3e-2), err

    print("KERNEL_OK")
</pallas_src>

<mosaic_0001>
module attributes {stable_mosaic.version = 11 : i64} {
  func.func @mha_kernel(%arg0: i32, %arg1: i32, %arg2: memref<1x128x256xbf16, #tpu.memory_space<vmem>>, %arg3: memref<1x256x256xbf16, #tpu.memory_space<vmem>>, %arg4: memref<1x256x256xbf16, #tpu.memory_space<vmem>>, %arg5: memref<256x256xbf16, #tpu.memory_space<vmem>>, %arg6: memref<256x256xbf16, #tpu.memory_space<vmem>>, %arg7: memref<256x256xbf16, #tpu.memory_space<vmem>>, %arg8: memref<256x256xbf16, #tpu.memory_space<vmem>>, %arg9: memref<1x256xf32, #tpu.memory_space<vmem>>, %arg10: memref<1x256xf32, #tpu.memory_space<vmem>>, %arg11: memref<1x256xf32, #tpu.memory_space<vmem>>, %arg12: memref<1x256xf32, #tpu.memory_space<vmem>>, %arg13: memref<1x128x256xf32, #tpu.memory_space<vmem>>, %arg14: memref<256x256xbf16, #tpu.memory_space<vmem>>, %arg15: memref<256x256xbf16, #tpu.memory_space<vmem>>) attributes {dimension_semantics = [#tpu.dimension_semantics<parallel>, #tpu.dimension_semantics<arbitrary>], iteration_bounds = array<i64: 2, 2>, scalar_prefetch = 0 : i64, scratch_operands = 2 : i64, tpu.core_type = #tpu.core_type<tc>, window_params = [{transform_indices = @transform_0, window_bounds = array<i64: 1, 128, 256>}, {transform_indices = @transform_1, window_bounds = array<i64: 1, 256, 256>}, {transform_indices = @transform_2, window_bounds = array<i64: 1, 256, 256>}, {pipeline_mode = #tpu.pipeline_mode<synchronous>, transform_indices = @transform_3, window_bounds = array<i64: 256, 256>}, {pipeline_mode = #tpu.pipeline_mode<synchronous>, transform_indices = @transform_4, window_bounds = array<i64: 256, 256>}, {pipeline_mode = #tpu.pipeline_mode<synchronous>, transform_indices = @transform_5, window_bounds = array<i64: 256, 256>}, {pipeline_mode = #tpu.pipeline_mode<synchronous>, transform_indices = @transform_6, window_bounds = array<i64: 256, 256>}, {pipeline_mode = #tpu.pipeline_mode<synchronous>, transform_indices = @transform_7, window_bounds = array<i64: 1, 256>}, {pipeline_mode = #tpu.pipeline_mode<synchronous>, transform_indices = @transform_8, window_bounds = array<i64: 1, 256>}, {pipeline_mode = #tpu.pipeline_mode<synchronous>, transform_indices = @transform_9, window_bounds = array<i64: 1, 256>}, {pipeline_mode = #tpu.pipeline_mode<synchronous>, transform_indices = @transform_10, window_bounds = array<i64: 1, 256>}, {transform_indices = @transform_11, window_bounds = array<i64: 1, 128, 256>}]} {
    %c0_i32 = arith.constant 0 : i32
    %0 = arith.cmpi eq, %arg1, %c0_i32 : i32
    %1 = arith.extui %0 : i1 to i32
    %c0_i32_0 = arith.constant 0 : i32
    %2 = arith.cmpi ne, %1, %c0_i32_0 : i32
    scf.if %2 {
      %c0_53 = arith.constant 0 : index
      %c0_54 = arith.constant 0 : index
      %c0_55 = arith.constant 0 : index
      %96 = vector.load %arg3[%c0_53, %c0_54, %c0_55] : memref<1x256x256xbf16, #tpu.memory_space<vmem>>, vector<1x256x256xbf16>
      %97 = vector.shape_cast %96 : vector<1x256x256xbf16> to vector<256x256xbf16>
      %c0_56 = arith.constant 0 : index
      %c0_57 = arith.constant 0 : index
      %98 = vector.load %arg6[%c0_56, %c0_57] : memref<256x256xbf16, #tpu.memory_space<vmem>>, vector<256x256xbf16>
      %cst_58 = arith.constant dense<0.000000e+00> : vector<256x256xf32>
      %99 = tpu.matmul %97, %98, %cst_58 {dimension_numbers = #tpu.dot_dimension_numbers<[1], [0], [0], [1], [0, 0, 1, 1], [], []>} : vector<256x256xbf16>, vector<256x256xbf16>, vector<256x256xf32> -> vector<256x256xf32>
      %c0_59 = arith.constant 0 : index
      %c0_60 = arith.constant 0 : index
      %100 = vector.load %arg10[%c0_59, %c0_60] : memref<1x256xf32, #tpu.memory_space<vmem>>, vector<1x256xf32>
      %101 = vector.broadcast %100 : vector<1x256xf32> to vector<256x256xf32>
      %102 = arith.addf %99, %101 : vector<256x256xf32>
      %c0_61 = arith.constant 0 : index
      %c0_62 = arith.constant 0 : index
      %c0_63 = arith.constant 0 : index
      %103 = vector.load %arg4[%c0_61, %c0_62, %c0_63] : memref<1x256x256xbf16, #tpu.memory_space<vmem>>, vector<1x256x256xbf16>
      %104 = vector.shape_cast %103 : vector<1x256x256xbf16> to vector<256x256xbf16>
      %c0_64 = arith.constant 0 : index
      %c0_65 = arith.constant 0 : index
      %105 = vector.load %arg7[%c0_64, %c0_65] : memref<256x256xbf16, #tpu.memory_space<vmem>>, vector<256x256xbf16>
      %cst_66 = arith.constant dense<0.000000e+00> : vector<256x256xf32>
      %106 = tpu.matmul %104, %105, %cst_66 {dimension_numbers = #tpu.dot_dimension_numbers<[1], [0], [0], [1], [0, 0, 1, 1], [], []>} : vector<256x256xbf16>, vector<256x256xbf16>, vector<256x256xf32> -> vector<256x256xf32>
      %c0_67 = arith.constant 0 : index
      %c0_68 = arith.constant 0 : index
      %107 = vector.load %arg11[%c0_67, %c0_68] : memref<1x256xf32, #tpu.memory_space<vmem>>, vector<1x256xf32>
      %108 = vector.broadcast %107 : vector<1x256xf32> to vector<256x256xf32>
      %109 = arith.addf %106, %108 : vector<256x256xf32>
      %110 = arith.truncf %102 : vector<256x256xf32> to vector<256x256xbf16>
      %c0_69 = arith.constant 0 : index
      %c0_70 = arith.constant 0 : index
      %111 = vector.load %arg14[%c0_69, %c0_70] : memref<256x256xbf16, #tpu.memory_space<vmem>>, vector<256x256xbf16>
      tpu.vector_store %arg14[%c0_69, %c0_70], %110 {strides = array<i32>} : memref<256x256xbf16, #tpu.memory_space<vmem>>, vector<256x256xbf16>,
      %112 = arith.truncf %109 : vector<256x256xf32> to vector<256x256xbf16>
      %c0_71 = arith.constant 0 : index
      %c0_72 = arith.constant 0 : index
      %113 = vector.load %arg15[%c0_71, %c0_72] : memref<256x256xbf16, #tpu.memory_space<vmem>>, vector<256x256xbf16>
      tpu.vector_store %arg15[%c0_71, %c0_72], %112 {strides = array<i32>} : memref<256x256xbf16, #tpu.memory_space<vmem>>, vector<256x256xbf16>,
    } else {
    }
    %c0 = arith.constant 0 : index
    %c0_1 = arith.constant 0 : index
    %c0_2 = arith.constant 0 : index
    %3 = vector.load %arg2[%c0, %c0_1, %c0_2] : memref<1x128x256xbf16, #tpu.memory_space<vmem>>, vector<1x128x256xbf16>
    %4 = vector.shape_cast %3 : vector<1x128x256xbf16> to vector<128x256xbf16>
    %c0_3 = arith.constant 0 : index
    %c0_4 = arith.constant 0 : index
    %5 = vector.load %arg5[%c0_3, %c0_4] : memref<256x256xbf16, #tpu.memory_space<vmem>>, vector<256x256xbf16>
    %cst = arith.constant dense<0.000000e+00> : vector<128x256xf32>
    %6 = tpu.matmul %4, %5, %cst {dimension_numbers = #tpu.dot_dimension_numbers<[1], [0], [0], [1], [0, 0, 1, 1], [], []>} : vector<128x256xbf16>, vector<256x256xbf16>, vector<128x256xf32> -> vector<128x256xf32>
    %c0_5 = arith.constant 0 : index
    %c0_6 = arith.constant 0 : index
    %7 = vector.load %arg9[%c0_5, %c0_6] : memref<1x256xf32, #tpu.memory_space<vmem>>, vector<1x256xf32>
    %8 = vector.broadcast %7 : vector<1x256xf32> to vector<128x256xf32>
    %9 = arith.addf %6, %8 : vector<128x256xf32>
    %10 = arith.truncf %9 : vector<128x256xf32> to vector<128x256xbf16>
    %11 = vector.extract_strided_slice %10 {offsets = [0, 0], sizes = [128, 64], strides = [1, 1]} : vector<128x256xbf16> to vector<128x64xbf16>
    %c0_7 = arith.constant 0 : index
    %c0_8 = arith.constant 0 : index
    %12 = vector.load %arg14[%c0_7, %c0_8] : memref<256x256xbf16, #tpu.memory_space<vmem>>, vector<256x64xbf16>
    %c0_9 = arith.constant 0 : index
    %c0_10 = arith.constant 0 : index
    %13 = vector.load %arg15[%c0_9, %c0_10] : memref<256x256xbf16, #tpu.memory_space<vmem>>, vector<256x64xbf16>
    %cst_11 = arith.constant dense<0.000000e+00> : vector<128x256xf32>
    %14 = tpu.matmul %11, %12, %cst_11 {dimension_numbers = #tpu.dot_dimension_numbers<[1], [1], [0], [0], [0, 0, 1, 0], [], []>} : vector<128x64xbf16>, vector<256x64xbf16>, vector<128x256xf32> -> vector<128x256xf32>
    %cst_12 = arith.constant dense<0xFF800000> : vector<128xf32>
    %15 = vector.multi_reduction <maximumf>, %14, %cst_12 [1] : vector<128x256xf32> to vector<128xf32>
    %16 = vector.shape_cast %15 : vector<128xf32> to vector<128x1xf32>
    %17 = vector.broadcast %16 : vector<128x1xf32> to vector<128x256xf32>
    %18 = arith.subf %14, %17 : vector<128x256xf32>
    %19 = math.exp %18 : vector<128x256xf32>
    %cst_13 = arith.constant dense<0.000000e+00> : vector<128xf32>
    %20 = vector.multi_reduction <add>, %19, %cst_13 [1] : vector<128x256xf32> to vector<128xf32>
    %21 = vector.shape_cast %20 : vector<128xf32> to vector<128x1xf32>
    %22 = arith.truncf %19 : vector<128x256xf32> to vector<128x256xbf16>
    %cst_14 = arith.constant dense<0.000000e+00> : vector<128x64xf32>
    %23 = tpu.matmul %22, %13, %cst_14 {dimension_numbers = #tpu.dot_dimension_numbers<[1], [0], [0], [1], [0, 0, 1, 1], [], []>} : vector<128x256xbf16>, vector<256x64xbf16>, vector<128x64xf32> -> vector<128x64xf32>
    %24 = tpu.reciprocal %21 : vector<128x1xf32> -> vector<128x1xf32>
    %25 = vector.broadcast %24 : vector<128x1xf32> to vector<128x64xf32>
    %26 = arith.mulf %23, %25 : vector<128x64xf32>
    %27 = arith.truncf %26 : vector<128x64xf32> to vector<128x64xbf16>
    %c0_15 = arith.constant 0 : index
    %c0_16 = arith.constant 0 : index
    %28 = vector.load %arg8[%c0_15, %c0_16] : memref<256x256xbf16, #tpu.memory_space<vmem>>, vector<64x256xbf16>
    %cst_17 = arith.constant dense<0.000000e+00> : vector<128x256xf32>
    %29 = tpu.matmul %27, %28, %cst_17 {dimension_numbers = #tpu.dot_dimension_numbers<[1], [0], [0], [1], [0, 0, 1, 1], [], []>} : vector<128x64xbf16>, vector<64x256xbf16>, vector<128x256xf32> -> vector<128x256xf32>
    %30 = vector.extract_strided_slice %10 {offsets = [0, 64], sizes = [128, 64], strides = [1, 1]} : vector<128x256xbf16> to vector<128x64xbf16>
    %c0_18 = arith.constant 0 : index
    %c64 = arith.constant 64 : index
    %31 = vector.load %arg14[%c0_18, %c64] : memref<256x256xbf16, #tpu.memory_space<vmem>>, vector<256x64xbf16>
    %c0_19 = arith.constant 0 : index
    %c64_20 = arith.constant 64 : index
    %32 = vector.load %arg15[%c0_19, %c64_20] : memref<256x256xbf16, #tpu.memory_space<vmem>>, vector<256x64xbf16>
    %cst_21 = arith.constant dense<0.000000e+00> : vector<128x256xf32>
    %33 = tpu.matmul %30, %31, %cst_21 {dimension_numbers = #tpu.dot_dimension_numbers<[1], [1], [0], [0], [0, 0, 1, 0], [], []>} : vector<128x64xbf16>, vector<256x64xbf16>, vector<128x256xf32> -> vector<128x256xf32>
    %cst_22 = arith.constant dense<0xFF800000> : vector<128xf32>
    %34 = vector.multi_reduction <maximumf>, %33, %cst_22 [1] : vector<128x256xf32> to vector<128xf32>
    %35 = vector.shape_cast %34 : vector<128xf32> to vector<128x1xf32>
    %36 = vector.broadcast %35 : vector<128x1xf32> to vector<128x256xf32>
    %37 = arith.subf %33, %36 : vector<128x256xf32>
    %38 = math.exp %37 : vector<128x256xf32>
    %cst_23 = arith.constant dense<0.000000e+00> : vector<128xf32>
    %39 = vector.multi_reduction <add>, %38, %cst_23 [1] : vector<128x256xf32> to vector<128xf32>
    %40 = vector.shape_cast %39 : vector<128xf32> to vector<128x1xf32>
    %41 = arith.truncf %38 : vector<128x256xf32> to vector<128x256xbf16>
    %cst_24 = arith.constant dense<0.000000e+00> : vector<128x64xf32>
    %42 = tpu.matmul %41, %32, %cst_24 {dimension_numbers = #tpu.dot_dimension_numbers<[1], [0], [0], [1], [0, 0, 1, 1], [], []>} : vector<128x256xbf16>, vector<256x64xbf16>, vector<128x64xf32> -> vector<128x64xf32>
    %43 = tpu.reciprocal %40 : vector<128x1xf32> -> vector<128x1xf32>
    %44 = vector.broadcast %43 : vector<128x1xf32> to vector<128x64xf32>
    %45 = arith.mulf %42, %44 : vector<128x64xf32>
    %46 = arith.truncf %45 : vector<128x64xf32> to vector<128x64xbf16>
    %c64_25 = arith.constant 64 : index
    %c0_26 = arith.constant 0 : index
    %47 = vector.load %arg8[%c64_25, %c0_26] : memref<256x256xbf16, #tpu.memory_space<vmem>>, vector<64x256xbf16>
    %cst_27 = arith.constant dense<0.000000e+00> : vector<128x256xf32>
    %48 = tpu.matmul %46, %47, %cst_27 {dimension_numbers = #tpu.dot_dimension_numbers<[1], [0], [0], [1], [0, 0, 1, 1], [], []>} : vector<128x64xbf16>, vector<64x256xbf16>, vector<128x256xf32> -> vector<128x256xf32>
    %49 = arith.addf %29, %48 : vector<128x256xf32>
    %50 = vector.extract_strided_slice %10 {offsets = [0, 128], sizes = [128, 64], strides = [1, 1]} : vector<128x256xbf16> to vector<128x64xbf16>
    %c0_28 = arith.constant 0 : index
    %c128 = arith.constant 128 : index
    %51 = vector.load %arg14[%c0_28, %c128] : memref<256x256xbf16, #tpu.memory_space<vmem>>, vector<256x64xbf16>
    %c0_29 = arith.constant 0 : index
    %c128_30 = arith.constant 128 : index
    %52 = vector.load %arg15[%c0_29, %c128_30] : memref<256x256xbf16, #tpu.memory_space<vmem>>, vector<256x64xbf16>
    %cst_31 = arith.constant dense<0.000000e+00> : vector<128x256xf32>
    %53 = tpu.matmul %50, %51, %cst_31 {dimension_numbers = #tpu.dot_dimension_numbers<[1], [1], [0], [0], [0, 0, 1, 0], [], []>} : vector<128x64xbf16>, vector<256x64xbf16>, vector<128x256xf32> -> vector<128x256xf32>
    %cst_32 = arith.constant dense<0xFF800000> : vector<128xf32>
    %54 = vector.multi_reduction <maximumf>, %53, %cst_32 [1] : vector<128x256xf32> to vector<128xf32>
    %55 = vector.shape_cast %54 : vector<128xf32> to vector<128x1xf32>
    %56 = vector.broadcast %55 : vector<128x1xf32> to vector<128x256xf32>
    %57 = arith.subf %53, %56 : vector<128x256xf32>
    %58 = math.exp %57 : vector<128x256xf32>
    %cst_33 = arith.constant dense<0.000000e+00> : vector<128xf32>
    %59 = vector.multi_reduction <add>, %58, %cst_33 [1] : vector<128x256xf32> to vector<128xf32>
    %60 = vector.shape_cast %59 : vector<128xf32> to vector<128x1xf32>
    %61 = arith.truncf %58 : vector<128x256xf32> to vector<128x256xbf16>
    %cst_34 = arith.constant dense<0.000000e+00> : vector<128x64xf32>
    %62 = tpu.matmul %61, %52, %cst_34 {dimension_numbers = #tpu.dot_dimension_numbers<[1], [0], [0], [1], [0, 0, 1, 1], [], []>} : vector<128x256xbf16>, vector<256x64xbf16>, vector<128x64xf32> -> vector<128x64xf32>
    %63 = tpu.reciprocal %60 : vector<128x1xf32> -> vector<128x1xf32>
    %64 = vector.broadcast %63 : vector<128x1xf32> to vector<128x64xf32>
    %65 = arith.mulf %62, %64 : vector<128x64xf32>
    %66 = arith.truncf %65 : vector<128x64xf32> to vector<128x64xbf16>
    %c128_35 = arith.constant 128 : index
    %c0_36 = arith.constant 0 : index
    %67 = vector.load %arg8[%c128_35, %c0_36] : memref<256x256xbf16, #tpu.memory_space<vmem>>, vector<64x256xbf16>
    %cst_37 = arith.constant dense<0.000000e+00> : vector<128x256xf32>
    %68 = tpu.matmul %66, %67, %cst_37 {dimension_numbers = #tpu.dot_dimension_numbers<[1], [0], [0], [1], [0, 0, 1, 1], [], []>} : vector<128x64xbf16>, vector<64x256xbf16>, vector<128x256xf32> -> vector<128x256xf32>
    %69 = arith.addf %49, %68 : vector<128x256xf32>
    %70 = vector.extract_strided_slice %10 {offsets = [0, 192], sizes = [128, 64], strides = [1, 1]} : vector<128x256xbf16> to vector<128x64xbf16>
    %c0_38 = arith.constant 0 : index
    %c192 = arith.constant 192 : index
    %71 = vector.load %arg14[%c0_38, %c192] : memref<256x256xbf16, #tpu.memory_space<vmem>>, vector<256x64xbf16>
    %c0_39 = arith.constant 0 : index
    %c192_40 = arith.constant 192 : index
    %72 = vector.load %arg15[%c0_39, %c192_40] : memref<256x256xbf16, #tpu.memory_space<vmem>>, vector<256x64xbf16>
    %cst_41 = arith.constant dense<0.000000e+00> : vector<128x256xf32>
    %73 = tpu.matmul %70, %71, %cst_41 {dimension_numbers = #tpu.dot_dimension_numbers<[1], [1], [0], [0], [0, 0, 1, 0], [], []>} : vector<128x64xbf16>, vector<256x64xbf16>, vector<128x256xf32> -> vector<128x256xf32>
    %cst_42 = arith.constant dense<0xFF800000> : vector<128xf32>
    %74 = vector.multi_reduction <maximumf>, %73, %cst_42 [1] : vector<128x256xf32> to vector<128xf32>
    %75 = vector.shape_cast %74 : vector<128xf32> to vector<128x1xf32>
    %76 = vector.broadcast %75 : vector<128x1xf32> to vector<128x256xf32>
    %77 = arith.subf %73, %76 : vector<128x256xf32>
    %78 = math.exp %77 : vector<128x256xf32>
    %cst_43 = arith.constant dense<0.000000e+00> : vector<128xf32>
    %79 = vector.multi_reduction <add>, %78, %cst_43 [1] : vector<128x256xf32> to vector<128xf32>
    %80 = vector.shape_cast %79 : vector<128xf32> to vector<128x1xf32>
    %81 = arith.truncf %78 : vector<128x256xf32> to vector<128x256xbf16>
    %cst_44 = arith.constant dense<0.000000e+00> : vector<128x64xf32>
    %82 = tpu.matmul %81, %72, %cst_44 {dimension_numbers = #tpu.dot_dimension_numbers<[1], [0], [0], [1], [0, 0, 1, 1], [], []>} : vector<128x256xbf16>, vector<256x64xbf16>, vector<128x64xf32> -> vector<128x64xf32>
    %83 = tpu.reciprocal %80 : vector<128x1xf32> -> vector<128x1xf32>
    %84 = vector.broadcast %83 : vector<128x1xf32> to vector<128x64xf32>
    %85 = arith.mulf %82, %84 : vector<128x64xf32>
    %86 = arith.truncf %85 : vector<128x64xf32> to vector<128x64xbf16>
    %c192_45 = arith.constant 192 : index
    %c0_46 = arith.constant 0 : index
    %87 = vector.load %arg8[%c192_45, %c0_46] : memref<256x256xbf16, #tpu.memory_space<vmem>>, vector<64x256xbf16>
    %cst_47 = arith.constant dense<0.000000e+00> : vector<128x256xf32>
    %88 = tpu.matmul %86, %87, %cst_47 {dimension_numbers = #tpu.dot_dimension_numbers<[1], [0], [0], [1], [0, 0, 1, 1], [], []>} : vector<128x64xbf16>, vector<64x256xbf16>, vector<128x256xf32> -> vector<128x256xf32>
    %89 = arith.addf %69, %88 : vector<128x256xf32>
    %c0_48 = arith.constant 0 : index
    %c0_49 = arith.constant 0 : index
    %90 = vector.load %arg12[%c0_48, %c0_49] : memref<1x256xf32, #tpu.memory_space<vmem>>, vector<1x256xf32>
    %91 = vector.broadcast %90 : vector<1x256xf32> to vector<128x256xf32>
    %92 = arith.addf %89, %91 : vector<128x256xf32>
    %c0_50 = arith.constant 0 : index
    %c0_51 = arith.constant 0 : index
    %c0_52 = arith.constant 0 : index
    %93 = vector.load %arg13[%c0_50, %c0_51, %c0_52] : memref<1x128x256xf32, #tpu.memory_space<vmem>>, vector<1x128x256xf32>
    %94 = vector.shape_cast %93 : vector<1x128x256xf32> to vector<128x256xf32>
    %95 = vector.shape_cast %92 : vector<128x256xf32> to vector<1x128x256xf32>
    tpu.vector_store %arg13[%c0_50, %c0_51, %c0_52], %95 {strides = array<i32>} : memref<1x128x256xf32, #tpu.memory_space<vmem>>, vector<1x128x256xf32>,
    return
  }
  func.func @transform_0(%arg0: i32, %arg1: i32) -> (i32, i32, i32) {
    %c0_i32 = arith.constant 0 : i32
    %c0_i32_0 = arith.constant 0 : i32
    return %arg0, %arg1, %c0_i32 : i32, i32, i32
  }
  func.func @transform_1(%arg0: i32, %arg1: i32) -> (i32, i32, i32) {
    %c0_i32 = arith.constant 0 : i32
    %c0_i32_0 = arith.constant 0 : i32
    %c0_i32_1 = arith.constant 0 : i32
    return %arg0, %c0_i32, %c0_i32_0 : i32, i32, i32
  }
  func.func @transform_2(%arg0: i32, %arg1: i32) -> (i32, i32, i32) {
    %c0_i32 = arith.constant 0 : i32
    %c0_i32_0 = arith.constant 0 : i32
    %c0_i32_1 = arith.constant 0 : i32
    return %arg0, %c0_i32, %c0_i32_0 : i32, i32, i32
  }
  func.func @transform_3(%arg0: i32, %arg1: i32) -> (i32, i32) {
    %c0_i32 = arith.constant 0 : i32
    %c0_i32_0 = arith.constant 0 : i32
    %c0_i32_1 = arith.constant 0 : i32
    return %c0_i32, %c0_i32_0 : i32, i32
  }
  func.func @transform_4(%arg0: i32, %arg1: i32) -> (i32, i32) {
    %c0_i32 = arith.constant 0 : i32
    %c0_i32_0 = arith.constant 0 : i32
    %c0_i32_1 = arith.constant 0 : i32
    return %c0_i32, %c0_i32_0 : i32, i32
  }
  func.func @transform_5(%arg0: i32, %arg1: i32) -> (i32, i32) {
    %c0_i32 = arith.constant 0 : i32
    %c0_i32_0 = arith.constant 0 : i32
    %c0_i32_1 = arith.constant 0 : i32
    return %c0_i32, %c0_i32_0 : i32, i32
  }
  func.func @transform_6(%arg0: i32, %arg1: i32) -> (i32, i32) {
    %c0_i32 = arith.constant 0 : i32
    %c0_i32_0 = arith.constant 0 : i32
    %c0_i32_1 = arith.constant 0 : i32
    return %c0_i32, %c0_i32_0 : i32, i32
  }
  func.func @transform_7(%arg0: i32, %arg1: i32) -> (i32, i32) {
    %c0_i32 = arith.constant 0 : i32
    %c0_i32_0 = arith.constant 0 : i32
    %c0_i32_1 = arith.constant 0 : i32
    return %c0_i32, %c0_i32_0 : i32, i32
  }
  func.func @transform_8(%arg0: i32, %arg1: i32) -> (i32, i32) {
    %c0_i32 = arith.constant 0 : i32
    %c0_i32_0 = arith.constant 0 : i32
    %c0_i32_1 = arith.constant 0 : i32
    return %c0_i32, %c0_i32_0 : i32, i32
  }
  func.func @transform_9(%arg0: i32, %arg1: i32) -> (i32, i32) {
    %c0_i32 = arith.constant 0 : i32
    %c0_i32_0 = arith.constant 0 : i32
    %c0_i32_1 = arith.constant 0 : i32
    return %c0_i32, %c0_i32_0 : i32, i32
  }
  func.func @transform_10(%arg0: i32, %arg1: i32) -> (i32, i32) {
    %c0_i32 = arith.constant 0 : i32
    %c0_i32_0 = arith.constant 0 : i32
    %c0_i32_1 = arith.constant 0 : i32
    return %c0_i32, %c0_i32_0 : i32, i32
  }
  func.func @transform_11(%arg0: i32, %arg1: i32) -> (i32, i32, i32) {
    %c0_i32 = arith.constant 0 : i32
    %c0_i32_0 = arith.constant 0 : i32
    return %arg0, %arg1, %c0_i32 : i32, i32, i32
  }
}

</mosaic_0001>

<llo_original>
// kernel: tpu_custom_call.1
$region0: #{tpu_custom_call.1}
  #allocation0 [shape = 'u32[]', space=smem, size = 0x4, offset = 0x4, fixed_abs, tag = 'smem constant byte address 0x4 - core index']
  #allocation1 [shape = 'u32[144,128]{1,0:T(1,128)}', space=vmem, size = 0x12000, scoped, tag = 'internal scratch']
  #allocation2 [shape = 'bf16[256,256]{1,0:T(16,128)(2,1)}', space=vmem, size = 0x20000, scoped, tag = 'scratch operand']
  #allocation3 [shape = 'bf16[256,256]{1,0:T(16,128)(2,1)}', space=vmem, size = 0x20000, scoped, tag = 'scratch operand']
  %s0 = inlined_call_operand.hbm [shape: bf16[2,256,256], index: 0, kind: input, shape index: {}]
  %s1 = inlined_call_operand.hbm [shape: bf16[2,256,256], index: 1, kind: input, shape index: {}]
  %s2 = inlined_call_operand.hbm [shape: bf16[2,256,256], index: 2, kind: input, shape index: {}]
  %s3 = inlined_call_operand.hbm [shape: bf16[256,256], index: 3, kind: input, shape index: {}]
  %s4 = inlined_call_operand.hbm [shape: bf16[256,256], index: 4, kind: input, shape index: {}]
  %s5 = inlined_call_operand.hbm [shape: bf16[256,256], index: 5, kind: input, shape index: {}]
  %s6 = inlined_call_operand.hbm [shape: bf16[256,256], index: 6, kind: input, shape index: {}]
  %s7 = inlined_call_operand.vmem [shape: f32[1,256], index: 7, kind: input, shape index: {}]
  %s8 = inlined_call_operand.vmem [shape: f32[1,256], index: 8, kind: input, shape index: {}]
  %s9 = inlined_call_operand.vmem [shape: f32[1,256], index: 9, kind: input, shape index: {}]
  %s10 = inlined_call_operand.vmem [shape: f32[1,256], index: 10, kind: input, shape index: {}]
  %s11 = inlined_call_operand.hbm [shape: f32[2,256,256], index: 11, kind: output, shape index: {}]
  %s12 = sld [smem:[#allocation0]]
  $region109: #{tpu_custom_call.1} parent=0
    _
  %s14 = ssub.s32 1, %s12
  %s15 = scalar_select 0, %s14, %s12
  $region1: #{tpu_custom_call.1} parent=0
    #allocation4 [shape = 'u8[131072]{0}', space=vmem, size = 0x20000, scoped, tag = 'input window, operand 0']
    #allocation5 [shape = 's32[2]{0}', space=sflag, size = 0x8, scoped, tag = 'scoped memory for tpu_custom_call.1']
    #allocation6 [shape = 's32[2]{0}', space=sflag, size = 0x8, scoped, tag = 'scoped memory for tpu_custom_call.1']
    #allocation7 [shape = 'u8[262144]{0}', space=vmem, size = 0x40000, scoped, tag = 'input window, operand 1']
    #allocation8 [shape = 's32[2]{0}', space=sflag, size = 0x8, scoped, tag = 'scoped memory for tpu_custom_call.1']
    #allocation9 [shape = 'u8[262144]{0}', space=vmem, size = 0x40000, scoped, tag = 'input window, operand 2']
    #allocation10 [shape = 'u8[131072]{0}', space=vmem, size = 0x20000, scoped, tag = 'input window, operand 3, single buffered']
    #allocation11 [shape = 's32[1]{0}', space=sflag, size = 0x4, scoped, tag = 'scoped memory for tpu_custom_call.1']
    #allocation12 [shape = 'u8[131072]{0}', space=vmem, size = 0x20000, scoped, tag = 'input window, operand 4, single buffered']
    #allocation13 [shape = 'u8[131072]{0}', space=vmem, size = 0x20000, scoped, tag = 'input window, operand 5, single buffered']
    #allocation14 [shape = 's32[1]{0}', space=sflag, size = 0x4, scoped, tag = 'scoped memory for tpu_custom_call.1']
    #allocation15 [shape = 'u8[131072]{0}', space=vmem, size = 0x20000, scoped, tag = 'input window, operand 6, single buffered']
    #allocation16 [shape = 'u8[262144]{0}', space=vmem, size = 0x40000, scoped, tag = 'output window, operand 0']
    %16 = vsyncpa [#allocation5], 0
    %s17 = scalar_lea.sflag [#allocation5], 1
    %18 = vsyncpa %s17, 0
    %19 = vsyncpa [#allocation8], 0
    %s20 = scalar_lea.sflag [#allocation8], 1
    %21 = vsyncpa %s20, 0
    %22 = vsyncpa [#allocation11], 0
    %23 = vsyncpa [#allocation14], 0
    %24 = vsyncpa [#allocation6], 0
    %s25 = scalar_lea.sflag [#allocation6], 1
    %26 = vsyncpa %s25, 0
    loop: start=0, step=1, limit=6
    $region2: #{tpu_custom_call.1} parent=1 // loop_pre_header
      _
    $region3: #{tpu_custom_call.1} parent=1 // loop_header
      %s28 = sphi 0, %s32
      %p29 = scmp.ge.s32.totalorder %s28, 6
      %s35 = sphi 0, %s47
      %s36 = sphi 0, %s43
      %s37 = sphi 0, %s35
      %s38 = sphi 0, %s36
      %s39 = sphi 0, %s37
      %s40 = sphi 0, %s38
      %s52 = sphi 0, %s54
      %s55 = sphi 0, %s52
      %s56 = sphi 0, %s55
      %s72 = sphi 0, %s56
      %s78 = sphi 0, %s80
      %s81 = sphi 0, %s78
      %s82 = sphi 0, %s81
      %s98 = sphi 0, %s82
      %s104 = sphi 0, %s106
      %s107 = sphi 0, %s104
      %s108 = sphi 0, %s107
      %s124 = sphi 0, %s108
      %s128 = sphi 0, %s128
      %s130 = sphi 0, %s128
      %s131 = sphi 0, %s130
      %s145 = sphi 0, %s131
      %s149 = sphi 0, %s149
      %s151 = sphi 0, %s149
      %s152 = sphi 0, %s151
      %s166 = sphi 0, %s152
      %s170 = sphi 0, %s170
      %s172 = sphi 0, %s170
      %s173 = sphi 0, %s172
      %s187 = sphi 0, %s173
      %s191 = sphi 0, %s191
      %s193 = sphi 0, %s191
      %s194 = sphi 0, %s193
      %s208 = sphi 0, %s194
      %s212 = sphi 0, %s212
      %s214 = sphi 0, %s212
      %s215 = sphi 0, %s214
      %s229 = sphi 0, %s215
      %s233 = sphi 0, %s233
      %s235 = sphi 0, %s233
      %s236 = sphi 0, %s235
      %s250 = sphi 0, %s236
      %s254 = sphi 0, %s254
      %s256 = sphi 0, %s254
      %s257 = sphi 0, %s256
      %s271 = sphi 0, %s257
      %s275 = sphi 0, %s275
      %s277 = sphi 0, %s275
      %s278 = sphi 0, %s277
      %s292 = sphi 0, %s278
      %s300 = sphi 0, %s302
      %s303 = sphi 0, %s300
      %s304 = sphi 0, %s303
      %s320 = sphi 0, %s304
    $region4: #{tpu_custom_call.1} parent=1 // loop_header_branch
      %31 = sbr.rel (%p29) target = $region8
    $region5: #{tpu_custom_call.1} parent=1 // loop_body
      %s33 = ssub.s32 %s28, 1
      %s34 = ssub.s32 %s28, 2
      %s41 = sadd.s32 1, %s36
      %p42 = scmp.ge.s32.totalorder %s41, 2
      %s43 = scalar_select %p42, 0, %s41
      %s44 = sadd.s32 1, %s35
      %s45 = scalar_select %p42, %s44, %s35
      %p46 = scmp.ge.s32.totalorder %s45, 2
      %s47 = scalar_select %p46, 0, %s45
      %s48 = ssub.s32 %s35, %s47
      %s49 = ssub.s32 %s36, %s43
      %s50 = sor.u32 %s48, %s49
      %p51 = scmp.eq.s32.totalorder %s50, 0
      %s53 = sadd.s32 %s52, 1
      %s54 = scalar_select %p51, %s52, %s53
      %p57 = pneg %p51
      %p58 = scmp.eq.s32.totalorder %s28, 3
      %p59 = por %p57, %p58
      %p60 = scmp.ne.s32.totalorder %s52, %s55
      %p61 = scmp.eq.s32.totalorder %s28, 0
      %p62 = por %p60, %p61
      %p63 = scmp.ne.s32.totalorder %s52, %s55
      %p64 = scmp.eq.s32.totalorder %s33, 3
      %p65 = por %p63, %p64
      %p66 = scmp.ne.s32.totalorder %s55, %s56
      %p67 = scmp.eq.s32.totalorder %s33, 0
      %p68 = por %p66, %p67
      %p69 = scmp.ne.s32.totalorder %s55, %s56
      %p70 = scmp.eq.s32.totalorder %s34, 3
      %p71 = por %p69, %p70
      %p73 = scmp.ne.s32.totalorder %s56, %s72
      %p74 = scmp.eq.s32.totalorder %s34, 0
      %p75 = por %p73, %p74
      %s76 = ssub.s32 %s35, %s47
      %p77 = scmp.eq.s32.totalorder %s76, 0
      %s79 = sadd.s32 %s78, 1
      %s80 = scalar_select %p77, %s78, %s79
      %p83 = pneg %p77
      %p84 = scmp.eq.s32.totalorder %s28, 3
      %p85 = por %p83, %p84
      %p86 = scmp.ne.s32.totalorder %s78, %s81
      %p87 = scmp.eq.s32.totalorder %s28, 0
      %p88 = por %p86, %p87
      %p89 = scmp.ne.s32.totalorder %s78, %s81
      %p90 = scmp.eq.s32.totalorder %s33, 3
      %p91 = por %p89, %p90
      %p92 = scmp.ne.s32.totalorder %s81, %s82
      %p93 = scmp.eq.s32.totalorder %s33, 0
      %p94 = por %p92, %p93
      %p95 = scmp.ne.s32.totalorder %s81, %s82
      %p96 = scmp.eq.s32.totalorder %s34, 3
      %p97 = por %p95, %p96
      %p99 = scmp.ne.s32.totalorder %s82, %s98
      %p100 = scmp.eq.s32.totalorder %s34, 0
      %p101 = por %p99, %p100
      %s102 = ssub.s32 %s35, %s47
      %p103 = scmp.eq.s32.totalorder %s102, 0
      %s105 = sadd.s32 %s104, 1
      %s106 = scalar_select %p103, %s104, %s105
      %p109 = pneg %p103
      %p110 = scmp.eq.s32.totalorder %s28, 3
      %p111 = por %p109, %p110
      %p112 = scmp.ne.s32.totalorder %s104, %s107
      %p113 = scmp.eq.s32.totalorder %s28, 0
      %p114 = por %p112, %p113
      %p115 = scmp.ne.s32.totalorder %s104, %s107
      %p116 = scmp.eq.s32.totalorder %s33, 3
      %p117 = por %p115, %p116
      %p118 = scmp.ne.s32.totalorder %s107, %s108
      %p119 = scmp.eq.s32.totalorder %s33, 0
      %p120 = por %p118, %p119
      %p121 = scmp.ne.s32.totalorder %s107, %s108
      %p122 = scmp.eq.s32.totalorder %s34, 3
      %p123 = por %p121, %p122
      %p125 = scmp.ne.s32.totalorder %s108, %s124
      %p126 = scmp.eq.s32.totalorder %s34, 0
      %p127 = por %p125, %p126
      %s129 = sadd.s32 %s128, 1
      %p132 = scmp.eq.s32.totalorder %s28, 3
      %p133 = scmp.ne.s32.totalorder %s128, %s130
      %p134 = scmp.eq.s32.totalorder %s28, 0
      %p135 = por %p133, %p134
      %p136 = scmp.ne.s32.totalorder %s128, %s130
      %p137 = scmp.eq.s32.totalorder %s33, 3
      %p138 = por %p136, %p137
      %p139 = scmp.ne.s32.totalorder %s130, %s131
      %p140 = scmp.eq.s32.totalorder %s33, 0
      %p141 = por %p139, %p140
      %p142 = scmp.ne.s32.totalorder %s130, %s131
      %p143 = scmp.eq.s32.totalorder %s34, 3
      %p144 = por %p142, %p143
      %p146 = scmp.ne.s32.totalorder %s131, %s145
      %p147 = scmp.eq.s32.totalorder %s34, 0
      %p148 = por %p146, %p147
      %s150 = sadd.s32 %s149, 1
      %p153 = scmp.eq.s32.totalorder %s28, 3
      %p154 = scmp.ne.s32.totalorder %s149, %s151
      %p155 = scmp.eq.s32.totalorder %s28, 0
      %p156 = por %p154, %p155
      %p157 = scmp.ne.s32.totalorder %s149, %s151
      %p158 = scmp.eq.s32.totalorder %s33, 3
      %p159 = por %p157, %p158
      %p160 = scmp.ne.s32.totalorder %s151, %s152
      %p161 = scmp.eq.s32.totalorder %s33, 0
      %p162 = por %p160, %p161
      %p163 = scmp.ne.s32.totalorder %s151, %s152
      %p164 = scmp.eq.s32.totalorder %s34, 3
      %p165 = por %p163, %p164
      %p167 = scmp.ne.s32.totalorder %s152, %s166
      %p168 = scmp.eq.s32.totalorder %s34, 0
      %p169 = por %p167, %p168
      %s171 = sadd.s32 %s170, 1
      %p174 = scmp.eq.s32.totalorder %s28, 3
      %p175 = scmp.ne.s32.totalorder %s170, %s172
      %p176 = scmp.eq.s32.totalorder %s28, 0
      %p177 = por %p175, %p176
      %p178 = scmp.ne.s32.totalorder %s170, %s172
      %p179 = scmp.eq.s32.totalorder %s33, 3
      %p180 = por %p178, %p179
      %p181 = scmp.ne.s32.totalorder %s172, %s173
      %p182 = scmp.eq.s32.totalorder %s33, 0
      %p183 = por %p181, %p182
      %p184 = scmp.ne.s32.totalorder %s172, %s173
      %p185 = scmp.eq.s32.totalorder %s34, 3
      %p186 = por %p184, %p185
      %p188 = scmp.ne.s32.totalorder %s173, %s187
      %p189 = scmp.eq.s32.totalorder %s34, 0
      %p190 = por %p188, %p189
      %s192 = sadd.s32 %s191, 1
      %p195 = scmp.eq.s32.totalorder %s28, 3
      %p196 = scmp.ne.s32.totalorder %s191, %s193
      %p197 = scmp.eq.s32.totalorder %s28, 0
      %p198 = por %p196, %p197
      %p199 = scmp.ne.s32.totalorder %s191, %s193
      %p200 = scmp.eq.s32.totalorder %s33, 3
      %p201 = por %p199, %p200
      %p202 = scmp.ne.s32.totalorder %s193, %s194
      %p203 = scmp.eq.s32.totalorder %s33, 0
      %p204 = por %p202, %p203
      %p205 = scmp.ne.s32.totalorder %s193, %s194
      %p206 = scmp.eq.s32.totalorder %s34, 3
      %p207 = por %p205, %p206
      %p209 = scmp.ne.s32.totalorder %s194, %s208
      %p210 = scmp.eq.s32.totalorder %s34, 0
      %p211 = por %p209, %p210
      %s213 = sadd.s32 %s212, 1
      %p216 = scmp.eq.s32.totalorder %s28, 3
      %p217 = scmp.ne.s32.totalorder %s212, %s214
      %p218 = scmp.eq.s32.totalorder %s28, 0
      %p219 = por %p217, %p218
      %p220 = scmp.ne.s32.totalorder %s212, %s214
      %p221 = scmp.eq.s32.totalorder %s33, 3
      %p222 = por %p220, %p221
      %p223 = scmp.ne.s32.totalorder %s214, %s215
      %p224 = scmp.eq.s32.totalorder %s33, 0
      %p225 = por %p223, %p224
      %p226 = scmp.ne.s32.totalorder %s214, %s215
      %p227 = scmp.eq.s32.totalorder %s34, 3
      %p228 = por %p226, %p227
      %p230 = scmp.ne.s32.totalorder %s215, %s229
      %p231 = scmp.eq.s32.totalorder %s34, 0
      %p232 = por %p230, %p231
      %s234 = sadd.s32 %s233, 1
      %p237 = scmp.eq.s32.totalorder %s28, 3
      %p238 = scmp.ne.s32.totalorder %s233, %s235
      %p239 = scmp.eq.s32.totalorder %s28, 0
      %p240 = por %p238, %p239
      %p241 = scmp.ne.s32.totalorder %s233, %s235
      %p242 = scmp.eq.s32.totalorder %s33, 3
      %p243 = por %p241, %p242
      %p244 = scmp.ne.s32.totalorder %s235, %s236
      %p245 = scmp.eq.s32.totalorder %s33, 0
      %p246 = por %p244, %p245
      %p247 = scmp.ne.s32.totalorder %s235, %s236
      %p248 = scmp.eq.s32.totalorder %s34, 3
      %p249 = por %p247, %p248
      %p251 = scmp.ne.s32.totalorder %s236, %s250
      %p252 = scmp.eq.s32.totalorder %s34, 0
      %p253 = por %p251, %p252
      %s255 = sadd.s32 %s254, 1
      %p258 = scmp.eq.s32.totalorder %s28, 3
      %p259 = scmp.ne.s32.totalorder %s254, %s256
      %p260 = scmp.eq.s32.totalorder %s28, 0
      %p261 = por %p259, %p260
      %p262 = scmp.ne.s32.totalorder %s254, %s256
      %p263 = scmp.eq.s32.totalorder %s33, 3
      %p264 = por %p262, %p263
      %p265 = scmp.ne.s32.totalorder %s256, %s257
      %p266 = scmp.eq.s32.totalorder %s33, 0
      %p267 = por %p265, %p266
      %p268 = scmp.ne.s32.totalorder %s256, %s257
      %p269 = scmp.eq.s32.totalorder %s34, 3
      %p270 = por %p268, %p269
      %p272 = scmp.ne.s32.totalorder %s257, %s271
      %p273 = scmp.eq.s32.totalorder %s34, 0
      %p274 = por %p272, %p273
      %s276 = sadd.s32 %s275, 1
      %p279 = scmp.eq.s32.totalorder %s28, 3
      %p280 = scmp.ne.s32.totalorder %s275, %s277
      %p281 = scmp.eq.s32.totalorder %s28, 0
      %p282 = por %p280, %p281
      %p283 = scmp.ne.s32.totalorder %s275, %s277
      %p284 = scmp.eq.s32.totalorder %s33, 3
      %p285 = por %p283, %p284
      %p286 = scmp.ne.s32.totalorder %s277, %s278
      %p287 = scmp.eq.s32.totalorder %s33, 0
      %p288 = por %p286, %p287
      %p289 = scmp.ne.s32.totalorder %s277, %s278
      %p290 = scmp.eq.s32.totalorder %s34, 3
      %p291 = por %p289, %p290
      %p293 = scmp.ne.s32.totalorder %s278, %s292
      %p294 = scmp.eq.s32.totalorder %s34, 0
      %p295 = por %p293, %p294
      %s296 = ssub.s32 %s35, %s47
      %s297 = ssub.s32 %s36, %s43
      %s298 = sor.u32 %s296, %s297
      %p299 = scmp.eq.s32.totalorder %s298, 0
      %s301 = sadd.s32 %s300, 1
      %s302 = scalar_select %p299, %s300, %s301
      %p305 = pneg %p299
      %p306 = scmp.eq.s32.totalorder %s28, 3
      %p307 = por %p305, %p306
      %p308 = scmp.ne.s32.totalorder %s300, %s303
      %p309 = scmp.eq.s32.totalorder %s28, 0
      %p310 = por %p308, %p309
      %p311 = scmp.ne.s32.totalorder %s300, %s303
      %p312 = scmp.eq.s32.totalorder %s33, 3
      %p313 = por %p311, %p312
      %p314 = scmp.ne.s32.totalorder %s303, %s304
      %p315 = scmp.eq.s32.totalorder %s33, 0
      %p316 = por %p314, %p315
      %p317 = scmp.ne.s32.totalorder %s303, %s304
      %p318 = scmp.eq.s32.totalorder %s34, 3
      %p319 = por %p317, %p318
      %p321 = scmp.ne.s32.totalorder %s304, %s320
      %p322 = scmp.eq.s32.totalorder %s34, 0
      %p323 = por %p321, %p322
      %p324 = scmp.le.s32.totalorder 1, %s28
      %p325 = scmp.lt.s32.totalorder %s28, 5
      %p326 = pnand %p324, %p325
      %p327 = pneg %p326
      // Predicated region
      $region9: #{tpu_custom_call.1} parent=5 // pred_check
        _
      $region10: #{tpu_custom_call.1} parent=5 // pred_check_branch
        %329 = sbr.rel (%p326) target = $region12
      $region11: #{tpu_custom_call.1} parent=5 // pred_region
        %s330 = ssub.s32 %s28, 1
        // Predicated region
        $region13: #{tpu_custom_call.1} parent=11 // pred_check
          %p331 = pneg %p141
        $region14: #{tpu_custom_call.1} parent=11 // pred_check_branch
          %333 = sbr.rel (%p331) target = $region16
        $region15: #{tpu_custom_call.1} parent=11 // pred_region
          %s335 = ssub.s32 4096, 4096
          %336 = vsyncadd [#allocation11], %s335
          %s337 = sshll.u32 [#allocation10], 4
          %s338 = int_to_ptr.vmem [resolvable:$true] %s337
          %343 = dma.hbm_to_vmem [thread:$0]  %s3, 4096, %s338, [#allocation11], 128, 128, 8
        $region16: #{tpu_custom_call.1} parent=11 // pred_fallthru
          _
        // Predicated region
        $region17: #{tpu_custom_call.1} parent=11 // pred_check
          %p344 = pneg %p162
        $region18: #{tpu_custom_call.1} parent=11 // pred_check_branch
          %346 = sbr.rel (%p344) target = $region20
        $region19: #{tpu_custom_call.1} parent=11 // pred_region
          %s348 = ssub.s32 4096, 4096
          %349 = vsyncadd [#allocation11], %s348
          %s350 = sshll.u32 [#allocation12], 4
          %s351 = int_to_ptr.vmem [resolvable:$true] %s350
          %356 = dma.hbm_to_vmem [thread:$0]  %s4, 4096, %s351, [#allocation11], 128, 128, 8
        $region20: #{tpu_custom_call.1} parent=11 // pred_fallthru
          _
        // Predicated region
        $region21: #{tpu_custom_call.1} parent=11 // pred_check
          %p357 = pneg %p183
        $region22: #{tpu_custom_call.1} parent=11 // pred_check_branch
          %359 = sbr.rel (%p357) target = $region24
        $region23: #{tpu_custom_call.1} parent=11 // pred_region
          %s361 = ssub.s32 4096, 4096
          %362 = vsyncadd [#allocation14], %s361
          %s363 = sshll.u32 [#allocation13], 4
          %s364 = int_to_ptr.vmem [resolvable:$true] %s363
          %369 = dma.hbm_to_vmem [thread:$0]  %s5, 4096, %s364, [#allocation14], 128, 128, 8
        $region24: #{tpu_custom_call.1} parent=11 // pred_fallthru
          _
        // Predicated region
        $region25: #{tpu_custom_call.1} parent=11 // pred_check
          %p370 = pneg %p204
        $region26: #{tpu_custom_call.1} parent=11 // pred_check_branch
          %372 = sbr.rel (%p370) target = $region28
        $region27: #{tpu_custom_call.1} parent=11 // pred_region
          %s374 = ssub.s32 4096, 4096
          %375 = vsyncadd [#allocation14], %s374
          %s376 = sshll.u32 [#allocation15], 4
          %s377 = int_to_ptr.vmem [resolvable:$true] %s376
          %382 = dma.hbm_to_vmem [thread:$0]  %s6, 4096, %s377, [#allocation14], 128, 128, 8
        $region28: #{tpu_custom_call.1} parent=11 // pred_fallthru
          _
        // Predicated region
        $region29: #{tpu_custom_call.1} parent=11 // pred_check
          %p383 = pneg %p225
        $region30: #{tpu_custom_call.1} parent=11 // pred_check_branch
          %385 = sbr.rel (%p383) target = $region32
        $region31: #{tpu_custom_call.1} parent=11 // pred_region
          _
        $region32: #{tpu_custom_call.1} parent=11 // pred_fallthru
          _
        // Predicated region
        $region33: #{tpu_custom_call.1} parent=11 // pred_check
          %p386 = pneg %p246
        $region34: #{tpu_custom_call.1} parent=11 // pred_check_branch
          %388 = sbr.rel (%p386) target = $region36
        $region35: #{tpu_custom_call.1} parent=11 // pred_region
          _
        $region36: #{tpu_custom_call.1} parent=11 // pred_fallthru
          _
        // Predicated region
        $region37: #{tpu_custom_call.1} parent=11 // pred_check
          %p389 = pneg %p267
        $region38: #{tpu_custom_call.1} parent=11 // pred_check_branch
          %391 = sbr.rel (%p389) target = $region40
        $region39: #{tpu_custom_call.1} parent=11 // pred_region
          _
        $region40: #{tpu_custom_call.1} parent=11 // pred_fallthru
          _
        // Predicated region
        $region41: #{tpu_custom_call.1} parent=11 // pred_check
          %p392 = pneg %p288
        $region42: #{tpu_custom_call.1} parent=11 // pred_check_branch
          %394 = sbr.rel (%p392) target = $region44
        $region43: #{tpu_custom_call.1} parent=11 // pred_region
          _
        $region44: #{tpu_custom_call.1} parent=11 // pred_fallthru
          _
      $region12: #{tpu_custom_call.1} parent=5 // pred_fallthru
        _
      %p395 = scmp.lt.s32.totalorder %s28, 4
      // Predicated region
      $region45: #{tpu_custom_call.1} parent=5 // pred_check
        %p396 = pneg %p395
      $region46: #{tpu_custom_call.1} parent=5 // pred_check_branch
        %398 = sbr.rel (%p396) target = $region48
      $region47: #{tpu_custom_call.1} parent=5 // pred_region
        // Predicated region
        $region49: #{tpu_custom_call.1} parent=47 // pred_check
          %p399 = pneg %p62
        $region50: #{tpu_custom_call.1} parent=47 // pred_check_branch
          %401 = sbr.rel (%p399) target = $region52
        $region51: #{tpu_custom_call.1} parent=47 // pred_region
          %s402 = sand.u32 %s52, 1
          %s403 = scalar_lea.sflag [#allocation5], %s402
          %s404 = sand.u32 %s52, 1
          %s405 = smul.addr %s404, 128
          %s406 = scalar_lea.vmem [#allocation4], %s405
          %s407 = smul.u32 16, %s36
          %s409 = ssub.s32 2048, 2048
          %410 = vsyncadd %s403, %s409
          %s411 = smul.addr %s407, 2
          %s412 = smul.addr %s35, 64
          %s413 = sadd.s32 %s411, %s412
          %s414 = smul.addr %s413, 64
          %s415 = scalar_lea.hbm %s0, %s414
          %s416 = sshll.u32 %s406, 4
          %s417 = int_to_ptr.vmem [resolvable:$true] %s416
          %422 = dma.hbm_to_vmem [thread:$0]  %s415, 2048, %s417, %s403, 128, 128, 8
        $region52: #{tpu_custom_call.1} parent=47 // pred_fallthru
          _
        // Predicated region
        $region53: #{tpu_custom_call.1} parent=47 // pred_check
          %p423 = pneg %p88
        $region54: #{tpu_custom_call.1} parent=47 // pred_check_branch
          %425 = sbr.rel (%p423) target = $region56
        $region55: #{tpu_custom_call.1} parent=47 // pred_region
          %s426 = sand.u32 %s28, 1
          %s427 = scalar_lea.sflag [#allocation8], %s426
          %s428 = sand.u32 %s78, 1
          %s429 = smul.addr %s428, 256
          %s430 = scalar_lea.vmem [#allocation7], %s429
          %s432 = ssub.s32 4096, 4096
          %433 = vsyncadd %s427, %s432
          %s434 = smul.addr %s35, 64
          %s435 = smul.addr %s434, 64
          %s436 = scalar_lea.hbm %s1, %s435
          %s437 = sshll.u32 %s430, 4
          %s438 = int_to_ptr.vmem [resolvable:$true] %s437
          %443 = dma.hbm_to_vmem [thread:$0]  %s436, 4096, %s438, %s427, 128, 128, 8
        $region56: #{tpu_custom_call.1} parent=47 // pred_fallthru
          _
        // Predicated region
        $region57: #{tpu_custom_call.1} parent=47 // pred_check
          %p444 = pneg %p114
        $region58: #{tpu_custom_call.1} parent=47 // pred_check_branch
          %446 = sbr.rel (%p444) target = $region60
        $region59: #{tpu_custom_call.1} parent=47 // pred_region
          %s447 = sand.u32 %s28, 1
          %s448 = scalar_lea.sflag [#allocation8], %s447
          %s449 = sand.u32 %s104, 1
          %s450 = smul.addr %s449, 256
          %s451 = scalar_lea.vmem [#allocation9], %s450
          %s453 = ssub.s32 4096, 4096
          %454 = vsyncadd %s448, %s453
          %s455 = smul.addr %s35, 64
          %s456 = smul.addr %s455, 64
          %s457 = scalar_lea.hbm %s2, %s456
          %s458 = sshll.u32 %s451, 4
          %s459 = int_to_ptr.vmem [resolvable:$true] %s458
          %464 = dma.hbm_to_vmem [thread:$0]  %s457, 4096, %s459, %s448, 128, 128, 8
        $region60: #{tpu_custom_call.1} parent=47 // pred_fallthru
          _
      $region48: #{tpu_custom_call.1} parent=5 // pred_fallthru
        _
      %p465 = scmp.le.s32.totalorder 1, %s28
      %p466 = scmp.lt.s32.totalorder %s28, 5
      %p467 = pnand %p465, %p466
      %p468 = pneg %p467
      // Predicated region
      $region61: #{tpu_custom_call.1} parent=5 // pred_check
        _
      $region62: #{tpu_custom_call.1} parent=5 // pred_check_branch
        %470 = sbr.rel (%p467) target = $region64
      $region63: #{tpu_custom_call.1} parent=5 // pred_region
        %s471 = ssub.s32 %s28, 1
        %s472 = sand.u32 %s55, 1
        %s473 = scalar_lea.sflag [#allocation5], %s472
        %s474 = sand.u32 %s55, 1
        %s475 = smul.addr %s474, 128
        %s476 = scalar_lea.vmem [#allocation4], %s475
        // Predicated region
        $region65: #{tpu_custom_call.1} parent=63 // pred_check
          %p477 = pneg %p68
        $region66: #{tpu_custom_call.1} parent=63 // pred_check_branch
          %479 = sbr.rel (%p477) target = $region68
        $region67: #{tpu_custom_call.1} parent=63 // pred_region
          %480 = dma.done %s473, 2048
        $region68: #{tpu_custom_call.1} parent=63 // pred_fallthru
          _
        %s481 = sand.u32 %s33, 1
        %s482 = scalar_lea.sflag [#allocation8], %s481
        %s483 = sand.u32 %s81, 1
        %s484 = smul.addr %s483, 256
        %s485 = scalar_lea.vmem [#allocation7], %s484
        // Predicated region
        $region69: #{tpu_custom_call.1} parent=63 // pred_check
          %p486 = pneg %p94
        $region70: #{tpu_custom_call.1} parent=63 // pred_check_branch
          %488 = sbr.rel (%p486) target = $region72
        $region71: #{tpu_custom_call.1} parent=63 // pred_region
          %489 = dma.done %s482, 4096
        $region72: #{tpu_custom_call.1} parent=63 // pred_fallthru
          _
        %s490 = sand.u32 %s33, 1
        %s491 = scalar_lea.sflag [#allocation8], %s490
        %s492 = sand.u32 %s107, 1
        %s493 = smul.addr %s492, 256
        %s494 = scalar_lea.vmem [#allocation9], %s493
        // Predicated region
        $region73: #{tpu_custom_call.1} parent=63 // pred_check
          %p495 = pneg %p120
        $region74: #{tpu_custom_call.1} parent=63 // pred_check_branch
          %497 = sbr.rel (%p495) target = $region76
        $region75: #{tpu_custom_call.1} parent=63 // pred_region
          %498 = dma.done %s491, 4096
        $region76: #{tpu_custom_call.1} parent=63 // pred_fallthru
          _
        // Predicated region
        $region77: #{tpu_custom_call.1} parent=63 // pred_check
          %p499 = pneg %p141
        $region78: #{tpu_custom_call.1} parent=63 // pred_check_branch
          %501 = sbr.rel (%p499) target = $region80
        $region79: #{tpu_custom_call.1} parent=63 // pred_region
          %502 = dma.done [#allocation11], 4096
        $region80: #{tpu_custom_call.1} parent=63 // pred_fallthru
          _
        // Predicated region
        $region81: #{tpu_custom_call.1} parent=63 // pred_check
          %p503 = pneg %p162
        $region82: #{tpu_custom_call.1} parent=63 // pred_check_branch
          %505 = sbr.rel (%p503) target = $region84
        $region83: #{tpu_custom_call.1} parent=63 // pred_region
          %506 = dma.done [#allocation11], 4096
        $region84: #{tpu_custom_call.1} parent=63 // pred_fallthru
          _
        // Predicated region
        $region85: #{tpu_custom_call.1} parent=63 // pred_check
          %p507 = pneg %p183
        $region86: #{tpu_custom_call.1} parent=63 // pred_check_branch
          %509 = sbr.rel (%p507) target = $region88
        $region87: #{tpu_custom_call.1} parent=63 // pred_region
          %510 = dma.done [#allocation14], 4096
        $region88: #{tpu_custom_call.1} parent=63 // pred_fallthru
          _
        // Predicated region
        $region89: #{tpu_custom_call.1} parent=63 // pred_check
          %p511 = pneg %p204
        $region90: #{tpu_custom_call.1} parent=63 // pred_check_branch
          %513 = sbr.rel (%p511) target = $region92
        $region91: #{tpu_custom_call.1} parent=63 // pred_region
          %514 = dma.done [#allocation14], 4096
        $region92: #{tpu_custom_call.1} parent=63 // pred_fallthru
          _
        %s515 = sand.u32 %s55, 1
        %s516 = scalar_lea.sflag [#allocation5], %s515
        %s517 = sand.u32 %s55, 1
        %s518 = smul.addr %s517, 128
        %s519 = scalar_lea.vmem [#allocation4], %s518
        %p520 = pneg %p68
        %p521 = pneg %p65
        %s522 = sand.u32 %s33, 1
        %s523 = scalar_lea.sflag [#allocation8], %s522
        %s524 = sand.u32 %s81, 1
        %s525 = smul.addr %s524, 256
        %s526 = scalar_lea.vmem [#allocation7], %s525
        %p527 = pneg %p94
        %p528 = pneg %p91
        %s529 = sand.u32 %s33, 1
        %s530 = scalar_lea.sflag [#allocation8], %s529
        %s531 = sand.u32 %s107, 1
        %s532 = smul.addr %s531, 256
        %s533 = scalar_lea.vmem [#allocation9], %s532
        %p534 = pneg %p120
        %p535 = pneg %p117
        %p536 = pneg %p141
        %p537 = pneg %p138
        %p538 = pneg %p162
        %p539 = pneg %p159
        %p540 = pneg %p183
        %p541 = pneg %p180
        %p542 = pneg %p204
        %p543 = pneg %p201
        %p544 = pneg %p225
        %p545 = pneg %p222
        %p546 = pneg %p246
        %p547 = pneg %p243
        %p548 = pneg %p267
        %p549 = pneg %p264
        %p550 = pneg %p288
        %p551 = pneg %p285
        %p552 = pneg %p316
        %p553 = pneg %p313
        %s554 = sand.u32 %s303, 1
        %s555 = scalar_lea.sflag [#allocation6], %s554
        %s556 = sand.u32 %s303, 1
        %s557 = smul.addr %s556, 256
        %s558 = scalar_lea.vmem [#allocation16], %s557
        %s559 = smul.u32 16, %s38
        %s560 = smul.u32 16, %s38
        %p562 = scmp.eq.s32.totalorder %s38, 0
        // Predicated region
        $region93: #{tpu_custom_call.1} parent=63 // pred_check
          %p563 = pneg %p562
        $region94: #{tpu_custom_call.1} parent=63 // pred_check_branch
          %565 = sbr.rel (%p563) target = $region96
        $region95: #{tpu_custom_call.1} parent=63 // pred_region
          %v566 = vld [vmem:[%s485] sm:$0xff]
          %v567 = vld [vmem:[%s485 + $0x8] sm:$0xff]
          %v568 = vld [vmem:[%s485 + $0x10] sm:$0xff]
          %v569 = vld [vmem:[%s485 + $0x18] sm:$0xff]
          %v570 = vld [vmem:[%s485 + $0x20] sm:$0xff]
          %v571 = vld [vmem:[%s485 + $0x28] sm:$0xff]
          %v572 = vld [vmem:[%s485 + $0x30] sm:$0xff]
          %v573 = vld [vmem:[%s485 + $0x38] sm:$0xff]
          %v574 = vld [vmem:[%s485 + $0x40] sm:$0xff]
          %v575 = vld [vmem:[%s485 + $0x48] sm:$0xff]
          %v576 = vld [vmem:[%s485 + $0x50] sm:$0xff]
          %v577 = vld [vmem:[%s485 + $0x58] sm:$0xff]
          %v578 = vld [vmem:[%s485 + $0x60] sm:$0xff]
          %v579 = vld [vmem:[%s485 + $0x68] sm:$0xff]
          %v580 = vld [vmem:[%s485 + $0x70] sm:$0xff]
          %v581 = vld [vmem:[%s485 + $0x78] sm:$0xff]
          %v582 = vld [vmem:[%s485 + $0x80] sm:$0xff]
          %v583 = vld [vmem:[%s485 + $0x88] sm:$0xff]
          %v584 = vld [vmem:[%s485 + $0x90] sm:$0xff]
          %v585 = vld [vmem:[%s485 + $0x98] sm:$0xff]
          %v586 = vld [vmem:[%s485 + $0xa0] sm:$0xff]
          %v587 = vld [vmem:[%s485 + $0xa8] sm:$0xff]
          %v588 = vld [vmem:[%s485 + $0xb0] sm:$0xff]
          %v589 = vld [vmem:[%s485 + $0xb8] sm:$0xff]
          %v590 = vld [vmem:[%s485 + $0xc0] sm:$0xff]
          %v591 = vld [vmem:[%s485 + $0xc8] sm:$0xff]
          %v592 = vld [vmem:[%s485 + $0xd0] sm:$0xff]
          %v593 = vld [vmem:[%s485 + $0xd8] sm:$0xff]
          %v594 = vld [vmem:[%s485 + $0xe0] sm:$0xff]
          %v595 = vld [vmem:[%s485 + $0xe8] sm:$0xff]
          %v596 = vld [vmem:[%s485 + $0xf0] sm:$0xff]
          %v597 = vld [vmem:[%s485 + $0xf8] sm:$0xff]
          %v598 = vld [vmem:[#allocation12] sm:$0xff]
          %v599 = vld [vmem:[#allocation12 + $0x8] sm:$0xff]
          %v600 = vld [vmem:[#allocation12 + $0x10] sm:$0xff]
          %v601 = vld [vmem:[#allocation12 + $0x18] sm:$0xff]
          %v602 = vld [vmem:[#allocation12 + $0x20] sm:$0xff]
          %v603 = vld [vmem:[#allocation12 + $0x28] sm:$0xff]
          %v604 = vld [vmem:[#allocation12 + $0x30] sm:$0xff]
          %v605 = vld [vmem:[#allocation12 + $0x38] sm:$0xff]
          %v606 = vld [vmem:[#allocation12 + $0x40] sm:$0xff]
          %v607 = vld [vmem:[#allocation12 + $0x48] sm:$0xff]
          %v608 = vld [vmem:[#allocation12 + $0x50] sm:$0xff]
          %v609 = vld [vmem:[#allocation12 + $0x58] sm:$0xff]
          %v610 = vld [vmem:[#allocation12 + $0x60] sm:$0xff]
          %v611 = vld [vmem:[#allocation12 + $0x68] sm:$0xff]
          %v612 = vld [vmem:[#allocation12 + $0x70] sm:$0xff]
          %v613 = vld [vmem:[#allocation12 + $0x78] sm:$0xff]
          %v614 = vld [vmem:[#allocation12 + $0x80] sm:$0xff]
          %v615 = vld [vmem:[#allocation12 + $0x88] sm:$0xff]
          %v616 = vld [vmem:[#allocation12 + $0x90] sm:$0xff]
          %v617 = vld [vmem:[#allocation12 + $0x98] sm:$0xff]
          %v618 = vld [vmem:[#allocation12 + $0xa0] sm:$0xff]
          %v619 = vld [vmem:[#allocation12 + $0xa8] sm:$0xff]
          %v620 = vld [vmem:[#allocation12 + $0xb0] sm:$0xff]
          %v621 = vld [vmem:[#allocation12 + $0xb8] sm:$0xff]
          %v622 = vld [vmem:[#allocation12 + $0xc0] sm:$0xff]
          %v623 = vld [vmem:[#allocation12 + $0xc8] sm:$0xff]
          %v624 = vld [vmem:[#allocation12 + $0xd0] sm:$0xff]
          %v625 = vld [vmem:[#allocation12 + $0xd8] sm:$0xff]
          %v626 = vld [vmem:[#allocation12 + $0xe0] sm:$0xff]
          %v627 = vld [vmem:[#allocation12 + $0xe8] sm:$0xff]
          %v628 = vld [vmem:[#allocation12 + $0xf0] sm:$0xff]
          %v629 = vld [vmem:[#allocation12 + $0xf8] sm:$0xff]
          %v630 = vld [vmem:[%s8] sm:$0x3]
          %v632 = vlaneseq
          %v633 = vshrl.u32 %v632, 7
          %v634 = vsub.s32 0, %v633
          %v635 = vrot.slane %v630, %v634
          %v636 = vlaneseq
          %v637 = vshrl.u32 %v636, 7
          %v638 = vsub.s32 1, %v637
          %v639 = vrot.slane %v630, %v638
          %v674 = vunpack.c.l.b16 %v566
          %v675 = vunpack.c.h.b16 %v566
          %v676 = vunpack.c.l.b16 %v567
          %v677 = vunpack.c.h.b16 %v567
          %v678 = vunpack.c.l.b16 %v568
          %v679 = vunpack.c.h.b16 %v568
          %v680 = vunpack.c.l.b16 %v569
          %v681 = vunpack.c.h.b16 %v569
          %v682 = vunpack.c.l.b16 %v570
          %v683 = vunpack.c.h.b16 %v570
          %v684 = vunpack.c.l.b16 %v571
          %v685 = vunpack.c.h.b16 %v571
          %v686 = vunpack.c.l.b16 %v572
          %v687 = vunpack.c.h.b16 %v572
          %v688 = vunpack.c.l.b16 %v573
          %v689 = vunpack.c.h.b16 %v573
          %v690 = vunpack.c.l.b16 %v574
          %v691 = vunpack.c.h.b16 %v574
          %v692 = vunpack.c.l.b16 %v575
          %v693 = vunpack.c.h.b16 %v575
          %v694 = vunpack.c.l.b16 %v576
          %v695 = vunpack.c.h.b16 %v576
          %v696 = vunpack.c.l.b16 %v577
          %v697 = vunpack.c.h.b16 %v577
          %v698 = vunpack.c.l.b16 %v578
          %v699 = vunpack.c.h.b16 %v578
          %v700 = vunpack.c.l.b16 %v579
          %v701 = vunpack.c.h.b16 %v579
          %v702 = vunpack.c.l.b16 %v580
          %v703 = vunpack.c.h.b16 %v580
          %v704 = vunpack.c.l.b16 %v581
          %v705 = vunpack.c.h.b16 %v581
          %v706 = vunpack.c.l.b16 %v582
          %v707 = vunpack.c.h.b16 %v582
          %v708 = vunpack.c.l.b16 %v583
          %v709 = vunpack.c.h.b16 %v583
          %v710 = vunpack.c.l.b16 %v584
          %v711 = vunpack.c.h.b16 %v584
          %v712 = vunpack.c.l.b16 %v585
          %v713 = vunpack.c.h.b16 %v585
          %v714 = vunpack.c.l.b16 %v586
          %v715 = vunpack.c.h.b16 %v586
          %v716 = vunpack.c.l.b16 %v587
          %v717 = vunpack.c.h.b16 %v587
          %v718 = vunpack.c.l.b16 %v588
          %v719 = vunpack.c.h.b16 %v588
          %v720 = vunpack.c.l.b16 %v589
          %v721 = vunpack.c.h.b16 %v589
          %v722 = vunpack.c.l.b16 %v590
          %v723 = vunpack.c.h.b16 %v590
          %v724 = vunpack.c.l.b16 %v591
          %v725 = vunpack.c.h.b16 %v591
          %v726 = vunpack.c.l.b16 %v592
          %v727 = vunpack.c.h.b16 %v592
          %v728 = vunpack.c.l.b16 %v593
          %v729 = vunpack.c.h.b16 %v593
          %v730 = vunpack.c.l.b16 %v594
          %v731 = vunpack.c.h.b16 %v594
          %v732 = vunpack.c.l.b16 %v595
          %v733 = vunpack.c.h.b16 %v595
          %v734 = vunpack.c.l.b16 %v596
          %v735 = vunpack.c.h.b16 %v596
          %v736 = vunpack.c.l.b16 %v597
          %v737 = vunpack.c.h.b16 %v597
          %v738 = vpack.c.b16 %v676, %v674
          %v739 = vpack.c.b16 %v677, %v675
          %v740 = vpack.c.b16 %v680, %v678
          %v741 = vpack.c.b16 %v681, %v679
          %v742 = vpack.c.b16 %v684, %v682
          %v743 = vpack.c.b16 %v685, %v683
          %v744 = vpack.c.b16 %v688, %v686
          %v745 = vpack.c.b16 %v689, %v687
          %v746 = vpack.c.b16 %v692, %v690
          %v747 = vpack.c.b16 %v693, %v691
          %v748 = vpack.c.b16 %v696, %v694
          %v749 = vpack.c.b16 %v697, %v695
          %v750 = vpack.c.b16 %v700, %v698
          %v751 = vpack.c.b16 %v701, %v699
          %v752 = vpack.c.b16 %v704, %v702
          %v753 = vpack.c.b16 %v705, %v703
          %v754 = vpack.c.b16 %v708, %v706
          %v755 = vpack.c.b16 %v709, %v707
          %v756 = vpack.c.b16 %v712, %v710
          %v757 = vpack.c.b16 %v713, %v711
          %v758 = vpack.c.b16 %v716, %v714
          %v759 = vpack.c.b16 %v717, %v715
          %v760 = vpack.c.b16 %v720, %v718
          %v761 = vpack.c.b16 %v721, %v719
          %v762 = vpack.c.b16 %v724, %v722
          %v763 = vpack.c.b16 %v725, %v723
          %v764 = vpack.c.b16 %v728, %v726
          %v765 = vpack.c.b16 %v729, %v727
          %v766 = vpack.c.b16 %v732, %v730
          %v767 = vpack.c.b16 %v733, %v731
          %v768 = vpack.c.b16 %v736, %v734
          %v769 = vpack.c.b16 %v737, %v735
          %v834 = vunpack.c.l.b16 %v598
          %v835 = vunpack.c.h.b16 %v598
          %v836 = vunpack.c.l.b16 %v599
          %v837 = vunpack.c.h.b16 %v599
          %v838 = vunpack.c.l.b16 %v600
          %v839 = vunpack.c.h.b16 %v600
          %v840 = vunpack.c.l.b16 %v601
          %v841 = vunpack.c.h.b16 %v601
          %v842 = vunpack.c.l.b16 %v602
          %v843 = vunpack.c.h.b16 %v602
          %v844 = vunpack.c.l.b16 %v603
          %v845 = vunpack.c.h.b16 %v603
          %v846 = vunpack.c.l.b16 %v604
          %v847 = vunpack.c.h.b16 %v604
          %v848 = vunpack.c.l.b16 %v605
          %v849 = vunpack.c.h.b16 %v605
          %v850 = vunpack.c.l.b16 %v606
          %v851 = vunpack.c.h.b16 %v606
          %v852 = vunpack.c.l.b16 %v607
          %v853 = vunpack.c.h.b16 %v607
          %v854 = vunpack.c.l.b16 %v608
          %v855 = vunpack.c.h.b16 %v608
          %v856 = vunpack.c.l.b16 %v609
          %v857 = vunpack.c.h.b16 %v609
          %v858 = vunpack.c.l.b16 %v610
          %v859 = vunpack.c.h.b16 %v610
          %v860 = vunpack.c.l.b16 %v611
          %v861 = vunpack.c.h.b16 %v611
          %v862 = vunpack.c.l.b16 %v612
          %v863 = vunpack.c.h.b16 %v612
          %v864 = vunpack.c.l.b16 %v613
          %v865 = vunpack.c.h.b16 %v613
          %v866 = vunpack.c.l.b16 %v614
          %v867 = vunpack.c.h.b16 %v614
          %v868 = vunpack.c.l.b16 %v615
          %v869 = vunpack.c.h.b16 %v615
          %v870 = vunpack.c.l.b16 %v616
          %v871 = vunpack.c.h.b16 %v616
          %v872 = vunpack.c.l.b16 %v617
          %v873 = vunpack.c.h.b16 %v617
          %v874 = vunpack.c.l.b16 %v618
          %v875 = vunpack.c.h.b16 %v618
          %v876 = vunpack.c.l.b16 %v619
          %v877 = vunpack.c.h.b16 %v619
          %v878 = vunpack.c.l.b16 %v620
          %v879 = vunpack.c.h.b16 %v620
          %v880 = vunpack.c.l.b16 %v621
          %v881 = vunpack.c.h.b16 %v621
          %v882 = vunpack.c.l.b16 %v622
          %v883 = vunpack.c.h.b16 %v622
          %v884 = vunpack.c.l.b16 %v623
          %v885 = vunpack.c.h.b16 %v623
          %v886 = vunpack.c.l.b16 %v624
          %v887 = vunpack.c.h.b16 %v624
          %v888 = vunpack.c.l.b16 %v625
          %v889 = vunpack.c.h.b16 %v625
          %v890 = vunpack.c.l.b16 %v626
          %v891 = vunpack.c.h.b16 %v626
          %v892 = vunpack.c.l.b16 %v627
          %v893 = vunpack.c.h.b16 %v627
          %v894 = vunpack.c.l.b16 %v628
          %v895 = vunpack.c.h.b16 %v628
          %v896 = vunpack.c.l.b16 %v629
          %v897 = vunpack.c.h.b16 %v629
          %v898 = vpack.c.b16 %v836, %v834
          %v899 = vpack.c.b16 %v837, %v835
          %v900 = vpack.c.b16 %v840, %v838
          %v901 = vpack.c.b16 %v841, %v839
          %v902 = vpack.c.b16 %v844, %v842
          %v903 = vpack.c.b16 %v845, %v843
          %v904 = vpack.c.b16 %v848, %v846
          %v905 = vpack.c.b16 %v849, %v847
          %v906 = vpack.c.b16 %v852, %v850
          %v907 = vpack.c.b16 %v853, %v851
          %v908 = vpack.c.b16 %v856, %v854
          %v909 = vpack.c.b16 %v857, %v855
          %v910 = vpack.c.b16 %v860, %v858
          %v911 = vpack.c.b16 %v861, %v859
          %v912 = vpack.c.b16 %v864, %v862
          %v913 = vpack.c.b16 %v865, %v863
          %v914 = vpack.c.b16 %v868, %v866
          %v915 = vpack.c.b16 %v869, %v867
          %v916 = vpack.c.b16 %v872, %v870
          %v917 = vpack.c.b16 %v873, %v871
          %v918 = vpack.c.b16 %v876, %v874
          %v919 = vpack.c.b16 %v877, %v875
          %v920 = vpack.c.b16 %v880, %v878
          %v921 = vpack.c.b16 %v881, %v879
          %v922 = vpack.c.b16 %v884, %v882
          %v923 = vpack.c.b16 %v885, %v883
          %v924 = vpack.c.b16 %v888, %v886
          %v925 = vpack.c.b16 %v889, %v887
          %v926 = vpack.c.b16 %v892, %v890
          %v927 = vpack.c.b16 %v893, %v891
          %v928 = vpack.c.b16 %v896, %v894
          %v929 = vpack.c.b16 %v897, %v895
          %962 = vmatprep.subr.bf16.mxu0 %v899
          %963 = vmatpush1.bf16.msra.mxu0 %v898
          %964 = vmatprep.subr.bf16.mxu0 %v901
          %965 = vmatpush1.bf16.msra.mxu0 %v900
          %966 = vmatprep.subr.bf16.mxu0 %v903
          %967 = vmatpush1.bf16.msra.mxu0 %v902
          %968 = vmatprep.subr.bf16.mxu0 %v905
          %969 = vmatpush1.bf16.msra.mxu0 %v904
          %970 = vmatprep.subr.bf16.mxu0 %v907
          %971 = vmatpush1.bf16.msra.mxu0 %v906
          %972 = vmatprep.subr.bf16.mxu0 %v909
          %973 = vmatpush1.bf16.msra.mxu0 %v908
          %974 = vmatprep.subr.bf16.mxu0 %v911
          %975 = vmatpush1.bf16.msra.mxu0 %v910
          %976 = vmatprep.subr.bf16.mxu0 %v913
          %977 = vmatpush1.bf16.msra.mxu0 %v912
          %978 = vmatprep.subr.bf16.mxu0 %v915
          %979 = vmatpush1.bf16.msra.mxu0 %v914
          %980 = vmatprep.subr.bf16.mxu0 %v917
          %981 = vmatpush1.bf16.msra.mxu0 %v916
          %982 = vmatprep.subr.bf16.mxu0 %v919
          %983 = vmatpush1.bf16.msra.mxu0 %v918
          %984 = vmatprep.subr.bf16.mxu0 %v921
          %985 = vmatpush1.bf16.msra.mxu0 %v920
          %986 = vmatprep.subr.bf16.mxu0 %v923
          %987 = vmatpush1.bf16.msra.mxu0 %v922
          %988 = vmatprep.subr.bf16.mxu0 %v925
          %989 = vmatpush1.bf16.msra.mxu0 %v924
          %990 = vmatprep.subr.bf16.mxu0 %v927
          %991 = vmatpush1.bf16.msra.mxu0 %v926
          %992 = vmatprep.subr.bf16.mxu0 %v929
          %993 = vmatpush1.bf16.msra.mxu0 %v928
          %994 = vmatprep.mubr.bf16.mxu0 %v739
          %995 = vmatmul.mubr.bf16.gmra.mrb[0].mxu0 %v738
          %v996 = vpop.f32.mrb[0].mxu0
          %v997 = vadd.f32 %v635, %v996
          %v998 = vpop.f32.mrb[0].mxu0
          %v999 = vadd.f32 %v639, %v998
          %v1000 = vpop.f32.mrb[0].mxu0
          %v1001 = vadd.f32 %v635, %v1000
          %v1002 = vpop.f32.mrb[0].mxu0
          %v1003 = vadd.f32 %v639, %v1002
          %1004 = vmatprep.mubr.bf16.mxu0 %v741
          %1005 = vmatmul.mubr.bf16.gmra.mrb[0].mxu0 %v740
          %v1006 = vpop.f32.mrb[0].mxu0
          %v1007 = vadd.f32 %v635, %v1006
          %v1008 = vpop.f32.mrb[0].mxu0
          %v1009 = vadd.f32 %v639, %v1008
          %v1010 = vpop.f32.mrb[0].mxu0
          %v1011 = vadd.f32 %v635, %v1010
          %v1012 = vpop.f32.mrb[0].mxu0
          %v1013 = vadd.f32 %v639, %v1012
          %1014 = vmatprep.mubr.bf16.mxu0 %v743
          %1015 = vmatmul.mubr.bf16.gmra.mrb[0].mxu0 %v742
          %v1016 = vpop.f32.mrb[0].mxu0
          %v1017 = vadd.f32 %v635, %v1016
          %v1018 = vpop.f32.mrb[0].mxu0
          %v1019 = vadd.f32 %v639, %v1018
          %v1020 = vpop.f32.mrb[0].mxu0
          %v1021 = vadd.f32 %v635, %v1020
          %v1022 = vpop.f32.mrb[0].mxu0
          %v1023 = vadd.f32 %v639, %v1022
          %1024 = vmatprep.mubr.bf16.mxu0 %v745
          %1025 = vmatmul.mubr.bf16.gmra.mrb[0].mxu0 %v744
          %v1026 = vpop.f32.mrb[0].mxu0
          %v1027 = vadd.f32 %v635, %v1026
          %v1028 = vpop.f32.mrb[0].mxu0
          %v1029 = vadd.f32 %v639, %v1028
          %v1030 = vpop.f32.mrb[0].mxu0
          %v1031 = vadd.f32 %v635, %v1030
          %v1032 = vpop.f32.mrb[0].mxu0
          %v1033 = vadd.f32 %v639, %v1032
          %1034 = vmatprep.mubr.bf16.mxu0 %v747
          %1035 = vmatmul.mubr.bf16.gmra.mrb[0].mxu0 %v746
          %v1036 = vpop.f32.mrb[0].mxu0
          %v1037 = vadd.f32 %v635, %v1036
          %v1038 = vpop.f32.mrb[0].mxu0
          %v1039 = vadd.f32 %v639, %v1038
          %v1040 = vpop.f32.mrb[0].mxu0
          %v1041 = vadd.f32 %v635, %v1040
          %v1042 = vpop.f32.mrb[0].mxu0
          %v1043 = vadd.f32 %v639, %v1042
          %1044 = vmatprep.mubr.bf16.mxu0 %v749
          %1045 = vmatmul.mubr.bf16.gmra.mrb[0].mxu0 %v748
          %v1046 = vpop.f32.mrb[0].mxu0
          %v1047 = vadd.f32 %v635, %v1046
          %v1048 = vpop.f32.mrb[0].mxu0
          %v1049 = vadd.f32 %v639, %v1048
          %v1050 = vpop.f32.mrb[0].mxu0
          %v1051 = vadd.f32 %v635, %v1050
          %v1052 = vpop.f32.mrb[0].mxu0
          %v1053 = vadd.f32 %v639, %v1052
          %1054 = vmatprep.mubr.bf16.mxu0 %v751
          %1055 = vmatmul.mubr.bf16.gmra.mrb[0].mxu0 %v750
          %v1056 = vpop.f32.mrb[0].mxu0
          %v1057 = vadd.f32 %v635, %v1056
          %v1058 = vpop.f32.mrb[0].mxu0
          %v1059 = vadd.f32 %v639, %v1058
          %v1060 = vpop.f32.mrb[0].mxu0
          %v1061 = vadd.f32 %v635, %v1060
          %v1062 = vpop.f32.mrb[0].mxu0
          %v1063 = vadd.f32 %v639, %v1062
          %1064 = vmatprep.mubr.bf16.mxu0 %v753
          %1065 = vmatmul.mubr.bf16.gmra.mrb[0].mxu0 %v752
          %v1066 = vpop.f32.mrb[0].mxu0
          %v1067 = vadd.f32 %v635, %v1066
          %v1068 = vpop.f32.mrb[0].mxu0
          %v1069 = vadd.f32 %v639, %v1068
          %v1070 = vpop.f32.mrb[0].mxu0
          %v1071 = vadd.f32 %v635, %v1070
          %v1072 = vpop.f32.mrb[0].mxu0
          %v1073 = vadd.f32 %v639, %v1072
          %1074 = vmatprep.mubr.bf16.mxu0 %v755
          %1075 = vmatmul.mubr.bf16.gmra.mrb[0].mxu0 %v754
          %v1076 = vpop.f32.mrb[0].mxu0
          %v1077 = vadd.f32 %v635, %v1076
          %v1078 = vpop.f32.mrb[0].mxu0
          %v1079 = vadd.f32 %v639, %v1078
          %v1080 = vpop.f32.mrb[0].mxu0
          %v1081 = vadd.f32 %v635, %v1080
          %v1082 = vpop.f32.mrb[0].mxu0
          %v1083 = vadd.f32 %v639, %v1082
          %1084 = vmatprep.mubr.bf16.mxu0 %v757
          %1085 = vmatmul.mubr.bf16.gmra.mrb[0].mxu0 %v756
          %v1086 = vpop.f32.mrb[0].mxu0
          %v1087 = vadd.f32 %v635, %v1086
          %v1088 = vpop.f32.mrb[0].mxu0
          %v1089 = vadd.f32 %v639, %v1088
          %v1090 = vpop.f32.mrb[0].mxu0
          %v1091 = vadd.f32 %v635, %v1090
          %v1092 = vpop.f32.mrb[0].mxu0
          %v1093 = vadd.f32 %v639, %v1092
          %1094 = vmatprep.mubr.bf16.mxu0 %v759
          %1095 = vmatmul.mubr.bf16.gmra.mrb[0].mxu0 %v758
          %v1096 = vpop.f32.mrb[0].mxu0
          %v1097 = vadd.f32 %v635, %v1096
          %v1098 = vpop.f32.mrb[0].mxu0
          %v1099 = vadd.f32 %v639, %v1098
          %v1100 = vpop.f32.mrb[0].mxu0
          %v1101 = vadd.f32 %v635, %v1100
          %v1102 = vpop.f32.mrb[0].mxu0
          %v1103 = vadd.f32 %v639, %v1102
          %1104 = vmatprep.mubr.bf16.mxu0 %v761
          %1105 = vmatmul.mubr.bf16.gmra.mrb[0].mxu0 %v760
          %v1106 = vpop.f32.mrb[0].mxu0
          %v1107 = vadd.f32 %v635, %v1106
          %v1108 = vpop.f32.mrb[0].mxu0
          %v1109 = vadd.f32 %v639, %v1108
          %v1110 = vpop.f32.mrb[0].mxu0
          %v1111 = vadd.f32 %v635, %v1110
          %v1112 = vpop.f32.mrb[0].mxu0
          %v1113 = vadd.f32 %v639, %v1112
          %1114 = vmatprep.mubr.bf16.mxu0 %v763
          %1115 = vmatmul.mubr.bf16.gmra.mrb[0].mxu0 %v762
          %v1116 = vpop.f32.mrb[0].mxu0
          %v1117 = vadd.f32 %v635, %v1116
          %v1118 = vpop.f32.mrb[0].mxu0
          %v1119 = vadd.f32 %v639, %v1118
          %v1120 = vpop.f32.mrb[0].mxu0
          %v1121 = vadd.f32 %v635, %v1120
          %v1122 = vpop.f32.mrb[0].mxu0
          %v1123 = vadd.f32 %v639, %v1122
          %1124 = vmatprep.mubr.bf16.mxu0 %v765
          %1125 = vmatmul.mubr.bf16.gmra.mrb[0].mxu0 %v764
          %v1126 = vpop.f32.mrb[0].mxu0
          %v1127 = vadd.f32 %v635, %v1126
          %v1128 = vpop.f32.mrb[0].mxu0
          %v1129 = vadd.f32 %v639, %v1128
          %v1130 = vpop.f32.mrb[0].mxu0
          %v1131 = vadd.f32 %v635, %v1130
          %v1132 = vpop.f32.mrb[0].mxu0
          %v1133 = vadd.f32 %v639, %v1132
          %1134 = vmatprep.mubr.bf16.mxu0 %v767
          %1135 = vmatmul.mubr.bf16.gmra.mrb[0].mxu0 %v766
          %v1136 = vpop.f32.mrb[0].mxu0
          %v1137 = vadd.f32 %v635, %v1136
          %v1138 = vpop.f32.mrb[0].mxu0
          %v1139 = vadd.f32 %v639, %v1138
          %v1140 = vpop.f32.mrb[0].mxu0
          %v1141 = vadd.f32 %v635, %v1140
          %v1142 = vpop.f32.mrb[0].mxu0
          %v1143 = vadd.f32 %v639, %v1142
          %1144 = vmatprep.mubr.bf16.mxu0 %v769
          %1145 = vmatmul.mubr.bf16.gmra.mrb[0].mxu0 %v768
          %v1146 = vpop.f32.mrb[0].mxu0
          %v1147 = vadd.f32 %v635, %v1146
          %v1148 = vpop.f32.mrb[0].mxu0
          %v1149 = vadd.f32 %v639, %v1148
          %v1150 = vpop.f32.mrb[0].mxu0
          %v1151 = vadd.f32 %v635, %v1150
          %v1152 = vpop.f32.mrb[0].mxu0
          %v1153 = vadd.f32 %v639, %v1152
          %1154 = vdwg.mxu0
          %v1155 = vld [vmem:[%s494] sm:$0xff]
          %v1156 = vld [vmem:[%s494 + $0x8] sm:$0xff]
          %v1157 = vld [vmem:[%s494 + $0x10] sm:$0xff]
          %v1158 = vld [vmem:[%s494 + $0x18] sm:$0xff]
          %v1159 = vld [vmem:[%s494 + $0x20] sm:$0xff]
          %v1160 = vld [vmem:[%s494 + $0x28] sm:$0xff]
          %v1161 = vld [vmem:[%s494 + $0x30] sm:$0xff]
          %v1162 = vld [vmem:[%s494 + $0x38] sm:$0xff]
          %v1163 = vld [vmem:[%s494 + $0x40] sm:$0xff]
          %v1164 = vld [vmem:[%s494 + $0x48] sm:$0xff]
          %v1165 = vld [vmem:[%s494 + $0x50] sm:$0xff]
          %v1166 = vld [vmem:[%s494 + $0x58] sm:$0xff]
          %v1167 = vld [vmem:[%s494 + $0x60] sm:$0xff]
          %v1168 = vld [vmem:[%s494 + $0x68] sm:$0xff]
          %v1169 = vld [vmem:[%s494 + $0x70] sm:$0xff]
          %v1170 = vld [vmem:[%s494 + $0x78] sm:$0xff]
          %v1171 = vld [vmem:[%s494 + $0x80] sm:$0xff]
          %v1172 = vld [vmem:[%s494 + $0x88] sm:$0xff]
          %v1173 = vld [vmem:[%s494 + $0x90] sm:$0xff]
          %v1174 = vld [vmem:[%s494 + $0x98] sm:$0xff]
          %v1175 = vld [vmem:[%s494 + $0xa0] sm:$0xff]
          %v1176 = vld [vmem:[%s494 + $0xa8] sm:$0xff]
          %v1177 = vld [vmem:[%s494 + $0xb0] sm:$0xff]
          %v1178 = vld [vmem:[%s494 + $0xb8] sm:$0xff]
          %v1179 = vld [vmem:[%s494 + $0xc0] sm:$0xff]
          %v1180 = vld [vmem:[%s494 + $0xc8] sm:$0xff]
          %v1181 = vld [vmem:[%s494 + $0xd0] sm:$0xff]
          %v1182 = vld [vmem:[%s494 + $0xd8] sm:$0xff]
          %v1183 = vld [vmem:[%s494 + $0xe0] sm:$0xff]
          %v1184 = vld [vmem:[%s494 + $0xe8] sm:$0xff]
          %v1185 = vld [vmem:[%s494 + $0xf0] sm:$0xff]
          %v1186 = vld [vmem:[%s494 + $0xf8] sm:$0xff]
          %v1187 = vld [vmem:[#allocation13] sm:$0xff]
          %v1188 = vld [vmem:[#allocation13 + $0x8] sm:$0xff]
          %v1189 = vld [vmem:[#allocation13 + $0x10] sm:$0xff]
          %v1190 = vld [vmem:[#allocation13 + $0x18] sm:$0xff]
          %v1191 = vld [vmem:[#allocation13 + $0x20] sm:$0xff]
          %v1192 = vld [vmem:[#allocation13 + $0x28] sm:$0xff]
          %v1193 = vld [vmem:[#allocation13 + $0x30] sm:$0xff]
          %v1194 = vld [vmem:[#allocation13 + $0x38] sm:$0xff]
          %v1195 = vld [vmem:[#allocation13 + $0x40] sm:$0xff]
          %v1196 = vld [vmem:[#allocation13 + $0x48] sm:$0xff]
          %v1197 = vld [vmem:[#allocation13 + $0x50] sm:$0xff]
          %v1198 = vld [vmem:[#allocation13 + $0x58] sm:$0xff]
          %v1199 = vld [vmem:[#allocation13 + $0x60] sm:$0xff]
          %v1200 = vld [vmem:[#allocation13 + $0x68] sm:$0xff]
          %v1201 = vld [vmem:[#allocation13 + $0x70] sm:$0xff]
          %v1202 = vld [vmem:[#allocation13 + $0x78] sm:$0xff]
          %v1203 = vld [vmem:[#allocation13 + $0x80] sm:$0xff]
          %v1204 = vld [vmem:[#allocation13 + $0x88] sm:$0xff]
          %v1205 = vld [vmem:[#allocation13 + $0x90] sm:$0xff]
          %v1206 = vld [vmem:[#allocation13 + $0x98] sm:$0xff]
          %v1207 = vld [vmem:[#allocation13 + $0xa0] sm:$0xff]
          %v1208 = vld [vmem:[#allocation13 + $0xa8] sm:$0xff]
          %v1209 = vld [vmem:[#allocation13 + $0xb0] sm:$0xff]
          %v1210 = vld [vmem:[#allocation13 + $0xb8] sm:$0xff]
          %v1211 = vld [vmem:[#allocation13 + $0xc0] sm:$0xff]
          %v1212 = vld [vmem:[#allocation13 + $0xc8] sm:$0xff]
          %v1213 = vld [vmem:[#allocation13 + $0xd0] sm:$0xff]
          %v1214 = vld [vmem:[#allocation13 + $0xd8] sm:$0xff]
          %v1215 = vld [vmem:[#allocation13 + $0xe0] sm:$0xff]
          %v1216 = vld [vmem:[#allocation13 + $0xe8] sm:$0xff]
          %v1217 = vld [vmem:[#allocation13 + $0xf0] sm:$0xff]
          %v1218 = vld [vmem:[#allocation13 + $0xf8] sm:$0xff]
          %v1219 = vld [vmem:[%s9] sm:$0x3]
          %v1221 = vlaneseq
          %v1222 = vshrl.u32 %v1221, 7
          %v1223 = vsub.s32 0, %v1222
          %v1224 = vrot.slane %v1219, %v1223
          %v1225 = vlaneseq
          %v1226 = vshrl.u32 %v1225, 7
          %v1227 = vsub.s32 1, %v1226
          %v1228 = vrot.slane %v1219, %v1227
          %v1263 = vunpack.c.l.b16 %v1155
          %v1264 = vunpack.c.h.b16 %v1155
          %v1265 = vunpack.c.l.b16 %v1156
          %v1266 = vunpack.c.h.b16 %v1156
          %v1267 = vunpack.c.l.b16 %v1157
          %v1268 = vunpack.c.h.b16 %v1157
          %v1269 = vunpack.c.l.b16 %v1158
          %v1270 = vunpack.c.h.b16 %v1158
          %v1271 = vunpack.c.l.b16 %v1159
          %v1272 = vunpack.c.h.b16 %v1159
          %v1273 = vunpack.c.l.b16 %v1160
          %v1274 = vunpack.c.h.b16 %v1160
          %v1275 = vunpack.c.l.b16 %v1161
          %v1276 = vunpack.c.h.b16 %v1161
          %v1277 = vunpack.c.l.b16 %v1162
          %v1278 = vunpack.c.h.b16 %v1162
          %v1279 = vunpack.c.l.b16 %v1163
          %v1280 = vunpack.c.h.b16 %v1163
          %v1281 = vunpack.c.l.b16 %v1164
          %v1282 = vunpack.c.h.b16 %v1164
          %v1283 = vunpack.c.l.b16 %v1165
          %v1284 = vunpack.c.h.b16 %v1165
          %v1285 = vunpack.c.l.b16 %v1166
          %v1286 = vunpack.c.h.b16 %v1166
          %v1287 = vunpack.c.l.b16 %v1167
          %v1288 = vunpack.c.h.b16 %v1167
          %v1289 = vunpack.c.l.b16 %v1168
          %v1290 = vunpack.c.h.b16 %v1168
          %v1291 = vunpack.c.l.b16 %v1169
          %v1292 = vunpack.c.h.b16 %v1169
          %v1293 = vunpack.c.l.b16 %v1170
          %v1294 = vunpack.c.h.b16 %v1170
          %v1295 = vunpack.c.l.b16 %v1171
          %v1296 = vunpack.c.h.b16 %v1171
          %v1297 = vunpack.c.l.b16 %v1172
          %v1298 = vunpack.c.h.b16 %v1172
          %v1299 = vunpack.c.l.b16 %v1173
          %v1300 = vunpack.c.h.b16 %v1173
          %v1301 = vunpack.c.l.b16 %v1174
          %v1302 = vunpack.c.h.b16 %v1174
          %v1303 = vunpack.c.l.b16 %v1175
          %v1304 = vunpack.c.h.b16 %v1175
          %v1305 = vunpack.c.l.b16 %v1176
          %v1306 = vunpack.c.h.b16 %v1176
          %v1307 = vunpack.c.l.b16 %v1177
          %v1308 = vunpack.c.h.b16 %v1177
          %v1309 = vunpack.c.l.b16 %v1178
          %v1310 = vunpack.c.h.b16 %v1178
          %v1311 = vunpack.c.l.b16 %v1179
          %v1312 = vunpack.c.h.b16 %v1179
          %v1313 = vunpack.c.l.b16 %v1180
          %v1314 = vunpack.c.h.b16 %v1180
          %v1315 = vunpack.c.l.b16 %v1181
          %v1316 = vunpack.c.h.b16 %v1181
          %v1317 = vunpack.c.l.b16 %v1182
          %v1318 = vunpack.c.h.b16 %v1182
          %v1319 = vunpack.c.l.b16 %v1183
          %v1320 = vunpack.c.h.b16 %v1183
          %v1321 = vunpack.c.l.b16 %v1184
          %v1322 = vunpack.c.h.b16 %v1184
          %v1323 = vunpack.c.l.b16 %v1185
          %v1324 = vunpack.c.h.b16 %v1185
          %v1325 = vunpack.c.l.b16 %v1186
          %v1326 = vunpack.c.h.b16 %v1186
          %v1327 = vpack.c.b16 %v1265, %v1263
          %v1328 = vpack.c.b16 %v1266, %v1264
          %v1329 = vpack.c.b16 %v1269, %v1267
          %v1330 = vpack.c.b16 %v1270, %v1268
          %v1331 = vpack.c.b16 %v1273, %v1271
          %v1332 = vpack.c.b16 %v1274, %v1272
          %v1333 = vpack.c.b16 %v1277, %v1275
          %v1334 = vpack.c.b16 %v1278, %v1276
          %v1335 = vpack.c.b16 %v1281, %v1279
          %v1336 = vpack.c.b16 %v1282, %v1280
          %v1337 = vpack.c.b16 %v1285, %v1283
          %v1338 = vpack.c.b16 %v1286, %v1284
          %v1339 = vpack.c.b16 %v1289, %v1287
          %v1340 = vpack.c.b16 %v1290, %v1288
          %v1341 = vpack.c.b16 %v1293, %v1291
          %v1342 = vpack.c.b16 %v1294, %v1292
          %v1343 = vpack.c.b16 %v1297, %v1295
          %v1344 = vpack.c.b16 %v1298, %v1296
          %v1345 = vpack.c.b16 %v1301, %v1299
          %v1346 = vpack.c.b16 %v1302, %v1300
          %v1347 = vpack.c.b16 %v1305, %v1303
          %v1348 = vpack.c.b16 %v1306, %v1304
          %v1349 = vpack.c.b16 %v1309, %v1307
          %v1350 = vpack.c.b16 %v1310, %v1308
          %v1351 = vpack.c.b16 %v1313, %v1311
          %v1352 = vpack.c.b16 %v1314, %v1312
          %v1353 = vpack.c.b16 %v1317, %v1315
          %v1354 = vpack.c.b16 %v1318, %v1316
          %v1355 = vpack.c.b16 %v1321, %v1319
          %v1356 = vpack.c.b16 %v1322, %v1320
          %v1357 = vpack.c.b16 %v1325, %v1323
          %v1358 = vpack.c.b16 %v1326, %v1324
          %v1423 = vunpack.c.l.b16 %v1187
          %v1424 = vunpack.c.h.b16 %v1187
          %v1425 = vunpack.c.l.b16 %v1188
          %v1426 = vunpack.c.h.b16 %v1188
          %v1427 = vunpack.c.l.b16 %v1189
          %v1428 = vunpack.c.h.b16 %v1189
          %v1429 = vunpack.c.l.b16 %v1190
          %v1430 = vunpack.c.h.b16 %v1190
          %v1431 = vunpack.c.l.b16 %v1191
          %v1432 = vunpack.c.h.b16 %v1191
          %v1433 = vunpack.c.l.b16 %v1192
          %v1434 = vunpack.c.h.b16 %v1192
          %v1435 = vunpack.c.l.b16 %v1193
          %v1436 = vunpack.c.h.b16 %v1193
          %v1437 = vunpack.c.l.b16 %v1194
          %v1438 = vunpack.c.h.b16 %v1194
          %v1439 = vunpack.c.l.b16 %v1195
          %v1440 = vunpack.c.h.b16 %v1195
          %v1441 = vunpack.c.l.b16 %v1196
          %v1442 = vunpack.c.h.b16 %v1196
          %v1443 = vunpack.c.l.b16 %v1197
          %v1444 = vunpack.c.h.b16 %v1197
          %v1445 = vunpack.c.l.b16 %v1198
          %v1446 = vunpack.c.h.b16 %v1198
          %v1447 = vunpack.c.l.b16 %v1199
          %v1448 = vunpack.c.h.b16 %v1199
          %v1449 = vunpack.c.l.b16 %v1200
          %v1450 = vunpack.c.h.b16 %v1200
          %v1451 = vunpack.c.l.b16 %v1201
          %v1452 = vunpack.c.h.b16 %v1201
          %v1453 = vunpack.c.l.b16 %v1202
          %v1454 = vunpack.c.h.b16 %v1202
          %v1455 = vunpack.c.l.b16 %v1203
          %v1456 = vunpack.c.h.b16 %v1203
          %v1457 = vunpack.c.l.b16 %v1204
          %v1458 = vunpack.c.h.b16 %v1204
          %v1459 = vunpack.c.l.b16 %v1205
          %v1460 = vunpack.c.h.b16 %v1205
          %v1461 = vunpack.c.l.b16 %v1206
          %v1462 = vunpack.c.h.b16 %v1206
          %v1463 = vunpack.c.l.b16 %v1207
          %v1464 = vunpack.c.h.b16 %v1207
          %v1465 = vunpack.c.l.b16 %v1208
          %v1466 = vunpack.c.h.b16 %v1208
          %v1467 = vunpack.c.l.b16 %v1209
          %v1468 = vunpack.c.h.b16 %v1209
          %v1469 = vunpack.c.l.b16 %v1210
          %v1470 = vunpack.c.h.b16 %v1210
          %v1471 = vunpack.c.l.b16 %v1211
          %v1472 = vunpack.c.h.b16 %v1211
          %v1473 = vunpack.c.l.b16 %v1212
          %v1474 = vunpack.c.h.b16 %v1212
          %v1475 = vunpack.c.l.b16 %v1213
          %v1476 = vunpack.c.h.b16 %v1213
          %v1477 = vunpack.c.l.b16 %v1214
          %v1478 = vunpack.c.h.b16 %v1214
          %v1479 = vunpack.c.l.b16 %v1215
          %v1480 = vunpack.c.h.b16 %v1215
          %v1481 = vunpack.c.l.b16 %v1216
          %v1482 = vunpack.c.h.b16 %v1216
          %v1483 = vunpack.c.l.b16 %v1217
          %v1484 = vunpack.c.h.b16 %v1217
          %v1485 = vunpack.c.l.b16 %v1218
          %v1486 = vunpack.c.h.b16 %v1218
          %v1487 = vpack.c.b16 %v1425, %v1423
          %v1488 = vpack.c.b16 %v1426, %v1424
          %v1489 = vpack.c.b16 %v1429, %v1427
          %v1490 = vpack.c.b16 %v1430, %v1428
          %v1491 = vpack.c.b16 %v1433, %v1431
          %v1492 = vpack.c.b16 %v1434, %v1432
          %v1493 = vpack.c.b16 %v1437, %v1435
          %v1494 = vpack.c.b16 %v1438, %v1436
          %v1495 = vpack.c.b16 %v1441, %v1439
          %v1496 = vpack.c.b16 %v1442, %v1440
          %v1497 = vpack.c.b16 %v1445, %v1443
          %v1498 = vpack.c.b16 %v1446, %v1444
          %v1499 = vpack.c.b16 %v1449, %v1447
          %v1500 = vpack.c.b16 %v1450, %v1448
          %v1501 = vpack.c.b16 %v1453, %v1451
          %v1502 = vpack.c.b16 %v1454, %v1452
          %v1503 = vpack.c.b16 %v1457, %v1455
          %v1504 = vpack.c.b16 %v1458, %v1456
          %v1505 = vpack.c.b16 %v1461, %v1459
          %v1506 = vpack.c.b16 %v1462, %v1460
          %v1507 = vpack.c.b16 %v1465, %v1463
          %v1508 = vpack.c.b16 %v1466, %v1464
          %v1509 = vpack.c.b16 %v1469, %v1467
          %v1510 = vpack.c.b16 %v1470, %v1468
          %v1511 = vpack.c.b16 %v1473, %v1471
          %v1512 = vpack.c.b16 %v1474, %v1472
          %v1513 = vpack.c.b16 %v1477, %v1475
          %v1514 = vpack.c.b16 %v1478, %v1476
          %v1515 = vpack.c.b16 %v1481, %v1479
          %v1516 = vpack.c.b16 %v1482, %v1480
          %v1517 = vpack.c.b16 %v1485, %v1483
          %v1518 = vpack.c.b16 %v1486, %v1484
          %1551 = vmatprep.subr.bf16.mxu0 %v1488
          %1552 = vmatpush1.bf16.msra.mxu0 %v1487
          %1553 = vmatprep.subr.bf16.mxu0 %v1490
          %1554 = vmatpush1.bf16.msra.mxu0 %v1489
          %1555 = vmatprep.subr.bf16.mxu0 %v1492
          %1556 = vmatpush1.bf16.msra.mxu0 %v1491
          %1557 = vmatprep.subr.bf16.mxu0 %v1494
          %1558 = vmatpush1.bf16.msra.mxu0 %v1493
          %1559 = vmatprep.subr.bf16.mxu0 %v1496
          %1560 = vmatpush1.bf16.msra.mxu0 %v1495
          %1561 = vmatprep.subr.bf16.mxu0 %v1498
          %1562 = vmatpush1.bf16.msra.mxu0 %v1497
          %1563 = vmatprep.subr.bf16.mxu0 %v1500
          %1564 = vmatpush1.bf16.msra.mxu0 %v1499
          %1565 = vmatprep.subr.bf16.mxu0 %v1502
          %1566 = vmatpush1.bf16.msra.mxu0 %v1501
          %1567 = vmatprep.subr.bf16.mxu0 %v1504
          %1568 = vmatpush1.bf16.msra.mxu0 %v1503
          %1569 = vmatprep.subr.bf16.mxu0 %v1506
          %1570 = vmatpush1.bf16.msra.mxu0 %v1505
          %1571 = vmatprep.subr.bf16.mxu0 %v1508
          %1572 = vmatpush1.bf16.msra.mxu0 %v1507
          %1573 = vmatprep.subr.bf16.mxu0 %v1510
          %1574 = vmatpush1.bf16.msra.mxu0 %v1509
          %1575 = vmatprep.subr.bf16.mxu0 %v1512
          %1576 = vmatpush1.bf16.msra.mxu0 %v1511
          %1577 = vmatprep.subr.bf16.mxu0 %v1514
          %1578 = vmatpush1.bf16.msra.mxu0 %v1513
          %1579 = vmatprep.subr.bf16.mxu0 %v1516
          %1580 = vmatpush1.bf16.msra.mxu0 %v1515
          %1581 = vmatprep.subr.bf16.mxu0 %v1518
          %1582 = vmatpush1.bf16.msra.mxu0 %v1517
          %1583 = vmatprep.mubr.bf16.mxu0 %v1328
          %1584 = vmatmul.mubr.bf16.gmra.mrb[0].mxu0 %v1327
          %v1585 = vpop.f32.mrb[0].mxu0
          %v1586 = vadd.f32 %v1224, %v1585
          %v1587 = vpop.f32.mrb[0].mxu0
          %v1588 = vadd.f32 %v1228, %v1587
          %v1589 = vpop.f32.mrb[0].mxu0
          %v1590 = vadd.f32 %v1224, %v1589
          %v1591 = vpop.f32.mrb[0].mxu0
          %v1592 = vadd.f32 %v1228, %v1591
          %1593 = vmatprep.mubr.bf16.mxu0 %v1330
          %1594 = vmatmul.mubr.bf16.gmra.mrb[0].mxu0 %v1329
          %v1595 = vpop.f32.mrb[0].mxu0
          %v1596 = vadd.f32 %v1224, %v1595
          %v1597 = vpop.f32.mrb[0].mxu0
          %v1598 = vadd.f32 %v1228, %v1597
          %v1599 = vpop.f32.mrb[0].mxu0
          %v1600 = vadd.f32 %v1224, %v1599
          %v1601 = vpop.f32.mrb[0].mxu0
          %v1602 = vadd.f32 %v1228, %v1601
          %1603 = vmatprep.mubr.bf16.mxu0 %v1332
          %1604 = vmatmul.mubr.bf16.gmra.mrb[0].mxu0 %v1331
          %v1605 = vpop.f32.mrb[0].mxu0
          %v1606 = vadd.f32 %v1224, %v1605
          %v1607 = vpop.f32.mrb[0].mxu0
          %v1608 = vadd.f32 %v1228, %v1607
          %v1609 = vpop.f32.mrb[0].mxu0
          %v1610 = vadd.f32 %v1224, %v1609
          %v1611 = vpop.f32.mrb[0].mxu0
          %v1612 = vadd.f32 %v1228, %v1611
          %1613 = vmatprep.mubr.bf16.mxu0 %v1334
          %1614 = vmatmul.mubr.bf16.gmra.mrb[0].mxu0 %v1333
          %v1615 = vpop.f32.mrb[0].mxu0
          %v1616 = vadd.f32 %v1224, %v1615
          %v1617 = vpop.f32.mrb[0].mxu0
          %v1618 = vadd.f32 %v1228, %v1617
          %v1619 = vpop.f32.mrb[0].mxu0
          %v1620 = vadd.f32 %v1224, %v1619
          %v1621 = vpop.f32.mrb[0].mxu0
          %v1622 = vadd.f32 %v1228, %v1621
          %1623 = vmatprep.mubr.bf16.mxu0 %v1336
          %1624 = vmatmul.mubr.bf16.gmra.mrb[0].mxu0 %v1335
          %v1625 = vpop.f32.mrb[0].mxu0
          %v1626 = vadd.f32 %v1224, %v1625
          %v1627 = vpop.f32.mrb[0].mxu0
          %v1628 = vadd.f32 %v1228, %v1627
          %v1629 = vpop.f32.mrb[0].mxu0
          %v1630 = vadd.f32 %v1224, %v1629
          %v1631 = vpop.f32.mrb[0].mxu0
          %v1632 = vadd.f32 %v1228, %v1631
          %1633 = vmatprep.mubr.bf16.mxu0 %v1338
          %1634 = vmatmul.mubr.bf16.gmra.mrb[0].mxu0 %v1337
          %v1635 = vpop.f32.mrb[0].mxu0
          %v1636 = vadd.f32 %v1224, %v1635
          %v1637 = vpop.f32.mrb[0].mxu0
          %v1638 = vadd.f32 %v1228, %v1637
          %v1639 = vpop.f32.mrb[0].mxu0
          %v1640 = vadd.f32 %v1224, %v1639
          %v1641 = vpop.f32.mrb[0].mxu0
          %v1642 = vadd.f32 %v1228, %v1641
          %1643 = vmatprep.mubr.bf16.mxu0 %v1340
          %1644 = vmatmul.mubr.bf16.gmra.mrb[0].mxu0 %v1339
          %v1645 = vpop.f32.mrb[0].mxu0
          %v1646 = vadd.f32 %v1224, %v1645
          %v1647 = vpop.f32.mrb[0].mxu0
          %v1648 = vadd.f32 %v1228, %v1647
          %v1649 = vpop.f32.mrb[0].mxu0
          %v1650 = vadd.f32 %v1224, %v1649
          %v1651 = vpop.f32.mrb[0].mxu0
          %v1652 = vadd.f32 %v1228, %v1651
          %1653 = vmatprep.mubr.bf16.mxu0 %v1342
          %1654 = vmatmul.mubr.bf16.gmra.mrb[0].mxu0 %v1341
          %v1655 = vpop.f32.mrb[0].mxu0
          %v1656 = vadd.f32 %v1224, %v1655
          %v1657 = vpop.f32.mrb[0].mxu0
          %v1658 = vadd.f32 %v1228, %v1657
          %v1659 = vpop.f32.mrb[0].mxu0
          %v1660 = vadd.f32 %v1224, %v1659
          %v1661 = vpop.f32.mrb[0].mxu0
          %v1662 = vadd.f32 %v1228, %v1661
          %1663 = vmatprep.mubr.bf16.mxu0 %v1344
          %1664 = vmatmul.mubr.bf16.gmra.mrb[0].mxu0 %v1343
          %v1665 = vpop.f32.mrb[0].mxu0
          %v1666 = vadd.f32 %v1224, %v1665
          %v1667 = vpop.f32.mrb[0].mxu0
          %v1668 = vadd.f32 %v1228, %v1667
          %v1669 = vpop.f32.mrb[0].mxu0
          %v1670 = vadd.f32 %v1224, %v1669
          %v1671 = vpop.f32.mrb[0].mxu0
          %v1672 = vadd.f32 %v1228, %v1671
          %1673 = vmatprep.mubr.bf16.mxu0 %v1346
          %1674 = vmatmul.mubr.bf16.gmra.mrb[0].mxu0 %v1345
          %v1675 = vpop.f32.mrb[0].mxu0
          %v1676 = vadd.f32 %v1224, %v1675
          %v1677 = vpop.f32.mrb[0].mxu0
          %v1678 = vadd.f32 %v1228, %v1677
          %v1679 = vpop.f32.mrb[0].mxu0
          %v1680 = vadd.f32 %v1224, %v1679
          %v1681 = vpop.f32.mrb[0].mxu0
          %v1682 = vadd.f32 %v1228, %v1681
          %1683 = vmatprep.mubr.bf16.mxu0 %v1348
          %1684 = vmatmul.mubr.bf16.gmra.mrb[0].mxu0 %v1347
          %v1685 = vpop.f32.mrb[0].mxu0
          %v1686 = vadd.f32 %v1224, %v1685
          %v1687 = vpop.f32.mrb[0].mxu0
          %v1688 = vadd.f32 %v1228, %v1687
          %v1689 = vpop.f32.mrb[0].mxu0
          %v1690 = vadd.f32 %v1224, %v1689
          %v1691 = vpop.f32.mrb[0].mxu0
          %v1692 = vadd.f32 %v1228, %v1691
          %1693 = vmatprep.mubr.bf16.mxu0 %v1350
          %1694 = vmatmul.mubr.bf16.gmra.mrb[0].mxu0 %v1349
          %v1695 = vpop.f32.mrb[0].mxu0
          %v1696 = vadd.f32 %v1224, %v1695
          %v1697 = vpop.f32.mrb[0].mxu0
          %v1698 = vadd.f32 %v1228, %v1697
          %v1699 = vpop.f32.mrb[0].mxu0
          %v1700 = vadd.f32 %v1224, %v1699
          %v1701 = vpop.f32.mrb[0].mxu0
          %v1702 = vadd.f32 %v1228, %v1701
          %1703 = vmatprep.mubr.bf16.mxu0 %v1352
          %1704 = vmatmul.mubr.bf16.gmra.mrb[0].mxu0 %v1351
          %v1705 = vpop.f32.mrb[0].mxu0
          %v1706 = vadd.f32 %v1224, %v1705
          %v1707 = vpop.f32.mrb[0].mxu0
          %v1708 = vadd.f32 %v1228, %v1707
          %v1709 = vpop.f32.mrb[0].mxu0
          %v1710 = vadd.f32 %v1224, %v1709
          %v1711 = vpop.f32.mrb[0].mxu0
          %v1712 = vadd.f32 %v1228, %v1711
          %1713 = vmatprep.mubr.bf16.mxu0 %v1354
          %1714 = vmatmul.mubr.bf16.gmra.mrb[0].mxu0 %v1353
          %v1715 = vpop.f32.mrb[0].mxu0
          %v1716 = vadd.f32 %v1224, %v1715
          %v1717 = vpop.f32.mrb[0].mxu0
          %v1718 = vadd.f32 %v1228, %v1717
          %v1719 = vpop.f32.mrb[0].mxu0
          %v1720 = vadd.f32 %v1224, %v1719
          %v1721 = vpop.f32.mrb[0].mxu0
          %v1722 = vadd.f32 %v1228, %v1721
          %1723 = vmatprep.mubr.bf16.mxu0 %v1356
          %1724 = vmatmul.mubr.bf16.gmra.mrb[0].mxu0 %v1355
          %v1725 = vpop.f32.mrb[0].mxu0
          %v1726 = vadd.f32 %v1224, %v1725
          %v1727 = vpop.f32.mrb[0].mxu0
          %v1728 = vadd.f32 %v1228, %v1727
          %v1729 = vpop.f32.mrb[0].mxu0
          %v1730 = vadd.f32 %v1224, %v1729
          %v1731 = vpop.f32.mrb[0].mxu0
          %v1732 = vadd.f32 %v1228, %v1731
          %1733 = vmatprep.mubr.bf16.mxu0 %v1358
          %1734 = vmatmul.mubr.bf16.gmra.mrb[0].mxu0 %v1357
          %v1735 = vpop.f32.mrb[0].mxu0
          %v1736 = vadd.f32 %v1224, %v1735
          %v1737 = vpop.f32.mrb[0].mxu0
          %v1738 = vadd.f32 %v1228, %v1737
          %v1739 = vpop.f32.mrb[0].mxu0
          %v1740 = vadd.f32 %v1224, %v1739
          %v1741 = vpop.f32.mrb[0].mxu0
          %v1742 = vadd.f32 %v1228, %v1741
          %1743 = vdwg.mxu0
          %v1744 = vpack.c.bf16 %v1001, %v997
          %v1745 = vpack.c.bf16 %v1003, %v999
          %v1746 = vpack.c.bf16 %v1011, %v1007
          %v1747 = vpack.c.bf16 %v1013, %v1009
          %v1748 = vpack.c.bf16 %v1021, %v1017
          %v1749 = vpack.c.bf16 %v1023, %v1019
          %v1750 = vpack.c.bf16 %v1031, %v1027
          %v1751 = vpack.c.bf16 %v1033, %v1029
          %v1752 = vpack.c.bf16 %v1041, %v1037
          %v1753 = vpack.c.bf16 %v1043, %v1039
          %v1754 = vpack.c.bf16 %v1051, %v1047
          %v1755 = vpack.c.bf16 %v1053, %v1049
          %v1756 = vpack.c.bf16 %v1061, %v1057
          %v1757 = vpack.c.bf16 %v1063, %v1059
          %v1758 = vpack.c.bf16 %v1071, %v1067
          %v1759 = vpack.c.bf16 %v1073, %v1069
          %v1760 = vpack.c.bf16 %v1081, %v1077
          %v1761 = vpack.c.bf16 %v1083, %v1079
          %v1762 = vpack.c.bf16 %v1091, %v1087
          %v1763 = vpack.c.bf16 %v1093, %v1089
          %v1764 = vpack.c.bf16 %v1101, %v1097
          %v1765 = vpack.c.bf16 %v1103, %v1099
          %v1766 = vpack.c.bf16 %v1111, %v1107
          %v1767 = vpack.c.bf16 %v1113, %v1109
          %v1768 = vpack.c.bf16 %v1121, %v1117
          %v1769 = vpack.c.bf16 %v1123, %v1119
          %v1770 = vpack.c.bf16 %v1131, %v1127
          %v1771 = vpack.c.bf16 %v1133, %v1129
          %v1772 = vpack.c.bf16 %v1141, %v1137
          %v1773 = vpack.c.bf16 %v1143, %v1139
          %v1774 = vpack.c.bf16 %v1151, %v1147
          %v1775 = vpack.c.bf16 %v1153, %v1149
          %1776 = vst [vmem:[#allocation2] sm:$0xff] %v1744
          %1777 = vst [vmem:[#allocation2 + $0x8] sm:$0xff] %v1745
          %1778 = vst [vmem:[#allocation2 + $0x10] sm:$0xff] %v1746
          %1779 = vst [vmem:[#allocation2 + $0x18] sm:$0xff] %v1747
          %1780 = vst [vmem:[#allocation2 + $0x20] sm:$0xff] %v1748
          %1781 = vst [vmem:[#allocation2 + $0x28] sm:$0xff] %v1749
          %1782 = vst [vmem:[#allocation2 + $0x30] sm:$0xff] %v1750
          %1783 = vst [vmem:[#allocation2 + $0x38] sm:$0xff] %v1751
          %1784 = vst [vmem:[#allocation2 + $0x40] sm:$0xff] %v1752
          %1785 = vst [vmem:[#allocation2 + $0x48] sm:$0xff] %v1753
          %1786 = vst [vmem:[#allocation2 + $0x50] sm:$0xff] %v1754
          %1787 = vst [vmem:[#allocation2 + $0x58] sm:$0xff] %v1755
          %1788 = vst [vmem:[#allocation2 + $0x60] sm:$0xff] %v1756
          %1789 = vst [vmem:[#allocation2 + $0x68] sm:$0xff] %v1757
          %1790 = vst [vmem:[#allocation2 + $0x70] sm:$0xff] %v1758
          %1791 = vst [vmem:[#allocation2 + $0x78] sm:$0xff] %v1759
          %1792 = vst [vmem:[#allocation2 + $0x80] sm:$0xff] %v1760
          %1793 = vst [vmem:[#allocation2 + $0x88] sm:$0xff] %v1761
          %1794 = vst [vmem:[#allocation2 + $0x90] sm:$0xff] %v1762
          %1795 = vst [vmem:[#allocation2 + $0x98] sm:$0xff] %v1763
          %1796 = vst [vmem:[#allocation2 + $0xa0] sm:$0xff] %v1764
          %1797 = vst [vmem:[#allocation2 + $0xa8] sm:$0xff] %v1765
          %1798 = vst [vmem:[#allocation2 + $0xb0] sm:$0xff] %v1766
          %1799 = vst [vmem:[#allocation2 + $0xb8] sm:$0xff] %v1767
          %1800 = vst [vmem:[#allocation2 + $0xc0] sm:$0xff] %v1768
          %1801 = vst [vmem:[#allocation2 + $0xc8] sm:$0xff] %v1769
          %1802 = vst [vmem:[#allocation2 + $0xd0] sm:$0xff] %v1770
          %1803 = vst [vmem:[#allocation2 + $0xd8] sm:$0xff] %v1771
          %1804 = vst [vmem:[#allocation2 + $0xe0] sm:$0xff] %v1772
          %1805 = vst [vmem:[#allocation2 + $0xe8] sm:$0xff] %v1773
          %1806 = vst [vmem:[#allocation2 + $0xf0] sm:$0xff] %v1774
          %1807 = vst [vmem:[#allocation2 + $0xf8] sm:$0xff] %v1775
          %v1808 = vpack.c.bf16 %v1590, %v1586
          %v1809 = vpack.c.bf16 %v1592, %v1588
          %v1810 = vpack.c.bf16 %v1600, %v1596
          %v1811 = vpack.c.bf16 %v1602, %v1598
          %v1812 = vpack.c.bf16 %v1610, %v1606
          %v1813 = vpack.c.bf16 %v1612, %v1608
          %v1814 = vpack.c.bf16 %v1620, %v1616
          %v1815 = vpack.c.bf16 %v1622, %v1618
          %v1816 = vpack.c.bf16 %v1630, %v1626
          %v1817 = vpack.c.bf16 %v1632, %v1628
          %v1818 = vpack.c.bf16 %v1640, %v1636
          %v1819 = vpack.c.bf16 %v1642, %v1638
          %v1820 = vpack.c.bf16 %v1650, %v1646
          %v1821 = vpack.c.bf16 %v1652, %v1648
          %v1822 = vpack.c.bf16 %v1660, %v1656
          %v1823 = vpack.c.bf16 %v1662, %v1658
          %v1824 = vpack.c.bf16 %v1670, %v1666
          %v1825 = vpack.c.bf16 %v1672, %v1668
          %v1826 = vpack.c.bf16 %v1680, %v1676
          %v1827 = vpack.c.bf16 %v1682, %v1678
          %v1828 = vpack.c.bf16 %v1690, %v1686
          %v1829 = vpack.c.bf16 %v1692, %v1688
          %v1830 = vpack.c.bf16 %v1700, %v1696
          %v1831 = vpack.c.bf16 %v1702, %v1698
          %v1832 = vpack.c.bf16 %v1710, %v1706
          %v1833 = vpack.c.bf16 %v1712, %v1708
          %v1834 = vpack.c.bf16 %v1720, %v1716
          %v1835 = vpack.c.bf16 %v1722, %v1718
          %v1836 = vpack.c.bf16 %v1730, %v1726
          %v1837 = vpack.c.bf16 %v1732, %v1728
          %v1838 = vpack.c.bf16 %v1740, %v1736
          %v1839 = vpack.c.bf16 %v1742, %v1738
          %1840 = vst [vmem:[#allocation3] sm:$0xff] %v1808
          %1841 = vst [vmem:[#allocation3 + $0x8] sm:$0xff] %v1809
          %1842 = vst [vmem:[#allocation3 + $0x10] sm:$0xff] %v1810
          %1843 = vst [vmem:[#allocation3 + $0x18] sm:$0xff] %v1811
          %1844 = vst [vmem:[#allocation3 + $0x20] sm:$0xff] %v1812
          %1845 = vst [vmem:[#allocation3 + $0x28] sm:$0xff] %v1813
          %1846 = vst [vmem:[#allocation3 + $0x30] sm:$0xff] %v1814
          %1847 = vst [vmem:[#allocation3 + $0x38] sm:$0xff] %v1815
          %1848 = vst [vmem:[#allocation3 + $0x40] sm:$0xff] %v1816
          %1849 = vst [vmem:[#allocation3 + $0x48] sm:$0xff] %v1817
          %1850 = vst [vmem:[#allocation3 + $0x50] sm:$0xff] %v1818
          %1851 = vst [vmem:[#allocation3 + $0x58] sm:$0xff] %v1819
          %1852 = vst [vmem:[#allocation3 + $0x60] sm:$0xff] %v1820
          %1853 = vst [vmem:[#allocation3 + $0x68] sm:$0xff] %v1821
          %1854 = vst [vmem:[#allocation3 + $0x70] sm:$0xff] %v1822
          %1855 = vst [vmem:[#allocation3 + $0x78] sm:$0xff] %v1823
          %1856 = vst [vmem:[#allocation3 + $0x80] sm:$0xff] %v1824
          %1857 = vst [vmem:[#allocation3 + $0x88] sm:$0xff] %v1825
          %1858 = vst [vmem:[#allocation3 + $0x90] sm:$0xff] %v1826
          %1859 = vst [vmem:[#allocation3 + $0x98] sm:$0xff] %v1827
          %1860 = vst [vmem:[#allocation3 + $0xa0] sm:$0xff] %v1828
          %1861 = vst [vmem:[#allocation3 + $0xa8] sm:$0xff] %v1829
          %1862 = vst [vmem:[#allocation3 + $0xb0] sm:$0xff] %v1830
          %1863 = vst [vmem:[#allocation3 + $0xb8] sm:$0xff] %v1831
          %1864 = vst [vmem:[#allocation3 + $0xc0] sm:$0xff] %v1832
          %1865 = vst [vmem:[#allocation3 + $0xc8] sm:$0xff] %v1833
          %1866 = vst [vmem:[#allocation3 + $0xd0] sm:$0xff] %v1834
          %1867 = vst [vmem:[#allocation3 + $0xd8] sm:$0xff] %v1835
          %1868 = vst [vmem:[#allocation3 + $0xe0] sm:$0xff] %v1836
          %1869 = vst [vmem:[#allocation3 + $0xe8] sm:$0xff] %v1837
          %1870 = vst [vmem:[#allocation3 + $0xf0] sm:$0xff] %v1838
          %1871 = vst [vmem:[#allocation3 + $0xf8] sm:$0xff] %v1839
        $region96: #{tpu_custom_call.1} parent=63 // pred_fallthru
          _
        %v1872 = vld [vmem:[%s476] sm:$0xff]
        %v1873 = vld [vmem:[%s476 + $0x8] sm:$0xff]
        %v1874 = vld [vmem:[%s476 + $0x10] sm:$0xff]
        %v1875 = vld [vmem:[%s476 + $0x18] sm:$0xff]
        %v1876 = vld [vmem:[%s476 + $0x20] sm:$0xff]
        %v1877 = vld [vmem:[%s476 + $0x28] sm:$0xff]
        %v1878 = vld [vmem:[%s476 + $0x30] sm:$0xff]
        %v1879 = vld [vmem:[%s476 + $0x38] sm:$0xff]
        %v1880 = vld [vmem:[%s476 + $0x40] sm:$0xff]
        %v1881 = vld [vmem:[%s476 + $0x48] sm:$0xff]
        %v1882 = vld [vmem:[%s476 + $0x50] sm:$0xff]
        %v1883 = vld [vmem:[%s476 + $0x58] sm:$0xff]
        %v1884 = vld [vmem:[%s476 + $0x60] sm:$0xff]
        %v1885 = vld [vmem:[%s476 + $0x68] sm:$0xff]
        %v1886 = vld [vmem:[%s476 + $0x70] sm:$0xff]
        %v1887 = vld [vmem:[%s476 + $0x78] sm:$0xff]
        %v1888 = vld [vmem:[#allocation10] sm:$0xff]
        %v1889 = vld [vmem:[#allocation10 + $0x8] sm:$0xff]
        %v1890 = vld [vmem:[#allocation10 + $0x10] sm:$0xff]
        %v1891 = vld [vmem:[#allocation10 + $0x18] sm:$0xff]
        %v1892 = vld [vmem:[#allocation10 + $0x20] sm:$0xff]
        %v1893 = vld [vmem:[#allocation10 + $0x28] sm:$0xff]
        %v1894 = vld [vmem:[#allocation10 + $0x30] sm:$0xff]
        %v1895 = vld [vmem:[#allocation10 + $0x38] sm:$0xff]
        %v1896 = vld [vmem:[#allocation10 + $0x40] sm:$0xff]
        %v1897 = vld [vmem:[#allocation10 + $0x48] sm:$0xff]
        %v1898 = vld [vmem:[#allocation10 + $0x50] sm:$0xff]
        %v1899 = vld [vmem:[#allocation10 + $0x58] sm:$0xff]
        %v1900 = vld [vmem:[#allocation10 + $0x60] sm:$0xff]
        %v1901 = vld [vmem:[#allocation10 + $0x68] sm:$0xff]
        %v1902 = vld [vmem:[#allocation10 + $0x70] sm:$0xff]
        %v1903 = vld [vmem:[#allocation10 + $0x78] sm:$0xff]
        %v1904 = vld [vmem:[#allocation10 + $0x80] sm:$0xff]
        %v1905 = vld [vmem:[#allocation10 + $0x88] sm:$0xff]
        %v1906 = vld [vmem:[#allocation10 + $0x90] sm:$0xff]
        %v1907 = vld [vmem:[#allocation10 + $0x98] sm:$0xff]
        %v1908 = vld [vmem:[#allocation10 + $0xa0] sm:$0xff]
        %v1909 = vld [vmem:[#allocation10 + $0xa8] sm:$0xff]
        %v1910 = vld [vmem:[#allocation10 + $0xb0] sm:$0xff]
        %v1911 = vld [vmem:[#allocation10 + $0xb8] sm:$0xff]
        %v1912 = vld [vmem:[#allocation10 + $0xc0] sm:$0xff]
        %v1913 = vld [vmem:[#allocation10 + $0xc8] sm:$0xff]
        %v1914 = vld [vmem:[#allocation10 + $0xd0] sm:$0xff]
        %v1915 = vld [vmem:[#allocation10 + $0xd8] sm:$0xff]
        %v1916 = vld [vmem:[#allocation10 + $0xe0] sm:$0xff]
        %v1917 = vld [vmem:[#allocation10 + $0xe8] sm:$0xff]
        %v1918 = vld [vmem:[#allocation10 + $0xf0] sm:$0xff]
        %v1919 = vld [vmem:[#allocation10 + $0xf8] sm:$0xff]
        %v1920 = vld [vmem:[%s7] sm:$0x3]
        %v1922 = vlaneseq
        %v1923 = vshrl.u32 %v1922, 7
        %v1924 = vsub.s32 0, %v1923
        %v1925 = vrot.slane %v1920, %v1924
        %v1926 = vlaneseq
        %v1927 = vshrl.u32 %v1926, 7
        %v1928 = vsub.s32 1, %v1927
        %v1929 = vrot.slane %v1920, %v1928
        %v1948 = vunpack.c.l.b16 %v1872
        %v1949 = vunpack.c.h.b16 %v1872
        %v1950 = vunpack.c.l.b16 %v1873
        %v1951 = vunpack.c.h.b16 %v1873
        %v1952 = vunpack.c.l.b16 %v1874
        %v1953 = vunpack.c.h.b16 %v1874
        %v1954 = vunpack.c.l.b16 %v1875
        %v1955 = vunpack.c.h.b16 %v1875
        %v1956 = vunpack.c.l.b16 %v1876
        %v1957 = vunpack.c.h.b16 %v1876
        %v1958 = vunpack.c.l.b16 %v1877
        %v1959 = vunpack.c.h.b16 %v1877
        %v1960 = vunpack.c.l.b16 %v1878
        %v1961 = vunpack.c.h.b16 %v1878
        %v1962 = vunpack.c.l.b16 %v1879
        %v1963 = vunpack.c.h.b16 %v1879
        %v1964 = vunpack.c.l.b16 %v1880
        %v1965 = vunpack.c.h.b16 %v1880
        %v1966 = vunpack.c.l.b16 %v1881
        %v1967 = vunpack.c.h.b16 %v1881
        %v1968 = vunpack.c.l.b16 %v1882
        %v1969 = vunpack.c.h.b16 %v1882
        %v1970 = vunpack.c.l.b16 %v1883
        %v1971 = vunpack.c.h.b16 %v1883
        %v1972 = vunpack.c.l.b16 %v1884
        %v1973 = vunpack.c.h.b16 %v1884
        %v1974 = vunpack.c.l.b16 %v1885
        %v1975 = vunpack.c.h.b16 %v1885
        %v1976 = vunpack.c.l.b16 %v1886
        %v1977 = vunpack.c.h.b16 %v1886
        %v1978 = vunpack.c.l.b16 %v1887
        %v1979 = vunpack.c.h.b16 %v1887
        %v1980 = vpack.c.b16 %v1950, %v1948
        %v1981 = vpack.c.b16 %v1951, %v1949
        %v1982 = vpack.c.b16 %v1954, %v1952
        %v1983 = vpack.c.b16 %v1955, %v1953
        %v1984 = vpack.c.b16 %v1958, %v1956
        %v1985 = vpack.c.b16 %v1959, %v1957
        %v1986 = vpack.c.b16 %v1962, %v1960
        %v1987 = vpack.c.b16 %v1963, %v1961
        %v1988 = vpack.c.b16 %v1966, %v1964
        %v1989 = vpack.c.b16 %v1967, %v1965
        %v1990 = vpack.c.b16 %v1970, %v1968
        %v1991 = vpack.c.b16 %v1971, %v1969
        %v1992 = vpack.c.b16 %v1974, %v1972
        %v1993 = vpack.c.b16 %v1975, %v1973
        %v1994 = vpack.c.b16 %v1978, %v1976
        %v1995 = vpack.c.b16 %v1979, %v1977
        %v2044 = vunpack.c.l.b16 %v1888
        %v2045 = vunpack.c.h.b16 %v1888
        %v2046 = vunpack.c.l.b16 %v1889
        %v2047 = vunpack.c.h.b16 %v1889
        %v2048 = vunpack.c.l.b16 %v1890
        %v2049 = vunpack.c.h.b16 %v1890
        %v2050 = vunpack.c.l.b16 %v1891
        %v2051 = vunpack.c.h.b16 %v1891
        %v2052 = vunpack.c.l.b16 %v1892
        %v2053 = vunpack.c.h.b16 %v1892
        %v2054 = vunpack.c.l.b16 %v1893
        %v2055 = vunpack.c.h.b16 %v1893
        %v2056 = vunpack.c.l.b16 %v1894
        %v2057 = vunpack.c.h.b16 %v1894
        %v2058 = vunpack.c.l.b16 %v1895
        %v2059 = vunpack.c.h.b16 %v1895
        %v2060 = vunpack.c.l.b16 %v1896
        %v2061 = vunpack.c.h.b16 %v1896
        %v2062 = vunpack.c.l.b16 %v1897
        %v2063 = vunpack.c.h.b16 %v1897
        %v2064 = vunpack.c.l.b16 %v1898
        %v2065 = vunpack.c.h.b16 %v1898
        %v2066 = vunpack.c.l.b16 %v1899
        %v2067 = vunpack.c.h.b16 %v1899
        %v2068 = vunpack.c.l.b16 %v1900
        %v2069 = vunpack.c.h.b16 %v1900
        %v2070 = vunpack.c.l.b16 %v1901
        %v2071 = vunpack.c.h.b16 %v1901
        %v2072 = vunpack.c.l.b16 %v1902
        %v2073 = vunpack.c.h.b16 %v1902
        %v2074 = vunpack.c.l.b16 %v1903
        %v2075 = vunpack.c.h.b16 %v1903
        %v2076 = vunpack.c.l.b16 %v1904
        %v2077 = vunpack.c.h.b16 %v1904
        %v2078 = vunpack.c.l.b16 %v1905
        %v2079 = vunpack.c.h.b16 %v1905
        %v2080 = vunpack.c.l.b16 %v1906
        %v2081 = vunpack.c.h.b16 %v1906
        %v2082 = vunpack.c.l.b16 %v1907
        %v2083 = vunpack.c.h.b16 %v1907
        %v2084 = vunpack.c.l.b16 %v1908
        %v2085 = vunpack.c.h.b16 %v1908
        %v2086 = vunpack.c.l.b16 %v1909
        %v2087 = vunpack.c.h.b16 %v1909
        %v2088 = vunpack.c.l.b16 %v1910
        %v2089 = vunpack.c.h.b16 %v1910
        %v2090 = vunpack.c.l.b16 %v1911
        %v2091 = vunpack.c.h.b16 %v1911
        %v2092 = vunpack.c.l.b16 %v1912
        %v2093 = vunpack.c.h.b16 %v1912
        %v2094 = vunpack.c.l.b16 %v1913
        %v2095 = vunpack.c.h.b16 %v1913
        %v2096 = vunpack.c.l.b16 %v1914
        %v2097 = vunpack.c.h.b16 %v1914
        %v2098 = vunpack.c.l.b16 %v1915
        %v2099 = vunpack.c.h.b16 %v1915
        %v2100 = vunpack.c.l.b16 %v1916
        %v2101 = vunpack.c.h.b16 %v1916
        %v2102 = vunpack.c.l.b16 %v1917
        %v2103 = vunpack.c.h.b16 %v1917
        %v2104 = vunpack.c.l.b16 %v1918
        %v2105 = vunpack.c.h.b16 %v1918
        %v2106 = vunpack.c.l.b16 %v1919
        %v2107 = vunpack.c.h.b16 %v1919
        %v2108 = vpack.c.b16 %v2046, %v2044
        %v2109 = vpack.c.b16 %v2047, %v2045
        %v2110 = vpack.c.b16 %v2050, %v2048
        %v2111 = vpack.c.b16 %v2051, %v2049
        %v2112 = vpack.c.b16 %v2054, %v2052
        %v2113 = vpack.c.b16 %v2055, %v2053
        %v2114 = vpack.c.b16 %v2058, %v2056
        %v2115 = vpack.c.b16 %v2059, %v2057
        %v2116 = vpack.c.b16 %v2062, %v2060
        %v2117 = vpack.c.b16 %v2063, %v2061
        %v2118 = vpack.c.b16 %v2066, %v2064
        %v2119 = vpack.c.b16 %v2067, %v2065
        %v2120 = vpack.c.b16 %v2070, %v2068
        %v2121 = vpack.c.b16 %v2071, %v2069
        %v2122 = vpack.c.b16 %v2074, %v2072
        %v2123 = vpack.c.b16 %v2075, %v2073
        %v2124 = vpack.c.b16 %v2078, %v2076
        %v2125 = vpack.c.b16 %v2079, %v2077
        %v2126 = vpack.c.b16 %v2082, %v2080
        %v2127 = vpack.c.b16 %v2083, %v2081
        %v2128 = vpack.c.b16 %v2086, %v2084
        %v2129 = vpack.c.b16 %v2087, %v2085
        %v2130 = vpack.c.b16 %v2090, %v2088
        %v2131 = vpack.c.b16 %v2091, %v2089
        %v2132 = vpack.c.b16 %v2094, %v2092
        %v2133 = vpack.c.b16 %v2095, %v2093
        %v2134 = vpack.c.b16 %v2098, %v2096
        %v2135 = vpack.c.b16 %v2099, %v2097
        %v2136 = vpack.c.b16 %v2102, %v2100
        %v2137 = vpack.c.b16 %v2103, %v2101
        %v2138 = vpack.c.b16 %v2106, %v2104
        %v2139 = vpack.c.b16 %v2107, %v2105
        %2172 = vmatprep.subr.bf16.mxu0 %v2109
        %2173 = vmatpush1.bf16.msra.mxu0 %v2108
        %2174 = vmatprep.subr.bf16.mxu0 %v2111
        %2175 = vmatpush1.bf16.msra.mxu0 %v2110
        %2176 = vmatprep.subr.bf16.mxu0 %v2113
        %2177 = vmatpush1.bf16.msra.mxu0 %v2112
        %2178 = vmatprep.subr.bf16.mxu0 %v2115
        %2179 = vmatpush1.bf16.msra.mxu0 %v2114
        %2180 = vmatprep.subr.bf16.mxu0 %v2117
        %2181 = vmatpush1.bf16.msra.mxu0 %v2116
        %2182 = vmatprep.subr.bf16.mxu0 %v2119
        %2183 = vmatpush1.bf16.msra.mxu0 %v2118
        %2184 = vmatprep.subr.bf16.mxu0 %v2121
        %2185 = vmatpush1.bf16.msra.mxu0 %v2120
        %2186 = vmatprep.subr.bf16.mxu0 %v2123
        %2187 = vmatpush1.bf16.msra.mxu0 %v2122
        %2188 = vmatprep.subr.bf16.mxu0 %v2125
        %2189 = vmatpush1.bf16.msra.mxu0 %v2124
        %2190 = vmatprep.subr.bf16.mxu0 %v2127
        %2191 = vmatpush1.bf16.msra.mxu0 %v2126
        %2192 = vmatprep.subr.bf16.mxu0 %v2129
        %2193 = vmatpush1.bf16.msra.mxu0 %v2128
        %2194 = vmatprep.subr.bf16.mxu0 %v2131
        %2195 = vmatpush1.bf16.msra.mxu0 %v2130
        %2196 = vmatprep.subr.bf16.mxu0 %v2133
        %2197 = vmatpush1.bf16.msra.mxu0 %v2132
        %2198 = vmatprep.subr.bf16.mxu0 %v2135
        %2199 = vmatpush1.bf16.msra.mxu0 %v2134
        %2200 = vmatprep.subr.bf16.mxu0 %v2137
        %2201 = vmatpush1.bf16.msra.mxu0 %v2136
        %2202 = vmatprep.subr.bf16.mxu0 %v2139
        %2203 = vmatpush1.bf16.msra.mxu0 %v2138
        %2204 = vmatprep.mubr.bf16.mxu0 %v1981
        %2205 = vmatmul.mubr.bf16.gmra.mrb[0].mxu0 %v1980
        %v2206 = vpop.f32.mrb[0].mxu0
        %v2207 = vadd.f32 %v1925, %v2206
        %v2208 = vpop.f32.mrb[0].mxu0
        %v2209 = vadd.f32 %v1929, %v2208
        %v2210 = vpop.f32.mrb[0].mxu0
        %v2211 = vadd.f32 %v1925, %v2210
        %v2212 = vpop.f32.mrb[0].mxu0
        %v2213 = vadd.f32 %v1929, %v2212
        %2214 = vmatprep.mubr.bf16.mxu0 %v1983
        %2215 = vmatmul.mubr.bf16.gmra.mrb[0].mxu0 %v1982
        %v2216 = vpop.f32.mrb[0].mxu0
        %v2217 = vadd.f32 %v1925, %v2216
        %v2218 = vpop.f32.mrb[0].mxu0
        %v2219 = vadd.f32 %v1929, %v2218
        %v2220 = vpop.f32.mrb[0].mxu0
        %v2221 = vadd.f32 %v1925, %v2220
        %v2222 = vpop.f32.mrb[0].mxu0
        %v2223 = vadd.f32 %v1929, %v2222
        %2224 = vmatprep.mubr.bf16.mxu0 %v1985
        %2225 = vmatmul.mubr.bf16.gmra.mrb[0].mxu0 %v1984
        %v2226 = vpop.f32.mrb[0].mxu0
        %v2227 = vadd.f32 %v1925, %v2226
        %v2228 = vpop.f32.mrb[0].mxu0
        %v2229 = vadd.f32 %v1929, %v2228
        %v2230 = vpop.f32.mrb[0].mxu0
        %v2231 = vadd.f32 %v1925, %v2230
        %v2232 = vpop.f32.mrb[0].mxu0
        %v2233 = vadd.f32 %v1929, %v2232
        %2234 = vmatprep.mubr.bf16.mxu0 %v1987
        %2235 = vmatmul.mubr.bf16.gmra.mrb[0].mxu0 %v1986
        %v2236 = vpop.f32.mrb[0].mxu0
        %v2237 = vadd.f32 %v1925, %v2236
        %v2238 = vpop.f32.mrb[0].mxu0
        %v2239 = vadd.f32 %v1929, %v2238
        %v2240 = vpop.f32.mrb[0].mxu0
        %v2241 = vadd.f32 %v1925, %v2240
        %v2242 = vpop.f32.mrb[0].mxu0
        %v2243 = vadd.f32 %v1929, %v2242
        %2244 = vmatprep.mubr.bf16.mxu0 %v1989
        %2245 = vmatmul.mubr.bf16.gmra.mrb[0].mxu0 %v1988
        %v2246 = vpop.f32.mrb[0].mxu0
        %v2247 = vadd.f32 %v1925, %v2246
        %v2248 = vpop.f32.mrb[0].mxu0
        %v2249 = vadd.f32 %v1929, %v2248
        %v2250 = vpop.f32.mrb[0].mxu0
        %v2251 = vadd.f32 %v1925, %v2250
        %v2252 = vpop.f32.mrb[0].mxu0
        %v2253 = vadd.f32 %v1929, %v2252
        %2254 = vmatprep.mubr.bf16.mxu0 %v1991
        %2255 = vmatmul.mubr.bf16.gmra.mrb[0].mxu0 %v1990
        %v2256 = vpop.f32.mrb[0].mxu0
        %v2257 = vadd.f32 %v1925, %v2256
        %v2258 = vpop.f32.mrb[0].mxu0
        %v2259 = vadd.f32 %v1929, %v2258
        %v2260 = vpop.f32.mrb[0].mxu0
        %v2261 = vadd.f32 %v1925, %v2260
        %v2262 = vpop.f32.mrb[0].mxu0
        %v2263 = vadd.f32 %v1929, %v2262
        %2264 = vmatprep.mubr.bf16.mxu0 %v1993
        %2265 = vmatmul.mubr.bf16.gmra.mrb[0].mxu0 %v1992
        %v2266 = vpop.f32.mrb[0].mxu0
        %v2267 = vadd.f32 %v1925, %v2266
        %v2268 = vpop.f32.mrb[0].mxu0
        %v2269 = vadd.f32 %v1929, %v2268
        %v2270 = vpop.f32.mrb[0].mxu0
        %v2271 = vadd.f32 %v1925, %v2270
        %v2272 = vpop.f32.mrb[0].mxu0
        %v2273 = vadd.f32 %v1929, %v2272
        %2274 = vmatprep.mubr.bf16.mxu0 %v1995
        %2275 = vmatmul.mubr.bf16.gmra.mrb[0].mxu0 %v1994
        %v2276 = vpop.f32.mrb[0].mxu0
        %v2277 = vadd.f32 %v1925, %v2276
        %v2278 = vpop.f32.mrb[0].mxu0
        %v2279 = vadd.f32 %v1929, %v2278
        %v2280 = vpop.f32.mrb[0].mxu0
        %v2281 = vadd.f32 %v1925, %v2280
        %v2282 = vpop.f32.mrb[0].mxu0
        %v2283 = vadd.f32 %v1929, %v2282
        %2284 = vdwg.mxu0
        %v2285 = vpack.c.bf16 %v2211, %v2207
        %v2286 = vpack.c.bf16 %v2213, %v2209
        %v2287 = vpack.c.bf16 %v2221, %v2217
        %v2288 = vpack.c.bf16 %v2223, %v2219
        %v2289 = vpack.c.bf16 %v2231, %v2227
        %v2290 = vpack.c.bf16 %v2233, %v2229
        %v2291 = vpack.c.bf16 %v2241, %v2237
        %v2292 = vpack.c.bf16 %v2243, %v2239
        %v2293 = vpack.c.bf16 %v2251, %v2247
        %v2294 = vpack.c.bf16 %v2253, %v2249
        %v2295 = vpack.c.bf16 %v2261, %v2257
        %v2296 = vpack.c.bf16 %v2263, %v2259
        %v2297 = vpack.c.bf16 %v2271, %v2267
        %v2298 = vpack.c.bf16 %v2273, %v2269
        %v2299 = vpack.c.bf16 %v2281, %v2277
        %v2300 = vpack.c.bf16 %v2283, %v2279
        %v2301 = vld [vmem:[#allocation2] sm:$0xff]
        %v2302 = vld [vmem:[#allocation2 + $0x10] sm:$0xff]
        %v2303 = vld [vmem:[#allocation2 + $0x20] sm:$0xff]
        %v2304 = vld [vmem:[#allocation2 + $0x30] sm:$0xff]
        %v2305 = vld [vmem:[#allocation2 + $0x40] sm:$0xff]
        %v2306 = vld [vmem:[#allocation2 + $0x50] sm:$0xff]
        %v2307 = vld [vmem:[#allocation2 + $0x60] sm:$0xff]
        %v2308 = vld [vmem:[#allocation2 + $0x70] sm:$0xff]
        %v2309 = vld [vmem:[#allocation2 + $0x80] sm:$0xff]
        %v2310 = vld [vmem:[#allocation2 + $0x90] sm:$0xff]
        %v2311 = vld [vmem:[#allocation2 + $0xa0] sm:$0xff]
        %v2312 = vld [vmem:[#allocation2 + $0xb0] sm:$0xff]
        %v2313 = vld [vmem:[#allocation2 + $0xc0] sm:$0xff]
        %v2314 = vld [vmem:[#allocation2 + $0xd0] sm:$0xff]
        %v2315 = vld [vmem:[#allocation2 + $0xe0] sm:$0xff]
        %v2316 = vld [vmem:[#allocation2 + $0xf0] sm:$0xff]
        %v2317 = vld [vmem:[#allocation3] sm:$0xff]
        %v2318 = vld [vmem:[#allocation3 + $0x10] sm:$0xff]
        %v2319 = vld [vmem:[#allocation3 + $0x20] sm:$0xff]
        %v2320 = vld [vmem:[#allocation3 + $0x30] sm:$0xff]
        %v2321 = vld [vmem:[#allocation3 + $0x40] sm:$0xff]
        %v2322 = vld [vmem:[#allocation3 + $0x50] sm:$0xff]
        %v2323 = vld [vmem:[#allocation3 + $0x60] sm:$0xff]
        %v2324 = vld [vmem:[#allocation3 + $0x70] sm:$0xff]
        %v2325 = vld [vmem:[#allocation3 + $0x80] sm:$0xff]
        %v2326 = vld [vmem:[#allocation3 + $0x90] sm:$0xff]
        %v2327 = vld [vmem:[#allocation3 + $0xa0] sm:$0xff]
        %v2328 = vld [vmem:[#allocation3 + $0xb0] sm:$0xff]
        %v2329 = vld [vmem:[#allocation3 + $0xc0] sm:$0xff]
        %v2330 = vld [vmem:[#allocation3 + $0xd0] sm:$0xff]
        %v2331 = vld [vmem:[#allocation3 + $0xe0] sm:$0xff]
        %v2332 = vld [vmem:[#allocation3 + $0xf0] sm:$0xff]
        %vm2333 = vcmask 523264
        %v2335 = vsel %vm2333, %v2285, 0
        %v2338 = vsel %vm2333, %v2287, 0
        %v2341 = vsel %vm2333, %v2289, 0
        %v2344 = vsel %vm2333, %v2291, 0
        %v2347 = vsel %vm2333, %v2293, 0
        %v2350 = vsel %vm2333, %v2295, 0
        %v2353 = vsel %vm2333, %v2297, 0
        %v2356 = vsel %vm2333, %v2299, 0
        %v2359 = vsel %vm2333, %v2301, 0
        %v2362 = vsel %vm2333, %v2302, 0
        %v2365 = vsel %vm2333, %v2303, 0
        %v2368 = vsel %vm2333, %v2304, 0
        %v2371 = vsel %vm2333, %v2305, 0
        %v2374 = vsel %vm2333, %v2306, 0
        %v2377 = vsel %vm2333, %v2307, 0
        %v2380 = vsel %vm2333, %v2308, 0
        %v2383 = vsel %vm2333, %v2309, 0
        %v2386 = vsel %vm2333, %v2310, 0
        %v2389 = vsel %vm2333, %v2311, 0
        %v2392 = vsel %vm2333, %v2312, 0
        %v2395 = vsel %vm2333, %v2313, 0
        %v2398 = vsel %vm2333, %v2314, 0
        %v2401 = vsel %vm2333, %v2315, 0
        %v2404 = vsel %vm2333, %v2316, 0
        %2406 = vmatprep.subr.bf16.mxu0 0
        %2407 = vmatpush1.bf16.xpose.msra.mxu0 %v2359
        %2408 = vmatprep.subr.bf16.mxu0 0
        %2409 = vmatpush1.bf16.xpose.msra.mxu0 %v2362
        %2410 = vmatprep.subr.bf16.mxu0 0
        %2411 = vmatpush1.bf16.xpose.msra.mxu0 %v2365
        %2412 = vmatprep.subr.bf16.mxu0 0
        %2413 = vmatpush1.bf16.xpose.msra.mxu0 %v2368
        %2414 = vmatprep.subr.bf16.mxu0 0
        %2415 = vmatpush1.bf16.xpose.msra.mxu0 %v2371
        %2416 = vmatprep.subr.bf16.mxu0 0
        %2417 = vmatpush1.bf16.xpose.msra.mxu0 %v2374
        %2418 = vmatprep.subr.bf16.mxu0 0
        %2419 = vmatpush1.bf16.xpose.msra.mxu0 %v2377
        %2420 = vmatprep.subr.bf16.mxu0 0
        %2421 = vmatpush1.bf16.xpose.msra.mxu0 %v2380
        %2422 = vmatprep.subr.bf16.mxu0 0
        %2423 = vmatpush1.bf16.xpose.msra.mxu0 %v2383
        %2424 = vmatprep.subr.bf16.mxu0 0
        %2425 = vmatpush1.bf16.xpose.msra.mxu0 %v2386
        %2426 = vmatprep.subr.bf16.mxu0 0
        %2427 = vmatpush1.bf16.xpose.msra.mxu0 %v2389
        %2428 = vmatprep.subr.bf16.mxu0 0
        %2429 = vmatpush1.bf16.xpose.msra.mxu0 %v2392
        %2430 = vmatprep.subr.bf16.mxu0 0
        %2431 = vmatpush1.bf16.xpose.msra.mxu0 %v2395
        %2432 = vmatprep.subr.bf16.mxu0 0
        %2433 = vmatpush1.bf16.xpose.msra.mxu0 %v2398
        %2434 = vmatprep.subr.bf16.mxu0 0
        %2435 = vmatpush1.bf16.xpose.msra.mxu0 %v2401
        %2436 = vmatprep.subr.bf16.mxu0 0
        %2437 = vmatpush1.bf16.xpose.msra.mxu0 %v2404
        %2438 = vmatprep.mubr.bf16.mxu0 0
        %2439 = vmatmul.mubr.bf16.gmra.mrb[0].mxu0 %v2335
        %v2440 = vpop.f32.mrb[0].mxu0
        %v2441 = vadd.f32 0.0, %v2440
        %v2442 = vpop.f32.mrb[0].mxu0
        %v2443 = vadd.f32 0.0, %v2442
        %v2444 = vpop.f32.mrb[0].mxu0
        %v2445 = vadd.f32 0.0, %v2444
        %v2446 = vpop.f32.mrb[0].mxu0
        %v2447 = vadd.f32 0.0, %v2446
        %2448 = vmatprep.mubr.bf16.mxu0 0
        %2449 = vmatmul.mubr.bf16.gmra.mrb[0].mxu0 %v2338
        %v2450 = vpop.f32.mrb[0].mxu0
        %v2451 = vadd.f32 0.0, %v2450
        %v2452 = vpop.f32.mrb[0].mxu0
        %v2453 = vadd.f32 0.0, %v2452
        %v2454 = vpop.f32.mrb[0].mxu0
        %v2455 = vadd.f32 0.0, %v2454
        %v2456 = vpop.f32.mrb[0].mxu0
        %v2457 = vadd.f32 0.0, %v2456
        %2458 = vmatprep.mubr.bf16.mxu0 0
        %2459 = vmatmul.mubr.bf16.gmra.mrb[0].mxu0 %v2341
        %v2460 = vpop.f32.mrb[0].mxu0
        %v2461 = vadd.f32 0.0, %v2460
        %v2462 = vpop.f32.mrb[0].mxu0
        %v2463 = vadd.f32 0.0, %v2462
        %v2464 = vpop.f32.mrb[0].mxu0
        %v2465 = vadd.f32 0.0, %v2464
        %v2466 = vpop.f32.mrb[0].mxu0
        %v2467 = vadd.f32 0.0, %v2466
        %2468 = vmatprep.mubr.bf16.mxu0 0
        %2469 = vmatmul.mubr.bf16.gmra.mrb[0].mxu0 %v2344
        %v2470 = vpop.f32.mrb[0].mxu0
        %v2471 = vadd.f32 0.0, %v2470
        %v2472 = vpop.f32.mrb[0].mxu0
        %v2473 = vadd.f32 0.0, %v2472
        %v2474 = vpop.f32.mrb[0].mxu0
        %v2475 = vadd.f32 0.0, %v2474
        %v2476 = vpop.f32.mrb[0].mxu0
        %v2477 = vadd.f32 0.0, %v2476
        %2478 = vmatprep.mubr.bf16.mxu0 0
        %2479 = vmatmul.mubr.bf16.gmra.mrb[0].mxu0 %v2347
        %v2480 = vpop.f32.mrb[0].mxu0
        %v2481 = vadd.f32 0.0, %v2480
        %v2482 = vpop.f32.mrb[0].mxu0
        %v2483 = vadd.f32 0.0, %v2482
        %v2484 = vpop.f32.mrb[0].mxu0
        %v2485 = vadd.f32 0.0, %v2484
        %v2486 = vpop.f32.mrb[0].mxu0
        %v2487 = vadd.f32 0.0, %v2486
        %2488 = vmatprep.mubr.bf16.mxu0 0
        %2489 = vmatmul.mubr.bf16.gmra.mrb[0].mxu0 %v2350
        %v2490 = vpop.f32.mrb[0].mxu0
        %v2491 = vadd.f32 0.0, %v2490
        %v2492 = vpop.f32.mrb[0].mxu0
        %v2493 = vadd.f32 0.0, %v2492
        %v2494 = vpop.f32.mrb[0].mxu0
        %v2495 = vadd.f32 0.0, %v2494
        %v2496 = vpop.f32.mrb[0].mxu0
        %v2497 = vadd.f32 0.0, %v2496
        %2498 = vmatprep.mubr.bf16.mxu0 0
        %2499 = vmatmul.mubr.bf16.gmra.mrb[0].mxu0 %v2353
        %v2500 = vpop.f32.mrb[0].mxu0
        %v2501 = vadd.f32 0.0, %v2500
        %v2502 = vpop.f32.mrb[0].mxu0
        %v2503 = vadd.f32 0.0, %v2502
        %v2504 = vpop.f32.mrb[0].mxu0
        %v2505 = vadd.f32 0.0, %v2504
        %v2506 = vpop.f32.mrb[0].mxu0
        %v2507 = vadd.f32 0.0, %v2506
        %2508 = vmatprep.mubr.bf16.mxu0 0
        %2509 = vmatmul.mubr.bf16.gmra.mrb[0].mxu0 %v2356
        %v2510 = vpop.f32.mrb[0].mxu0
        %v2511 = vadd.f32 0.0, %v2510
        %v2512 = vpop.f32.mrb[0].mxu0
        %v2513 = vadd.f32 0.0, %v2512
        %v2514 = vpop.f32.mrb[0].mxu0
        %v2515 = vadd.f32 0.0, %v2514
        %v2516 = vpop.f32.mrb[0].mxu0
        %v2517 = vadd.f32 0.0, %v2516
        %2518 = vdwg.mxu0
        %v2519 = vmax.f32 %v2441, %v2443
        %2520 = vmax.xlane.f32.xlu0 %v2519
        %v2521 = vpop.xlane.xlu0 %2520
        %v2522 = vmax.f32 %v2445, %v2447
        %2523 = vmax.xlane.f32.xlu0 %v2522
        %v2524 = vpop.xlane.xlu0 %2523
        %v2525 = vmax.f32 %v2451, %v2453
        %2526 = vmax.xlane.f32.xlu0 %v2525
        %v2527 = vpop.xlane.xlu0 %2526
        %v2528 = vmax.f32 %v2455, %v2457
        %2529 = vmax.xlane.f32.xlu0 %v2528
        %v2530 = vpop.xlane.xlu0 %2529
        %v2531 = vmax.f32 %v2461, %v2463
        %2532 = vmax.xlane.f32.xlu0 %v2531
        %v2533 = vpop.xlane.xlu0 %2532
        %v2534 = vmax.f32 %v2465, %v2467
        %2535 = vmax.xlane.f32.xlu0 %v2534
        %v2536 = vpop.xlane.xlu0 %2535
        %v2537 = vmax.f32 %v2471, %v2473
        %2538 = vmax.xlane.f32.xlu0 %v2537
        %v2539 = vpop.xlane.xlu0 %2538
        %v2540 = vmax.f32 %v2475, %v2477
        %2541 = vmax.xlane.f32.xlu0 %v2540
        %v2542 = vpop.xlane.xlu0 %2541
        %v2543 = vmax.f32 %v2481, %v2483
        %2544 = vmax.xlane.f32.xlu0 %v2543
        %v2545 = vpop.xlane.xlu0 %2544
        %v2546 = vmax.f32 %v2485, %v2487
        %2547 = vmax.xlane.f32.xlu0 %v2546
        %v2548 = vpop.xlane.xlu0 %2547
        %v2549 = vmax.f32 %v2491, %v2493
        %2550 = vmax.xlane.f32.xlu0 %v2549
        %v2551 = vpop.xlane.xlu0 %2550
        %v2552 = vmax.f32 %v2495, %v2497
        %2553 = vmax.xlane.f32.xlu0 %v2552
        %v2554 = vpop.xlane.xlu0 %2553
        %v2555 = vmax.f32 %v2501, %v2503
        %2556 = vmax.xlane.f32.xlu0 %v2555
        %v2557 = vpop.xlane.xlu0 %2556
        %v2558 = vmax.f32 %v2505, %v2507
        %2559 = vmax.xlane.f32.xlu0 %v2558
        %v2560 = vpop.xlane.xlu0 %2559
        %v2561 = vmax.f32 %v2511, %v2513
        %2562 = vmax.xlane.f32.xlu0 %v2561
        %v2563 = vpop.xlane.xlu0 %2562
        %v2564 = vmax.f32 %v2515, %v2517
        %2565 = vmax.xlane.f32.xlu0 %v2564
        %v2566 = vpop.xlane.xlu0 %2565
        %v2567 = vsub.f32 %v2441, %v2521
        %v2568 = vsub.f32 %v2443, %v2521
        %v2569 = vsub.f32 %v2445, %v2524
        %v2570 = vsub.f32 %v2447, %v2524
        %v2571 = vsub.f32 %v2451, %v2527
        %v2572 = vsub.f32 %v2453, %v2527
        %v2573 = vsub.f32 %v2455, %v2530
        %v2574 = vsub.f32 %v2457, %v2530
        %v2575 = vsub.f32 %v2461, %v2533
        %v2576 = vsub.f32 %v2463, %v2533
        %v2577 = vsub.f32 %v2465, %v2536
        %v2578 = vsub.f32 %v2467, %v2536
        %v2579 = vsub.f32 %v2471, %v2539
        %v2580 = vsub.f32 %v2473, %v2539
        %v2581 = vsub.f32 %v2475, %v2542
        %v2582 = vsub.f32 %v2477, %v2542
        %v2583 = vsub.f32 %v2481, %v2545
        %v2584 = vsub.f32 %v2483, %v2545
        %v2585 = vsub.f32 %v2485, %v2548
        %v2586 = vsub.f32 %v2487, %v2548
        %v2587 = vsub.f32 %v2491, %v2551
        %v2588 = vsub.f32 %v2493, %v2551
        %v2589 = vsub.f32 %v2495, %v2554
        %v2590 = vsub.f32 %v2497, %v2554
        %v2591 = vsub.f32 %v2501, %v2557
        %v2592 = vsub.f32 %v2503, %v2557
        %v2593 = vsub.f32 %v2505, %v2560
        %v2594 = vsub.f32 %v2507, %v2560
        %v2595 = vsub.f32 %v2511, %v2563
        %v2596 = vsub.f32 %v2513, %v2563
        %v2597 = vsub.f32 %v2515, %v2566
        %v2598 = vsub.f32 %v2517, %v2566
        %v2599 = vmul.f32 %v2567, 1.442695
        %v2600 = vpow.pop %v2599
        %v2601 = vmul.f32 %v2568, 1.442695
        %v2602 = vpow.pop %v2601
        %v2603 = vmul.f32 %v2569, 1.442695
        %v2604 = vpow.pop %v2603
        %v2605 = vmul.f32 %v2570, 1.442695
        %v2606 = vpow.pop %v2605
        %v2607 = vmul.f32 %v2571, 1.442695
        %v2608 = vpow.pop %v2607
        %v2609 = vmul.f32 %v2572, 1.442695
        %v2610 = vpow.pop %v2609
        %v2611 = vmul.f32 %v2573, 1.442695
        %v2612 = vpow.pop %v2611
        %v2613 = vmul.f32 %v2574, 1.442695
        %v2614 = vpow.pop %v2613
        %v2615 = vmul.f32 %v2575, 1.442695
        %v2616 = vpow.pop %v2615
        %v2617 = vmul.f32 %v2576, 1.442695
        %v2618 = vpow.pop %v2617
        %v2619 = vmul.f32 %v2577, 1.442695
        %v2620 = vpow.pop %v2619
        %v2621 = vmul.f32 %v2578, 1.442695
        %v2622 = vpow.pop %v2621
        %v2623 = vmul.f32 %v2579, 1.442695
        %v2624 = vpow.pop %v2623
        %v2625 = vmul.f32 %v2580, 1.442695
        %v2626 = vpow.pop %v2625
        %v2627 = vmul.f32 %v2581, 1.442695
        %v2628 = vpow.pop %v2627
        %v2629 = vmul.f32 %v2582, 1.442695
        %v2630 = vpow.pop %v2629
        %v2631 = vmul.f32 %v2583, 1.442695
        %v2632 = vpow.pop %v2631
        %v2633 = vmul.f32 %v2584, 1.442695
        %v2634 = vpow.pop %v2633
        %v2635 = vmul.f32 %v2585, 1.442695
        %v2636 = vpow.pop %v2635
        %v2637 = vmul.f32 %v2586, 1.442695
        %v2638 = vpow.pop %v2637
        %v2639 = vmul.f32 %v2587, 1.442695
        %v2640 = vpow.pop %v2639
        %v2641 = vmul.f32 %v2588, 1.442695
        %v2642 = vpow.pop %v2641
        %v2643 = vmul.f32 %v2589, 1.442695
        %v2644 = vpow.pop %v2643
        %v2645 = vmul.f32 %v2590, 1.442695
        %v2646 = vpow.pop %v2645
        %v2647 = vmul.f32 %v2591, 1.442695
        %v2648 = vpow.pop %v2647
        %v2649 = vmul.f32 %v2592, 1.442695
        %v2650 = vpow.pop %v2649
        %v2651 = vmul.f32 %v2593, 1.442695
        %v2652 = vpow.pop %v2651
        %v2653 = vmul.f32 %v2594, 1.442695
        %v2654 = vpow.pop %v2653
        %v2655 = vmul.f32 %v2595, 1.442695
        %v2656 = vpow.pop %v2655
        %v2657 = vmul.f32 %v2596, 1.442695
        %v2658 = vpow.pop %v2657
        %v2659 = vmul.f32 %v2597, 1.442695
        %v2660 = vpow.pop %v2659
        %v2661 = vmul.f32 %v2598, 1.442695
        %v2662 = vpow.pop %v2661
        %v2663 = vadd.f32 %v2600, %v2602
        %2664 = vadd.xlane.f32.xlu0 %v2663
        %v2665 = vpop.xlane.xlu0 %2664
        %v2666 = vadd.f32 %v2604, %v2606
        %2667 = vadd.xlane.f32.xlu0 %v2666
        %v2668 = vpop.xlane.xlu0 %2667
        %v2669 = vadd.f32 %v2608, %v2610
        %2670 = vadd.xlane.f32.xlu0 %v2669
        %v2671 = vpop.xlane.xlu0 %2670
        %v2672 = vadd.f32 %v2612, %v2614
        %2673 = vadd.xlane.f32.xlu0 %v2672
        %v2674 = vpop.xlane.xlu0 %2673
        %v2675 = vadd.f32 %v2616, %v2618
        %2676 = vadd.xlane.f32.xlu0 %v2675
        %v2677 = vpop.xlane.xlu0 %2676
        %v2678 = vadd.f32 %v2620, %v2622
        %2679 = vadd.xlane.f32.xlu0 %v2678
        %v2680 = vpop.xlane.xlu0 %2679
        %v2681 = vadd.f32 %v2624, %v2626
        %2682 = vadd.xlane.f32.xlu0 %v2681
        %v2683 = vpop.xlane.xlu0 %2682
        %v2684 = vadd.f32 %v2628, %v2630
        %2685 = vadd.xlane.f32.xlu0 %v2684
        %v2686 = vpop.xlane.xlu0 %2685
        %v2687 = vadd.f32 %v2632, %v2634
        %2688 = vadd.xlane.f32.xlu0 %v2687
        %v2689 = vpop.xlane.xlu0 %2688
        %v2690 = vadd.f32 %v2636, %v2638
        %2691 = vadd.xlane.f32.xlu0 %v2690
        %v2692 = vpop.xlane.xlu0 %2691
        %v2693 = vadd.f32 %v2640, %v2642
        %2694 = vadd.xlane.f32.xlu0 %v2693
        %v2695 = vpop.xlane.xlu0 %2694
        %v2696 = vadd.f32 %v2644, %v2646
        %2697 = vadd.xlane.f32.xlu0 %v2696
        %v2698 = vpop.xlane.xlu0 %2697
        %v2699 = vadd.f32 %v2648, %v2650
        %2700 = vadd.xlane.f32.xlu0 %v2699
        %v2701 = vpop.xlane.xlu0 %2700
        %v2702 = vadd.f32 %v2652, %v2654
        %2703 = vadd.xlane.f32.xlu0 %v2702
        %v2704 = vpop.xlane.xlu0 %2703
        %v2705 = vadd.f32 %v2656, %v2658
        %2706 = vadd.xlane.f32.xlu0 %v2705
        %v2707 = vpop.xlane.xlu0 %2706
        %v2708 = vadd.f32 %v2660, %v2662
        %2709 = vadd.xlane.f32.xlu0 %v2708
        %v2710 = vpop.xlane.xlu0 %2709
        %v2711 = vpack.c.bf16 %v2604, %v2600
        %v2712 = vpack.c.bf16 %v2606, %v2602
        %v2713 = vpack.c.bf16 %v2612, %v2608
        %v2714 = vpack.c.bf16 %v2614, %v2610
        %v2715 = vpack.c.bf16 %v2620, %v2616
        %v2716 = vpack.c.bf16 %v2622, %v2618
        %v2717 = vpack.c.bf16 %v2628, %v2624
        %v2718 = vpack.c.bf16 %v2630, %v2626
        %v2719 = vpack.c.bf16 %v2636, %v2632
        %v2720 = vpack.c.bf16 %v2638, %v2634
        %v2721 = vpack.c.bf16 %v2644, %v2640
        %v2722 = vpack.c.bf16 %v2646, %v2642
        %v2723 = vpack.c.bf16 %v2652, %v2648
        %v2724 = vpack.c.bf16 %v2654, %v2650
        %v2725 = vpack.c.bf16 %v2660, %v2656
        %v2726 = vpack.c.bf16 %v2662, %v2658
        %2727 = vmatprep.subr.bf16.mxu0 0
        %2728 = vmatpush1.bf16.msra.mxu0 %v2317
        %2729 = vmatprep.subr.bf16.mxu0 0
        %2730 = vmatpush1.bf16.msra.mxu0 %v2318
        %2731 = vmatprep.subr.bf16.mxu0 0
        %2732 = vmatpush1.bf16.msra.mxu0 %v2319
        %2733 = vmatprep.subr.bf16.mxu0 0
        %2734 = vmatpush1.bf16.msra.mxu0 %v2320
        %2735 = vmatprep.subr.bf16.mxu0 0
        %2736 = vmatpush1.bf16.msra.mxu0 %v2321
        %2737 = vmatprep.subr.bf16.mxu0 0
        %2738 = vmatpush1.bf16.msra.mxu0 %v2322
        %2739 = vmatprep.subr.bf16.mxu0 0
        %2740 = vmatpush1.bf16.msra.mxu0 %v2323
        %2741 = vmatprep.subr.bf16.mxu0 0
        %2742 = vmatpush1.bf16.msra.mxu0 %v2324
        %2743 = vmatprep.subr.bf16.mxu0 0
        %2744 = vmatpush1.bf16.msra.mxu0 %v2325
        %2745 = vmatprep.subr.bf16.mxu0 0
        %2746 = vmatpush1.bf16.msra.mxu0 %v2326
        %2747 = vmatprep.subr.bf16.mxu0 0
        %2748 = vmatpush1.bf16.msra.mxu0 %v2327
        %2749 = vmatprep.subr.bf16.mxu0 0
        %2750 = vmatpush1.bf16.msra.mxu0 %v2328
        %2751 = vmatprep.subr.bf16.mxu0 0
        %2752 = vmatpush1.bf16.msra.mxu0 %v2329
        %2753 = vmatprep.subr.bf16.mxu0 0
        %2754 = vmatpush1.bf16.msra.mxu0 %v2330
        %2755 = vmatprep.subr.bf16.mxu0 0
        %2756 = vmatpush1.bf16.msra.mxu0 %v2331
        %2757 = vmatprep.subr.bf16.mxu0 0
        %2758 = vmatpush1.bf16.msra.mxu0 %v2332
        %2759 = vmatprep.mubr.bf16.mxu0 %v2712
        %2760 = vmatmul.mubr.bf16.gmra.mrb[0].mxu0 %v2711
        %v2761 = vpop.f32.mrb[0].mxu0
        %v2762 = vadd.f32 0.0, %v2761
        %v2763 = vpop.f32.mrb[0].mxu0
        %v2764 = vpop.f32.mrb[0].mxu0
        %v2765 = vadd.f32 0.0, %v2764
        %v2766 = vpop.f32.mrb[0].mxu0
        %2767 = vmatprep.mubr.bf16.mxu0 %v2714
        %2768 = vmatmul.mubr.bf16.gmra.mrb[0].mxu0 %v2713
        %v2769 = vpop.f32.mrb[0].mxu0
        %v2770 = vadd.f32 0.0, %v2769
        %v2771 = vpop.f32.mrb[0].mxu0
        %v2772 = vpop.f32.mrb[0].mxu0
        %v2773 = vadd.f32 0.0, %v2772
        %v2774 = vpop.f32.mrb[0].mxu0
        %2775 = vmatprep.mubr.bf16.mxu0 %v2716
        %2776 = vmatmul.mubr.bf16.gmra.mrb[0].mxu0 %v2715
        %v2777 = vpop.f32.mrb[0].mxu0
        %v2778 = vadd.f32 0.0, %v2777
        %v2779 = vpop.f32.mrb[0].mxu0
        %v2780 = vpop.f32.mrb[0].mxu0
        %v2781 = vadd.f32 0.0, %v2780
        %v2782 = vpop.f32.mrb[0].mxu0
        %2783 = vmatprep.mubr.bf16.mxu0 %v2718
        %2784 = vmatmul.mubr.bf16.gmra.mrb[0].mxu0 %v2717
        %v2785 = vpop.f32.mrb[0].mxu0
        %v2786 = vadd.f32 0.0, %v2785
        %v2787 = vpop.f32.mrb[0].mxu0
        %v2788 = vpop.f32.mrb[0].mxu0
        %v2789 = vadd.f32 0.0, %v2788
        %v2790 = vpop.f32.mrb[0].mxu0
        %2791 = vmatprep.mubr.bf16.mxu0 %v2720
        %2792 = vmatmul.mubr.bf16.gmra.mrb[0].mxu0 %v2719
        %v2793 = vpop.f32.mrb[0].mxu0
        %v2794 = vadd.f32 0.0, %v2793
        %v2795 = vpop.f32.mrb[0].mxu0
        %v2796 = vpop.f32.mrb[0].mxu0
        %v2797 = vadd.f32 0.0, %v2796
        %v2798 = vpop.f32.mrb[0].mxu0
        %2799 = vmatprep.mubr.bf16.mxu0 %v2722
        %2800 = vmatmul.mubr.bf16.gmra.mrb[0].mxu0 %v2721
        %v2801 = vpop.f32.mrb[0].mxu0
        %v2802 = vadd.f32 0.0, %v2801
        %v2803 = vpop.f32.mrb[0].mxu0
        %v2804 = vpop.f32.mrb[0].mxu0
        %v2805 = vadd.f32 0.0, %v2804
        %v2806 = vpop.f32.mrb[0].mxu0
        %2807 = vmatprep.mubr.bf16.mxu0 %v2724
        %2808 = vmatmul.mubr.bf16.gmra.mrb[0].mxu0 %v2723
        %v2809 = vpop.f32.mrb[0].mxu0
        %v2810 = vadd.f32 0.0, %v2809
        %v2811 = vpop.f32.mrb[0].mxu0
        %v2812 = vpop.f32.mrb[0].mxu0
        %v2813 = vadd.f32 0.0, %v2812
        %v2814 = vpop.f32.mrb[0].mxu0
        %2815 = vmatprep.mubr.bf16.mxu0 %v2726
        %2816 = vmatmul.mubr.bf16.gmra.mrb[0].mxu0 %v2725
        %v2817 = vpop.f32.mrb[0].mxu0
        %v2818 = vadd.f32 0.0, %v2817
        %v2819 = vpop.f32.mrb[0].mxu0
        %v2820 = vpop.f32.mrb[0].mxu0
        %v2821 = vadd.f32 0.0, %v2820
        %v2822 = vpop.f32.mrb[0].mxu0
        %2823 = vdwg.mxu0
        %v2824 = vrcp.pop %v2665
        %v2825 = vrcp.pop %v2668
        %v2826 = vrcp.pop %v2671
        %v2827 = vrcp.pop %v2674
        %v2828 = vrcp.pop %v2677
        %v2829 = vrcp.pop %v2680
        %v2830 = vrcp.pop %v2683
        %v2831 = vrcp.pop %v2686
        %v2832 = vrcp.pop %v2689
        %v2833 = vrcp.pop %v2692
        %v2834 = vrcp.pop %v2695
        %v2835 = vrcp.pop %v2698
        %v2836 = vrcp.pop %v2701
        %v2837 = vrcp.pop %v2704
        %v2838 = vrcp.pop %v2707
        %v2839 = vrcp.pop %v2710
        %v2840 = vmul.f32 %v2762, %v2824
        %v2841 = vmul.f32 %v2765, %v2825
        %v2842 = vmul.f32 %v2770, %v2826
        %v2843 = vmul.f32 %v2773, %v2827
        %v2844 = vmul.f32 %v2778, %v2828
        %v2845 = vmul.f32 %v2781, %v2829
        %v2846 = vmul.f32 %v2786, %v2830
        %v2847 = vmul.f32 %v2789, %v2831
        %v2848 = vmul.f32 %v2794, %v2832
        %v2849 = vmul.f32 %v2797, %v2833
        %v2850 = vmul.f32 %v2802, %v2834
        %v2851 = vmul.f32 %v2805, %v2835
        %v2852 = vmul.f32 %v2810, %v2836
        %v2853 = vmul.f32 %v2813, %v2837
        %v2854 = vmul.f32 %v2818, %v2838
        %v2855 = vmul.f32 %v2821, %v2839
        %v2856 = vpack.c.bf16 %v2841, %v2840
        %v2857 = vpack.c.bf16 %v2843, %v2842
        %v2858 = vpack.c.bf16 %v2845, %v2844
        %v2859 = vpack.c.bf16 %v2847, %v2846
        %v2860 = vpack.c.bf16 %v2849, %v2848
        %v2861 = vpack.c.bf16 %v2851, %v2850
        %v2862 = vpack.c.bf16 %v2853, %v2852
        %v2863 = vpack.c.bf16 %v2855, %v2854
        %v2864 = vld [vmem:[#allocation15] sm:$0xff]
        %v2865 = vld [vmem:[#allocation15 + $0x8] sm:$0xff]
        %v2866 = vld [vmem:[#allocation15 + $0x10] sm:$0xff]
        %v2867 = vld [vmem:[#allocation15 + $0x18] sm:$0xff]
        %v2868 = vld [vmem:[#allocation15 + $0x20] sm:$0xff]
        %v2869 = vld [vmem:[#allocation15 + $0x28] sm:$0xff]
        %v2870 = vld [vmem:[#allocation15 + $0x30] sm:$0xff]
        %v2871 = vld [vmem:[#allocation15 + $0x38] sm:$0xff]
        %2880 = vrot.lane.b32.xlu0 %v2285, 64
        %v2881 = vpop.permute.xlu0 %2880
        %2882 = vrot.lane.b32.xlu0 %v2287, 64
        %v2883 = vpop.permute.xlu0 %2882
        %2884 = vrot.lane.b32.xlu0 %v2289, 64
        %v2885 = vpop.permute.xlu0 %2884
        %2886 = vrot.lane.b32.xlu0 %v2291, 64
        %v2887 = vpop.permute.xlu0 %2886
        %2888 = vrot.lane.b32.xlu0 %v2293, 64
        %v2889 = vpop.permute.xlu0 %2888
        %2890 = vrot.lane.b32.xlu0 %v2295, 64
        %v2891 = vpop.permute.xlu0 %2890
        %2892 = vrot.lane.b32.xlu0 %v2297, 64
        %v2893 = vpop.permute.xlu0 %2892
        %2894 = vrot.lane.b32.xlu0 %v2299, 64
        %v2895 = vpop.permute.xlu0 %2894
        %2912 = vrot.lane.b32.xlu0 %v2301, 64
        %v2913 = vpop.permute.xlu0 %2912
        %2914 = vrot.lane.b32.xlu0 %v2302, 64
        %v2915 = vpop.permute.xlu0 %2914
        %2916 = vrot.lane.b32.xlu0 %v2303, 64
        %v2917 = vpop.permute.xlu0 %2916
        %2918 = vrot.lane.b32.xlu0 %v2304, 64
        %v2919 = vpop.permute.xlu0 %2918
        %2920 = vrot.lane.b32.xlu0 %v2305, 64
        %v2921 = vpop.permute.xlu0 %2920
        %2922 = vrot.lane.b32.xlu0 %v2306, 64
        %v2923 = vpop.permute.xlu0 %2922
        %2924 = vrot.lane.b32.xlu0 %v2307, 64
        %v2925 = vpop.permute.xlu0 %2924
        %2926 = vrot.lane.b32.xlu0 %v2308, 64
        %v2927 = vpop.permute.xlu0 %2926
        %2928 = vrot.lane.b32.xlu0 %v2309, 64
        %v2929 = vpop.permute.xlu0 %2928
        %2930 = vrot.lane.b32.xlu0 %v2310, 64
        %v2931 = vpop.permute.xlu0 %2930
        %2932 = vrot.lane.b32.xlu0 %v2311, 64
        %v2933 = vpop.permute.xlu0 %2932
        %2934 = vrot.lane.b32.xlu0 %v2312, 64
        %v2935 = vpop.permute.xlu0 %2934
        %2936 = vrot.lane.b32.xlu0 %v2313, 64
        %v2937 = vpop.permute.xlu0 %2936
        %2938 = vrot.lane.b32.xlu0 %v2314, 64
        %v2939 = vpop.permute.xlu0 %2938
        %2940 = vrot.lane.b32.xlu0 %v2315, 64
        %v2941 = vpop.permute.xlu0 %2940
        %2942 = vrot.lane.b32.xlu0 %v2316, 64
        %v2943 = vpop.permute.xlu0 %2942
        %v2945 = vsel %vm2333, %v2881, 0
        %v2948 = vsel %vm2333, %v2883, 0
        %v2951 = vsel %vm2333, %v2885, 0
        %v2954 = vsel %vm2333, %v2887, 0
        %v2957 = vsel %vm2333, %v2889, 0
        %v2960 = vsel %vm2333, %v2891, 0
        %v2963 = vsel %vm2333, %v2893, 0
        %v2966 = vsel %vm2333, %v2895, 0
        %v2969 = vsel %vm2333, %v2913, 0
        %v2972 = vsel %vm2333, %v2915, 0
        %v2975 = vsel %vm2333, %v2917, 0
        %v2978 = vsel %vm2333, %v2919, 0
        %v2981 = vsel %vm2333, %v2921, 0
        %v2984 = vsel %vm2333, %v2923, 0
        %v2987 = vsel %vm2333, %v2925, 0
        %v2990 = vsel %vm2333, %v2927, 0
        %v2993 = vsel %vm2333, %v2929, 0
        %v2996 = vsel %vm2333, %v2931, 0
        %v2999 = vsel %vm2333, %v2933, 0
        %v3002 = vsel %vm2333, %v2935, 0
        %v3005 = vsel %vm2333, %v2937, 0
        %v3008 = vsel %vm2333, %v2939, 0
        %v3011 = vsel %vm2333, %v2941, 0
        %v3014 = vsel %vm2333, %v2943, 0
        %3016 = vmatprep.subr.bf16.mxu0 0
        %3017 = vmatpush1.bf16.xpose.msra.mxu0 %v2969
        %3018 = vmatprep.subr.bf16.mxu0 0
        %3019 = vmatpush1.bf16.xpose.msra.mxu0 %v2972
        %3020 = vmatprep.subr.bf16.mxu0 0
        %3021 = vmatpush1.bf16.xpose.msra.mxu0 %v2975
        %3022 = vmatprep.subr.bf16.mxu0 0
        %3023 = vmatpush1.bf16.xpose.msra.mxu0 %v2978
        %3024 = vmatprep.subr.bf16.mxu0 0
        %3025 = vmatpush1.bf16.xpose.msra.mxu0 %v2981
        %3026 = vmatprep.subr.bf16.mxu0 0
        %3027 = vmatpush1.bf16.xpose.msra.mxu0 %v2984
        %3028 = vmatprep.subr.bf16.mxu0 0
        %3029 = vmatpush1.bf16.xpose.msra.mxu0 %v2987
        %3030 = vmatprep.subr.bf16.mxu0 0
        %3031 = vmatpush1.bf16.xpose.msra.mxu0 %v2990
        %3032 = vmatprep.subr.bf16.mxu0 0
        %3033 = vmatpush1.bf16.xpose.msra.mxu0 %v2993
        %3034 = vmatprep.subr.bf16.mxu0 0
        %3035 = vmatpush1.bf16.xpose.msra.mxu0 %v2996
        %3036 = vmatprep.subr.bf16.mxu0 0
        %3037 = vmatpush1.bf16.xpose.msra.mxu0 %v2999
        %3038 = vmatprep.subr.bf16.mxu0 0
        %3039 = vmatpush1.bf16.xpose.msra.mxu0 %v3002
        %3040 = vmatprep.subr.bf16.mxu0 0
        %3041 = vmatpush1.bf16.xpose.msra.mxu0 %v3005
        %3042 = vmatprep.subr.bf16.mxu0 0
        %3043 = vmatpush1.bf16.xpose.msra.mxu0 %v3008
        %3044 = vmatprep.subr.bf16.mxu0 0
        %3045 = vmatpush1.bf16.xpose.msra.mxu0 %v3011
        %3046 = vmatprep.subr.bf16.mxu0 0
        %3047 = vmatpush1.bf16.xpose.msra.mxu0 %v3014
        %3048 = vmatprep.mubr.bf16.mxu0 0
        %3049 = vmatmul.mubr.bf16.gmra.mrb[0].mxu0 %v2945
        %v3050 = vpop.f32.mrb[0].mxu0
        %v3051 = vadd.f32 0.0, %v3050
        %v3052 = vpop.f32.mrb[0].mxu0
        %v3053 = vadd.f32 0.0, %v3052
        %v3054 = vpop.f32.mrb[0].mxu0
        %v3055 = vadd.f32 0.0, %v3054
        %v3056 = vpop.f32.mrb[0].mxu0
        %v3057 = vadd.f32 0.0, %v3056
        %3058 = vmatprep.mubr.bf16.mxu0 0
        %3059 = vmatmul.mubr.bf16.gmra.mrb[0].mxu0 %v2948
        %v3060 = vpop.f32.mrb[0].mxu0
        %v3061 = vadd.f32 0.0, %v3060
        %v3062 = vpop.f32.mrb[0].mxu0
        %v3063 = vadd.f32 0.0, %v3062
        %v3064 = vpop.f32.mrb[0].mxu0
        %v3065 = vadd.f32 0.0, %v3064
        %v3066 = vpop.f32.mrb[0].mxu0
        %v3067 = vadd.f32 0.0, %v3066
        %3068 = vmatprep.mubr.bf16.mxu0 0
        %3069 = vmatmul.mubr.bf16.gmra.mrb[0].mxu0 %v2951
        %v3070 = vpop.f32.mrb[0].mxu0
        %v3071 = vadd.f32 0.0, %v3070
        %v3072 = vpop.f32.mrb[0].mxu0
        %v3073 = vadd.f32 0.0, %v3072
        %v3074 = vpop.f32.mrb[0].mxu0
        %v3075 = vadd.f32 0.0, %v3074
        %v3076 = vpop.f32.mrb[0].mxu0
        %v3077 = vadd.f32 0.0, %v3076
        %3078 = vmatprep.mubr.bf16.mxu0 0
        %3079 = vmatmul.mubr.bf16.gmra.mrb[0].mxu0 %v2954
        %v3080 = vpop.f32.mrb[0].mxu0
        %v3081 = vadd.f32 0.0, %v3080
        %v3082 = vpop.f32.mrb[0].mxu0
        %v3083 = vadd.f32 0.0, %v3082
        %v3084 = vpop.f32.mrb[0].mxu0
        %v3085 = vadd.f32 0.0, %v3084
        %v3086 = vpop.f32.mrb[0].mxu0
        %v3087 = vadd.f32 0.0, %v3086
        %3088 = vmatprep.mubr.bf16.mxu0 0
        %3089 = vmatmul.mubr.bf16.gmra.mrb[0].mxu0 %v2957
        %v3090 = vpop.f32.mrb[0].mxu0
        %v3091 = vadd.f32 0.0, %v3090
        %v3092 = vpop.f32.mrb[0].mxu0
        %v3093 = vadd.f32 0.0, %v3092
        %v3094 = vpop.f32.mrb[0].mxu0
        %v3095 = vadd.f32 0.0, %v3094
        %v3096 = vpop.f32.mrb[0].mxu0
        %v3097 = vadd.f32 0.0, %v3096
        %3098 = vmatprep.mubr.bf16.mxu0 0
        %3099 = vmatmul.mubr.bf16.gmra.mrb[0].mxu0 %v2960
        %v3100 = vpop.f32.mrb[0].mxu0
        %v3101 = vadd.f32 0.0, %v3100
        %v3102 = vpop.f32.mrb[0].mxu0
        %v3103 = vadd.f32 0.0, %v3102
        %v3104 = vpop.f32.mrb[0].mxu0
        %v3105 = vadd.f32 0.0, %v3104
        %v3106 = vpop.f32.mrb[0].mxu0
        %v3107 = vadd.f32 0.0, %v3106
        %3108 = vmatprep.mubr.bf16.mxu0 0
        %3109 = vmatmul.mubr.bf16.gmra.mrb[0].mxu0 %v2963
        %v3110 = vpop.f32.mrb[0].mxu0
        %v3111 = vadd.f32 0.0, %v3110
        %v3112 = vpop.f32.mrb[0].mxu0
        %v3113 = vadd.f32 0.0, %v3112
        %v3114 = vpop.f32.mrb[0].mxu0
        %v3115 = vadd.f32 0.0, %v3114
        %v3116 = vpop.f32.mrb[0].mxu0
        %v3117 = vadd.f32 0.0, %v3116
        %3118 = vmatprep.mubr.bf16.mxu0 0
        %3119 = vmatmul.mubr.bf16.gmra.mrb[0].mxu0 %v2966
        %v3120 = vpop.f32.mrb[0].mxu0
        %v3121 = vadd.f32 0.0, %v3120
        %v3122 = vpop.f32.mrb[0].mxu0
        %v3123 = vadd.f32 0.0, %v3122
        %v3124 = vpop.f32.mrb[0].mxu0
        %v3125 = vadd.f32 0.0, %v3124
        %v3126 = vpop.f32.mrb[0].mxu0
        %v3127 = vadd.f32 0.0, %v3126
        %3128 = vdwg.mxu0
        %v3129 = vmax.f32 %v3051, %v3053
        %3130 = vmax.xlane.f32.xlu0 %v3129
        %v3131 = vpop.xlane.xlu0 %3130
        %v3132 = vmax.f32 %v3055, %v3057
        %3133 = vmax.xlane.f32.xlu0 %v3132
        %v3134 = vpop.xlane.xlu0 %3133
        %v3135 = vmax.f32 %v3061, %v3063
        %3136 = vmax.xlane.f32.xlu0 %v3135
        %v3137 = vpop.xlane.xlu0 %3136
        %v3138 = vmax.f32 %v3065, %v3067
        %3139 = vmax.xlane.f32.xlu0 %v3138
        %v3140 = vpop.xlane.xlu0 %3139
        %v3141 = vmax.f32 %v3071, %v3073
        %3142 = vmax.xlane.f32.xlu0 %v3141
        %v3143 = vpop.xlane.xlu0 %3142
        %v3144 = vmax.f32 %v3075, %v3077
        %3145 = vmax.xlane.f32.xlu0 %v3144
        %v3146 = vpop.xlane.xlu0 %3145
        %v3147 = vmax.f32 %v3081, %v3083
        %3148 = vmax.xlane.f32.xlu0 %v3147
        %v3149 = vpop.xlane.xlu0 %3148
        %v3150 = vmax.f32 %v3085, %v3087
        %3151 = vmax.xlane.f32.xlu0 %v3150
        %v3152 = vpop.xlane.xlu0 %3151
        %v3153 = vmax.f32 %v3091, %v3093
        %3154 = vmax.xlane.f32.xlu0 %v3153
        %v3155 = vpop.xlane.xlu0 %3154
        %v3156 = vmax.f32 %v3095, %v3097
        %3157 = vmax.xlane.f32.xlu0 %v3156
        %v3158 = vpop.xlane.xlu0 %3157
        %v3159 = vmax.f32 %v3101, %v3103
        %3160 = vmax.xlane.f32.xlu0 %v3159
        %v3161 = vpop.xlane.xlu0 %3160
        %v3162 = vmax.f32 %v3105, %v3107
        %3163 = vmax.xlane.f32.xlu0 %v3162
        %v3164 = vpop.xlane.xlu0 %3163
        %v3165 = vmax.f32 %v3111, %v3113
        %3166 = vmax.xlane.f32.xlu0 %v3165
        %v3167 = vpop.xlane.xlu0 %3166
        %v3168 = vmax.f32 %v3115, %v3117
        %3169 = vmax.xlane.f32.xlu0 %v3168
        %v3170 = vpop.xlane.xlu0 %3169
        %v3171 = vmax.f32 %v3121, %v3123
        %3172 = vmax.xlane.f32.xlu0 %v3171
        %v3173 = vpop.xlane.xlu0 %3172
        %v3174 = vmax.f32 %v3125, %v3127
        %3175 = vmax.xlane.f32.xlu0 %v3174
        %v3176 = vpop.xlane.xlu0 %3175
        %v3177 = vsub.f32 %v3051, %v3131
        %v3178 = vsub.f32 %v3053, %v3131
        %v3179 = vsub.f32 %v3055, %v3134
        %v3180 = vsub.f32 %v3057, %v3134
        %v3181 = vsub.f32 %v3061, %v3137
        %v3182 = vsub.f32 %v3063, %v3137
        %v3183 = vsub.f32 %v3065, %v3140
        %v3184 = vsub.f32 %v3067, %v3140
        %v3185 = vsub.f32 %v3071, %v3143
        %v3186 = vsub.f32 %v3073, %v3143
        %v3187 = vsub.f32 %v3075, %v3146
        %v3188 = vsub.f32 %v3077, %v3146
        %v3189 = vsub.f32 %v3081, %v3149
        %v3190 = vsub.f32 %v3083, %v3149
        %v3191 = vsub.f32 %v3085, %v3152
        %v3192 = vsub.f32 %v3087, %v3152
        %v3193 = vsub.f32 %v3091, %v3155
        %v3194 = vsub.f32 %v3093, %v3155
        %v3195 = vsub.f32 %v3095, %v3158
        %v3196 = vsub.f32 %v3097, %v3158
        %v3197 = vsub.f32 %v3101, %v3161
        %v3198 = vsub.f32 %v3103, %v3161
        %v3199 = vsub.f32 %v3105, %v3164
        %v3200 = vsub.f32 %v3107, %v3164
        %v3201 = vsub.f32 %v3111, %v3167
        %v3202 = vsub.f32 %v3113, %v3167
        %v3203 = vsub.f32 %v3115, %v3170
        %v3204 = vsub.f32 %v3117, %v3170
        %v3205 = vsub.f32 %v3121, %v3173
        %v3206 = vsub.f32 %v3123, %v3173
        %v3207 = vsub.f32 %v3125, %v3176
        %v3208 = vsub.f32 %v3127, %v3176
        %v3209 = vmul.f32 %v3177, 1.442695
        %v3210 = vpow.pop %v3209
        %v3211 = vmul.f32 %v3178, 1.442695
        %v3212 = vpow.pop %v3211
        %v3213 = vmul.f32 %v3179, 1.442695
        %v3214 = vpow.pop %v3213
        %v3215 = vmul.f32 %v3180, 1.442695
        %v3216 = vpow.pop %v3215
        %v3217 = vmul.f32 %v3181, 1.442695
        %v3218 = vpow.pop %v3217
        %v3219 = vmul.f32 %v3182, 1.442695
        %v3220 = vpow.pop %v3219
        %v3221 = vmul.f32 %v3183, 1.442695
        %v3222 = vpow.pop %v3221
        %v3223 = vmul.f32 %v3184, 1.442695
        %v3224 = vpow.pop %v3223
        %v3225 = vmul.f32 %v3185, 1.442695
        %v3226 = vpow.pop %v3225
        %v3227 = vmul.f32 %v3186, 1.442695
        %v3228 = vpow.pop %v3227
        %v3229 = vmul.f32 %v3187, 1.442695
        %v3230 = vpow.pop %v3229
        %v3231 = vmul.f32 %v3188, 1.442695
        %v3232 = vpow.pop %v3231
        %v3233 = vmul.f32 %v3189, 1.442695
        %v3234 = vpow.pop %v3233
        %v3235 = vmul.f32 %v3190, 1.442695
        %v3236 = vpow.pop %v3235
        %v3237 = vmul.f32 %v3191, 1.442695
        %v3238 = vpow.pop %v3237
        %v3239 = vmul.f32 %v3192, 1.442695
        %v3240 = vpow.pop %v3239
        %v3241 = vmul.f32 %v3193, 1.442695
        %v3242 = vpow.pop %v3241
        %v3243 = vmul.f32 %v3194, 1.442695
        %v3244 = vpow.pop %v3243
        %v3245 = vmul.f32 %v3195, 1.442695
        %v3246 = vpow.pop %v3245
        %v3247 = vmul.f32 %v3196, 1.442695
        %v3248 = vpow.pop %v3247
        %v3249 = vmul.f32 %v3197, 1.442695
        %v3250 = vpow.pop %v3249
        %v3251 = vmul.f32 %v3198, 1.442695
        %v3252 = vpow.pop %v3251
        %v3253 = vmul.f32 %v3199, 1.442695
        %v3254 = vpow.pop %v3253
        %v3255 = vmul.f32 %v3200, 1.442695
        %v3256 = vpow.pop %v3255
        %v3257 = vmul.f32 %v3201, 1.442695
        %v3258 = vpow.pop %v3257
        %v3259 = vmul.f32 %v3202, 1.442695
        %v3260 = vpow.pop %v3259
        %v3261 = vmul.f32 %v3203, 1.442695
        %v3262 = vpow.pop %v3261
        %v3263 = vmul.f32 %v3204, 1.442695
        %v3264 = vpow.pop %v3263
        %v3265 = vmul.f32 %v3205, 1.442695
        %v3266 = vpow.pop %v3265
        %v3267 = vmul.f32 %v3206, 1.442695
        %v3268 = vpow.pop %v3267
        %v3269 = vmul.f32 %v3207, 1.442695
        %v3270 = vpow.pop %v3269
        %v3271 = vmul.f32 %v3208, 1.442695
        %v3272 = vpow.pop %v3271
        %v3273 = vadd.f32 %v3210, %v3212
        %3274 = vadd.xlane.f32.xlu0 %v3273
        %v3275 = vpop.xlane.xlu0 %3274
        %v3276 = vadd.f32 %v3214, %v3216
        %3277 = vadd.xlane.f32.xlu0 %v3276
        %v3278 = vpop.xlane.xlu0 %3277
        %v3279 = vadd.f32 %v3218, %v3220
        %3280 = vadd.xlane.f32.xlu0 %v3279
        %v3281 = vpop.xlane.xlu0 %3280
        %v3282 = vadd.f32 %v3222, %v3224
        %3283 = vadd.xlane.f32.xlu0 %v3282
        %v3284 = vpop.xlane.xlu0 %3283
        %v3285 = vadd.f32 %v3226, %v3228
        %3286 = vadd.xlane.f32.xlu0 %v3285
        %v3287 = vpop.xlane.xlu0 %3286
        %v3288 = vadd.f32 %v3230, %v3232
        %3289 = vadd.xlane.f32.xlu0 %v3288
        %v3290 = vpop.xlane.xlu0 %3289
        %v3291 = vadd.f32 %v3234, %v3236
        %3292 = vadd.xlane.f32.xlu0 %v3291
        %v3293 = vpop.xlane.xlu0 %3292
        %v3294 = vadd.f32 %v3238, %v3240
        %3295 = vadd.xlane.f32.xlu0 %v3294
        %v3296 = vpop.xlane.xlu0 %3295
        %v3297 = vadd.f32 %v3242, %v3244
        %3298 = vadd.xlane.f32.xlu0 %v3297
        %v3299 = vpop.xlane.xlu0 %3298
        %v3300 = vadd.f32 %v3246, %v3248
        %3301 = vadd.xlane.f32.xlu0 %v3300
        %v3302 = vpop.xlane.xlu0 %3301
        %v3303 = vadd.f32 %v3250, %v3252
        %3304 = vadd.xlane.f32.xlu0 %v3303
        %v3305 = vpop.xlane.xlu0 %3304
        %v3306 = vadd.f32 %v3254, %v3256
        %3307 = vadd.xlane.f32.xlu0 %v3306
        %v3308 = vpop.xlane.xlu0 %3307
        %v3309 = vadd.f32 %v3258, %v3260
        %3310 = vadd.xlane.f32.xlu0 %v3309
        %v3311 = vpop.xlane.xlu0 %3310
        %v3312 = vadd.f32 %v3262, %v3264
        %3313 = vadd.xlane.f32.xlu0 %v3312
        %v3314 = vpop.xlane.xlu0 %3313
        %v3315 = vadd.f32 %v3266, %v3268
        %3316 = vadd.xlane.f32.xlu0 %v3315
        %v3317 = vpop.xlane.xlu0 %3316
        %v3318 = vadd.f32 %v3270, %v3272
        %3319 = vadd.xlane.f32.xlu0 %v3318
        %v3320 = vpop.xlane.xlu0 %3319
        %v3321 = vpack.c.bf16 %v3214, %v3210
        %v3322 = vpack.c.bf16 %v3216, %v3212
        %v3323 = vpack.c.bf16 %v3222, %v3218
        %v3324 = vpack.c.bf16 %v3224, %v3220
        %v3325 = vpack.c.bf16 %v3230, %v3226
        %v3326 = vpack.c.bf16 %v3232, %v3228
        %v3327 = vpack.c.bf16 %v3238, %v3234
        %v3328 = vpack.c.bf16 %v3240, %v3236
        %v3329 = vpack.c.bf16 %v3246, %v3242
        %v3330 = vpack.c.bf16 %v3248, %v3244
        %v3331 = vpack.c.bf16 %v3254, %v3250
        %v3332 = vpack.c.bf16 %v3256, %v3252
        %v3333 = vpack.c.bf16 %v3262, %v3258
        %v3334 = vpack.c.bf16 %v3264, %v3260
        %v3335 = vpack.c.bf16 %v3270, %v3266
        %v3336 = vpack.c.bf16 %v3272, %v3268
        %3353 = vrot.lane.b32.xlu0 %v2317, 64
        %v3354 = vpop.permute.xlu0 %3353
        %3355 = vrot.lane.b32.xlu0 %v2318, 64
        %v3356 = vpop.permute.xlu0 %3355
        %3357 = vrot.lane.b32.xlu0 %v2319, 64
        %v3358 = vpop.permute.xlu0 %3357
        %3359 = vrot.lane.b32.xlu0 %v2320, 64
        %v3360 = vpop.permute.xlu0 %3359
        %3361 = vrot.lane.b32.xlu0 %v2321, 64
        %v3362 = vpop.permute.xlu0 %3361
        %3363 = vrot.lane.b32.xlu0 %v2322, 64
        %v3364 = vpop.permute.xlu0 %3363
        %3365 = vrot.lane.b32.xlu0 %v2323, 64
        %v3366 = vpop.permute.xlu0 %3365
        %3367 = vrot.lane.b32.xlu0 %v2324, 64
        %v3368 = vpop.permute.xlu0 %3367
        %3369 = vrot.lane.b32.xlu0 %v2325, 64
        %v3370 = vpop.permute.xlu0 %3369
        %3371 = vrot.lane.b32.xlu0 %v2326, 64
        %v3372 = vpop.permute.xlu0 %3371
        %3373 = vrot.lane.b32.xlu0 %v2327, 64
        %v3374 = vpop.permute.xlu0 %3373
        %3375 = vrot.lane.b32.xlu0 %v2328, 64
        %v3376 = vpop.permute.xlu0 %3375
        %3377 = vrot.lane.b32.xlu0 %v2329, 64
        %v3378 = vpop.permute.xlu0 %3377
        %3379 = vrot.lane.b32.xlu0 %v2330, 64
        %v3380 = vpop.permute.xlu0 %3379
        %3381 = vrot.lane.b32.xlu0 %v2331, 64
        %v3382 = vpop.permute.xlu0 %3381
        %3383 = vrot.lane.b32.xlu0 %v2332, 64
        %v3384 = vpop.permute.xlu0 %3383
        %3401 = vmatprep.subr.bf16.mxu0 0
        %3402 = vmatpush1.bf16.msra.mxu0 %v3354
        %3403 = vmatprep.subr.bf16.mxu0 0
        %3404 = vmatpush1.bf16.msra.mxu0 %v3356
        %3405 = vmatprep.subr.bf16.mxu0 0
        %3406 = vmatpush1.bf16.msra.mxu0 %v3358
        %3407 = vmatprep.subr.bf16.mxu0 0
        %3408 = vmatpush1.bf16.msra.mxu0 %v3360
        %3409 = vmatprep.subr.bf16.mxu0 0
        %3410 = vmatpush1.bf16.msra.mxu0 %v3362
        %3411 = vmatprep.subr.bf16.mxu0 0
        %3412 = vmatpush1.bf16.msra.mxu0 %v3364
        %3413 = vmatprep.subr.bf16.mxu0 0
        %3414 = vmatpush1.bf16.msra.mxu0 %v3366
        %3415 = vmatprep.subr.bf16.mxu0 0
        %3416 = vmatpush1.bf16.msra.mxu0 %v3368
        %3417 = vmatprep.subr.bf16.mxu0 0
        %3418 = vmatpush1.bf16.msra.mxu0 %v3370
        %3419 = vmatprep.subr.bf16.mxu0 0
        %3420 = vmatpush1.bf16.msra.mxu0 %v3372
        %3421 = vmatprep.subr.bf16.mxu0 0
        %3422 = vmatpush1.bf16.msra.mxu0 %v3374
        %3423 = vmatprep.subr.bf16.mxu0 0
        %3424 = vmatpush1.bf16.msra.mxu0 %v3376
        %3425 = vmatprep.subr.bf16.mxu0 0
        %3426 = vmatpush1.bf16.msra.mxu0 %v3378
        %3427 = vmatprep.subr.bf16.mxu0 0
        %3428 = vmatpush1.bf16.msra.mxu0 %v3380
        %3429 = vmatprep.subr.bf16.mxu0 0
        %3430 = vmatpush1.bf16.msra.mxu0 %v3382
        %3431 = vmatprep.subr.bf16.mxu0 0
        %3432 = vmatpush1.bf16.msra.mxu0 %v3384
        %3433 = vmatprep.mubr.bf16.mxu0 %v3322
        %3434 = vmatmul.mubr.bf16.gmra.mrb[0].mxu0 %v3321
        %v3435 = vpop.f32.mrb[0].mxu0
        %v3436 = vadd.f32 0.0, %v3435
        %v3437 = vpop.f32.mrb[0].mxu0
        %v3438 = vpop.f32.mrb[0].mxu0
        %v3439 = vadd.f32 0.0, %v3438
        %v3440 = vpop.f32.mrb[0].mxu0
        %3441 = vmatprep.mubr.bf16.mxu0 %v3324
        %3442 = vmatmul.mubr.bf16.gmra.mrb[0].mxu0 %v3323
        %v3443 = vpop.f32.mrb[0].mxu0
        %v3444 = vadd.f32 0.0, %v3443
        %v3445 = vpop.f32.mrb[0].mxu0
        %v3446 = vpop.f32.mrb[0].mxu0
        %v3447 = vadd.f32 0.0, %v3446
        %v3448 = vpop.f32.mrb[0].mxu0
        %3449 = vmatprep.mubr.bf16.mxu0 %v3326
        %3450 = vmatmul.mubr.bf16.gmra.mrb[0].mxu0 %v3325
        %v3451 = vpop.f32.mrb[0].mxu0
        %v3452 = vadd.f32 0.0, %v3451
        %v3453 = vpop.f32.mrb[0].mxu0
        %v3454 = vpop.f32.mrb[0].mxu0
        %v3455 = vadd.f32 0.0, %v3454
        %v3456 = vpop.f32.mrb[0].mxu0
        %3457 = vmatprep.mubr.bf16.mxu0 %v3328
        %3458 = vmatmul.mubr.bf16.gmra.mrb[0].mxu0 %v3327
        %v3459 = vpop.f32.mrb[0].mxu0
        %v3460 = vadd.f32 0.0, %v3459
        %v3461 = vpop.f32.mrb[0].mxu0
        %v3462 = vpop.f32.mrb[0].mxu0
        %v3463 = vadd.f32 0.0, %v3462
        %v3464 = vpop.f32.mrb[0].mxu0
        %3465 = vmatprep.mubr.bf16.mxu0 %v3330
        %3466 = vmatmul.mubr.bf16.gmra.mrb[0].mxu0 %v3329
        %v3467 = vpop.f32.mrb[0].mxu0
        %v3468 = vadd.f32 0.0, %v3467
        %v3469 = vpop.f32.mrb[0].mxu0
        %v3470 = vpop.f32.mrb[0].mxu0
        %v3471 = vadd.f32 0.0, %v3470
        %v3472 = vpop.f32.mrb[0].mxu0
        %3473 = vmatprep.mubr.bf16.mxu0 %v3332
        %3474 = vmatmul.mubr.bf16.gmra.mrb[0].mxu0 %v3331
        %v3475 = vpop.f32.mrb[0].mxu0
        %v3476 = vadd.f32 0.0, %v3475
        %v3477 = vpop.f32.mrb[0].mxu0
        %v3478 = vpop.f32.mrb[0].mxu0
        %v3479 = vadd.f32 0.0, %v3478
        %v3480 = vpop.f32.mrb[0].mxu0
        %3481 = vmatprep.mubr.bf16.mxu0 %v3334
        %3482 = vmatmul.mubr.bf16.gmra.mrb[0].mxu0 %v3333
        %v3483 = vpop.f32.mrb[0].mxu0
        %v3484 = vadd.f32 0.0, %v3483
        %v3485 = vpop.f32.mrb[0].mxu0
        %v3486 = vpop.f32.mrb[0].mxu0
        %v3487 = vadd.f32 0.0, %v3486
        %v3488 = vpop.f32.mrb[0].mxu0
        %3489 = vmatprep.mubr.bf16.mxu0 %v3336
        %3490 = vmatmul.mubr.bf16.gmra.mrb[0].mxu0 %v3335
        %v3491 = vpop.f32.mrb[0].mxu0
        %v3492 = vadd.f32 0.0, %v3491
        %v3493 = vpop.f32.mrb[0].mxu0
        %v3494 = vpop.f32.mrb[0].mxu0
        %v3495 = vadd.f32 0.0, %v3494
        %v3496 = vpop.f32.mrb[0].mxu0
        %3497 = vdwg.mxu0
        %v3498 = vrcp.pop %v3275
        %v3499 = vrcp.pop %v3278
        %v3500 = vrcp.pop %v3281
        %v3501 = vrcp.pop %v3284
        %v3502 = vrcp.pop %v3287
        %v3503 = vrcp.pop %v3290
        %v3504 = vrcp.pop %v3293
        %v3505 = vrcp.pop %v3296
        %v3506 = vrcp.pop %v3299
        %v3507 = vrcp.pop %v3302
        %v3508 = vrcp.pop %v3305
        %v3509 = vrcp.pop %v3308
        %v3510 = vrcp.pop %v3311
        %v3511 = vrcp.pop %v3314
        %v3512 = vrcp.pop %v3317
        %v3513 = vrcp.pop %v3320
        %v3514 = vmul.f32 %v3436, %v3498
        %v3515 = vmul.f32 %v3439, %v3499
        %v3516 = vmul.f32 %v3444, %v3500
        %v3517 = vmul.f32 %v3447, %v3501
        %v3518 = vmul.f32 %v3452, %v3502
        %v3519 = vmul.f32 %v3455, %v3503
        %v3520 = vmul.f32 %v3460, %v3504
        %v3521 = vmul.f32 %v3463, %v3505
        %v3522 = vmul.f32 %v3468, %v3506
        %v3523 = vmul.f32 %v3471, %v3507
        %v3524 = vmul.f32 %v3476, %v3508
        %v3525 = vmul.f32 %v3479, %v3509
        %v3526 = vmul.f32 %v3484, %v3510
        %v3527 = vmul.f32 %v3487, %v3511
        %v3528 = vmul.f32 %v3492, %v3512
        %v3529 = vmul.f32 %v3495, %v3513
        %v3530 = vpack.c.bf16 %v3515, %v3514
        %v3531 = vpack.c.bf16 %v3517, %v3516
        %v3532 = vpack.c.bf16 %v3519, %v3518
        %v3533 = vpack.c.bf16 %v3521, %v3520
        %v3534 = vpack.c.bf16 %v3523, %v3522
        %v3535 = vpack.c.bf16 %v3525, %v3524
        %v3536 = vpack.c.bf16 %v3527, %v3526
        %v3537 = vpack.c.bf16 %v3529, %v3528
        %v3538 = vld [vmem:[#allocation15 + $0x40] sm:$0xff]
        %v3539 = vld [vmem:[#allocation15 + $0x48] sm:$0xff]
        %v3540 = vld [vmem:[#allocation15 + $0x50] sm:$0xff]
        %v3541 = vld [vmem:[#allocation15 + $0x58] sm:$0xff]
        %v3542 = vld [vmem:[#allocation15 + $0x60] sm:$0xff]
        %v3543 = vld [vmem:[#allocation15 + $0x68] sm:$0xff]
        %v3544 = vld [vmem:[#allocation15 + $0x70] sm:$0xff]
        %v3545 = vld [vmem:[#allocation15 + $0x78] sm:$0xff]
        %v3554 = vunpack.c.l.b16 %v3538
        %v3555 = vunpack.c.h.b16 %v3538
        %v3556 = vunpack.c.l.b16 %v3539
        %v3557 = vunpack.c.h.b16 %v3539
        %v3558 = vunpack.c.l.b16 %v3540
        %v3559 = vunpack.c.h.b16 %v3540
        %v3560 = vunpack.c.l.b16 %v3541
        %v3561 = vunpack.c.h.b16 %v3541
        %v3562 = vunpack.c.l.b16 %v3542
        %v3563 = vunpack.c.h.b16 %v3542
        %v3564 = vunpack.c.l.b16 %v3543
        %v3565 = vunpack.c.h.b16 %v3543
        %v3566 = vunpack.c.l.b16 %v3544
        %v3567 = vunpack.c.h.b16 %v3544
        %v3568 = vunpack.c.l.b16 %v3545
        %v3569 = vunpack.c.h.b16 %v3545
        %v3570 = vpack.c.b16 %v3556, %v3554
        %v3571 = vpack.c.b16 %v3557, %v3555
        %v3572 = vpack.c.b16 %v3560, %v3558
        %v3573 = vpack.c.b16 %v3561, %v3559
        %v3574 = vpack.c.b16 %v3564, %v3562
        %v3575 = vpack.c.b16 %v3565, %v3563
        %v3576 = vpack.c.b16 %v3568, %v3566
        %v3577 = vpack.c.b16 %v3569, %v3567
        %v3587 = vsel %vm2333, %v3530, 0
        %v3590 = vsel %vm2333, %v3531, 0
        %v3593 = vsel %vm2333, %v3532, 0
        %v3596 = vsel %vm2333, %v3533, 0
        %v3599 = vsel %vm2333, %v3534, 0
        %v3602 = vsel %vm2333, %v3535, 0
        %v3605 = vsel %vm2333, %v3536, 0
        %v3608 = vsel %vm2333, %v3537, 0
        %3610 = vmatprep.subr.bf16.mxu0 %v3571
        %3611 = vmatpush1.bf16.msra.mxu0 %v3570
        %3612 = vmatprep.subr.bf16.mxu0 %v3573
        %3613 = vmatpush1.bf16.msra.mxu0 %v3572
        %3614 = vmatprep.subr.bf16.mxu0 %v3575
        %3615 = vmatpush1.bf16.msra.mxu0 %v3574
        %3616 = vmatprep.subr.bf16.mxu0 %v3577
        %3617 = vmatpush1.bf16.msra.mxu0 %v3576
        %3618 = vmatprep.subr.bf16.mxu0 0
        %3619 = vmatpush1.bf16.msra.mxu0 0
        %3620 = vmatprep.subr.bf16.mxu0 0
        %3621 = vmatpush1.bf16.msra.mxu0 0
        %3622 = vmatprep.subr.bf16.mxu0 0
        %3623 = vmatpush1.bf16.msra.mxu0 0
        %3624 = vmatprep.subr.bf16.mxu0 0
        %3625 = vmatpush1.bf16.msra.mxu0 0
        %3626 = vmatprep.subr.bf16.mxu0 0
        %3627 = vmatpush1.bf16.msra.mxu0 0
        %3628 = vmatprep.subr.bf16.mxu0 0
        %3629 = vmatpush1.bf16.msra.mxu0 0
        %3630 = vmatprep.subr.bf16.mxu0 0
        %3631 = vmatpush1.bf16.msra.mxu0 0
        %3632 = vmatprep.subr.bf16.mxu0 0
        %3633 = vmatpush1.bf16.msra.mxu0 0
        %3634 = vmatprep.subr.bf16.mxu0 0
        %3635 = vmatpush1.bf16.msra.mxu0 0
        %3636 = vmatprep.subr.bf16.mxu0 0
        %3637 = vmatpush1.bf16.msra.mxu0 0
        %3638 = vmatprep.subr.bf16.mxu0 0
        %3639 = vmatpush1.bf16.msra.mxu0 0
        %3640 = vmatprep.subr.bf16.mxu0 0
        %3641 = vmatpush1.bf16.msra.mxu0 0
        %3642 = vmatprep.mubr.bf16.mxu0 0
        %3643 = vmatmul.mubr.bf16.gmra.mrb[0].mxu0 %v3587
        %v3644 = vpop.f32.mrb[0].mxu0
        %v3645 = vadd.f32 0.0, %v3644
        %v3646 = vpop.f32.mrb[0].mxu0
        %v3647 = vadd.f32 0.0, %v3646
        %v3648 = vpop.f32.mrb[0].mxu0
        %v3649 = vadd.f32 0.0, %v3648
        %v3650 = vpop.f32.mrb[0].mxu0
        %v3651 = vadd.f32 0.0, %v3650
        %3652 = vmatprep.mubr.bf16.mxu0 0
        %3653 = vmatmul.mubr.bf16.gmra.mrb[0].mxu0 %v3590
        %v3654 = vpop.f32.mrb[0].mxu0
        %v3655 = vadd.f32 0.0, %v3654
        %v3656 = vpop.f32.mrb[0].mxu0
        %v3657 = vadd.f32 0.0, %v3656
        %v3658 = vpop.f32.mrb[0].mxu0
        %v3659 = vadd.f32 0.0, %v3658
        %v3660 = vpop.f32.mrb[0].mxu0
        %v3661 = vadd.f32 0.0, %v3660
        %3662 = vmatprep.mubr.bf16.mxu0 0
        %3663 = vmatmul.mubr.bf16.gmra.mrb[0].mxu0 %v3593
        %v3664 = vpop.f32.mrb[0].mxu0
        %v3665 = vadd.f32 0.0, %v3664
        %v3666 = vpop.f32.mrb[0].mxu0
        %v3667 = vadd.f32 0.0, %v3666
        %v3668 = vpop.f32.mrb[0].mxu0
        %v3669 = vadd.f32 0.0, %v3668
        %v3670 = vpop.f32.mrb[0].mxu0
        %v3671 = vadd.f32 0.0, %v3670
        %3672 = vmatprep.mubr.bf16.mxu0 0
        %3673 = vmatmul.mubr.bf16.gmra.mrb[0].mxu0 %v3596
        %v3674 = vpop.f32.mrb[0].mxu0
        %v3675 = vadd.f32 0.0, %v3674
        %v3676 = vpop.f32.mrb[0].mxu0
        %v3677 = vadd.f32 0.0, %v3676
        %v3678 = vpop.f32.mrb[0].mxu0
        %v3679 = vadd.f32 0.0, %v3678
        %v3680 = vpop.f32.mrb[0].mxu0
        %v3681 = vadd.f32 0.0, %v3680
        %3682 = vmatprep.mubr.bf16.mxu0 0
        %3683 = vmatmul.mubr.bf16.gmra.mrb[0].mxu0 %v3599
        %v3684 = vpop.f32.mrb[0].mxu0
        %v3685 = vadd.f32 0.0, %v3684
        %v3686 = vpop.f32.mrb[0].mxu0
        %v3687 = vadd.f32 0.0, %v3686
        %v3688 = vpop.f32.mrb[0].mxu0
        %v3689 = vadd.f32 0.0, %v3688
        %v3690 = vpop.f32.mrb[0].mxu0
        %v3691 = vadd.f32 0.0, %v3690
        %3692 = vmatprep.mubr.bf16.mxu0 0
        %3693 = vmatmul.mubr.bf16.gmra.mrb[0].mxu0 %v3602
        %v3694 = vpop.f32.mrb[0].mxu0
        %v3695 = vadd.f32 0.0, %v3694
        %v3696 = vpop.f32.mrb[0].mxu0
        %v3697 = vadd.f32 0.0, %v3696
        %v3698 = vpop.f32.mrb[0].mxu0
        %v3699 = vadd.f32 0.0, %v3698
        %v3700 = vpop.f32.mrb[0].mxu0
        %v3701 = vadd.f32 0.0, %v3700
        %3702 = vmatprep.mubr.bf16.mxu0 0
        %3703 = vmatmul.mubr.bf16.gmra.mrb[0].mxu0 %v3605
        %v3704 = vpop.f32.mrb[0].mxu0
        %v3705 = vadd.f32 0.0, %v3704
        %v3706 = vpop.f32.mrb[0].mxu0
        %v3707 = vadd.f32 0.0, %v3706
        %v3708 = vpop.f32.mrb[0].mxu0
        %v3709 = vadd.f32 0.0, %v3708
        %v3710 = vpop.f32.mrb[0].mxu0
        %v3711 = vadd.f32 0.0, %v3710
        %3712 = vmatprep.mubr.bf16.mxu0 0
        %3713 = vmatmul.mubr.bf16.gmra.mrb[0].mxu0 %v3608
        %v3714 = vpop.f32.mrb[0].mxu0
        %v3715 = vadd.f32 0.0, %v3714
        %v3716 = vpop.f32.mrb[0].mxu0
        %v3717 = vadd.f32 0.0, %v3716
        %v3718 = vpop.f32.mrb[0].mxu0
        %v3719 = vadd.f32 0.0, %v3718
        %v3720 = vpop.f32.mrb[0].mxu0
        %v3721 = vadd.f32 0.0, %v3720
        %3722 = vdwg.mxu0
        %v3731 = vunpack.c.l.b16 %v2864
        %v3732 = vunpack.c.h.b16 %v2864
        %v3733 = vunpack.c.l.b16 %v2865
        %v3734 = vunpack.c.h.b16 %v2865
        %v3735 = vunpack.c.l.b16 %v2866
        %v3736 = vunpack.c.h.b16 %v2866
        %v3737 = vunpack.c.l.b16 %v2867
        %v3738 = vunpack.c.h.b16 %v2867
        %v3739 = vunpack.c.l.b16 %v2868
        %v3740 = vunpack.c.h.b16 %v2868
        %v3741 = vunpack.c.l.b16 %v2869
        %v3742 = vunpack.c.h.b16 %v2869
        %v3743 = vunpack.c.l.b16 %v2870
        %v3744 = vunpack.c.h.b16 %v2870
        %v3745 = vunpack.c.l.b16 %v2871
        %v3746 = vunpack.c.h.b16 %v2871
        %v3747 = vpack.c.b16 %v3733, %v3731
        %v3748 = vpack.c.b16 %v3734, %v3732
        %v3749 = vpack.c.b16 %v3737, %v3735
        %v3750 = vpack.c.b16 %v3738, %v3736
        %v3751 = vpack.c.b16 %v3741, %v3739
        %v3752 = vpack.c.b16 %v3742, %v3740
        %v3753 = vpack.c.b16 %v3745, %v3743
        %v3754 = vpack.c.b16 %v3746, %v3744
        %v3764 = vsel %vm2333, %v2856, 0
        %v3767 = vsel %vm2333, %v2857, 0
        %v3770 = vsel %vm2333, %v2858, 0
        %v3773 = vsel %vm2333, %v2859, 0
        %v3776 = vsel %vm2333, %v2860, 0
        %v3779 = vsel %vm2333, %v2861, 0
        %v3782 = vsel %vm2333, %v2862, 0
        %v3785 = vsel %vm2333, %v2863, 0
        %3787 = vmatprep.subr.bf16.mxu0 %v3748
        %3788 = vmatpush1.bf16.msra.mxu0 %v3747
        %3789 = vmatprep.subr.bf16.mxu0 %v3750
        %3790 = vmatpush1.bf16.msra.mxu0 %v3749
        %3791 = vmatprep.subr.bf16.mxu0 %v3752
        %3792 = vmatpush1.bf16.msra.mxu0 %v3751
        %3793 = vmatprep.subr.bf16.mxu0 %v3754
        %3794 = vmatpush1.bf16.msra.mxu0 %v3753
        %3795 = vmatprep.subr.bf16.mxu0 0
        %3796 = vmatpush1.bf16.msra.mxu0 0
        %3797 = vmatprep.subr.bf16.mxu0 0
        %3798 = vmatpush1.bf16.msra.mxu0 0
        %3799 = vmatprep.subr.bf16.mxu0 0
        %3800 = vmatpush1.bf16.msra.mxu0 0
        %3801 = vmatprep.subr.bf16.mxu0 0
        %3802 = vmatpush1.bf16.msra.mxu0 0
        %3803 = vmatprep.subr.bf16.mxu0 0
        %3804 = vmatpush1.bf16.msra.mxu0 0
        %3805 = vmatprep.subr.bf16.mxu0 0
        %3806 = vmatpush1.bf16.msra.mxu0 0
        %3807 = vmatprep.subr.bf16.mxu0 0
        %3808 = vmatpush1.bf16.msra.mxu0 0
        %3809 = vmatprep.subr.bf16.mxu0 0
        %3810 = vmatpush1.bf16.msra.mxu0 0
        %3811 = vmatprep.subr.bf16.mxu0 0
        %3812 = vmatpush1.bf16.msra.mxu0 0
        %3813 = vmatprep.subr.bf16.mxu0 0
        %3814 = vmatpush1.bf16.msra.mxu0 0
        %3815 = vmatprep.subr.bf16.mxu0 0
        %3816 = vmatpush1.bf16.msra.mxu0 0
        %3817 = vmatprep.subr.bf16.mxu0 0
        %3818 = vmatpush1.bf16.msra.mxu0 0
        %3819 = vmatprep.mubr.bf16.mxu0 0
        %3820 = vmatmul.mubr.bf16.gmra.mrb[0].mxu0 %v3764
        %v3821 = vpop.f32.mrb[0].mxu0
        %v3822 = vadd.f32 %v3645, %v3821
        %v3823 = vpop.f32.mrb[0].mxu0
        %v3824 = vadd.f32 %v3647, %v3823
        %v3825 = vpop.f32.mrb[0].mxu0
        %v3826 = vadd.f32 %v3649, %v3825
        %v3827 = vpop.f32.mrb[0].mxu0
        %v3828 = vadd.f32 %v3651, %v3827
        %3829 = vmatprep.mubr.bf16.mxu0 0
        %3830 = vmatmul.mubr.bf16.gmra.mrb[0].mxu0 %v3767
        %v3831 = vpop.f32.mrb[0].mxu0
        %v3832 = vadd.f32 %v3655, %v3831
        %v3833 = vpop.f32.mrb[0].mxu0
        %v3834 = vadd.f32 %v3657, %v3833
        %v3835 = vpop.f32.mrb[0].mxu0
        %v3836 = vadd.f32 %v3659, %v3835
        %v3837 = vpop.f32.mrb[0].mxu0
        %v3838 = vadd.f32 %v3661, %v3837
        %3839 = vmatprep.mubr.bf16.mxu0 0
        %3840 = vmatmul.mubr.bf16.gmra.mrb[0].mxu0 %v3770
        %v3841 = vpop.f32.mrb[0].mxu0
        %v3842 = vadd.f32 %v3665, %v3841
        %v3843 = vpop.f32.mrb[0].mxu0
        %v3844 = vadd.f32 %v3667, %v3843
        %v3845 = vpop.f32.mrb[0].mxu0
        %v3846 = vadd.f32 %v3669, %v3845
        %v3847 = vpop.f32.mrb[0].mxu0
        %v3848 = vadd.f32 %v3671, %v3847
        %3849 = vmatprep.mubr.bf16.mxu0 0
        %3850 = vmatmul.mubr.bf16.gmra.mrb[0].mxu0 %v3773
        %v3851 = vpop.f32.mrb[0].mxu0
        %v3852 = vadd.f32 %v3675, %v3851
        %v3853 = vpop.f32.mrb[0].mxu0
        %v3854 = vadd.f32 %v3677, %v3853
        %v3855 = vpop.f32.mrb[0].mxu0
        %v3856 = vadd.f32 %v3679, %v3855
        %v3857 = vpop.f32.mrb[0].mxu0
        %v3858 = vadd.f32 %v3681, %v3857
        %3859 = vmatprep.mubr.bf16.mxu0 0
        %3860 = vmatmul.mubr.bf16.gmra.mrb[0].mxu0 %v3776
        %v3861 = vpop.f32.mrb[0].mxu0
        %v3862 = vadd.f32 %v3685, %v3861
        %v3863 = vpop.f32.mrb[0].mxu0
        %v3864 = vadd.f32 %v3687, %v3863
        %v3865 = vpop.f32.mrb[0].mxu0
        %v3866 = vadd.f32 %v3689, %v3865
        %v3867 = vpop.f32.mrb[0].mxu0
        %v3868 = vadd.f32 %v3691, %v3867
        %3869 = vmatprep.mubr.bf16.mxu0 0
        %3870 = vmatmul.mubr.bf16.gmra.mrb[0].mxu0 %v3779
        %v3871 = vpop.f32.mrb[0].mxu0
        %v3872 = vadd.f32 %v3695, %v3871
        %v3873 = vpop.f32.mrb[0].mxu0
        %v3874 = vadd.f32 %v3697, %v3873
        %v3875 = vpop.f32.mrb[0].mxu0
        %v3876 = vadd.f32 %v3699, %v3875
        %v3877 = vpop.f32.mrb[0].mxu0
        %v3878 = vadd.f32 %v3701, %v3877
        %3879 = vmatprep.mubr.bf16.mxu0 0
        %3880 = vmatmul.mubr.bf16.gmra.mrb[0].mxu0 %v3782
        %v3881 = vpop.f32.mrb[0].mxu0
        %v3882 = vadd.f32 %v3705, %v3881
        %v3883 = vpop.f32.mrb[0].mxu0
        %v3884 = vadd.f32 %v3707, %v3883
        %v3885 = vpop.f32.mrb[0].mxu0
        %v3886 = vadd.f32 %v3709, %v3885
        %v3887 = vpop.f32.mrb[0].mxu0
        %v3888 = vadd.f32 %v3711, %v3887
        %3889 = vmatprep.mubr.bf16.mxu0 0
        %3890 = vmatmul.mubr.bf16.gmra.mrb[0].mxu0 %v3785
        %v3891 = vpop.f32.mrb[0].mxu0
        %v3892 = vadd.f32 %v3715, %v3891
        %v3893 = vpop.f32.mrb[0].mxu0
        %v3894 = vadd.f32 %v3717, %v3893
        %v3895 = vpop.f32.mrb[0].mxu0
        %v3896 = vadd.f32 %v3719, %v3895
        %v3897 = vpop.f32.mrb[0].mxu0
        %v3898 = vadd.f32 %v3721, %v3897
        %3899 = vdwg.mxu0
        %v3900 = vld [vmem:[#allocation2 + $0x8] sm:$0xff]
        %v3901 = vld [vmem:[#allocation2 + $0x18] sm:$0xff]
        %v3902 = vld [vmem:[#allocation2 + $0x28] sm:$0xff]
        %v3903 = vld [vmem:[#allocation2 + $0x38] sm:$0xff]
        %v3904 = vld [vmem:[#allocation2 + $0x48] sm:$0xff]
        %v3905 = vld [vmem:[#allocation2 + $0x58] sm:$0xff]
        %v3906 = vld [vmem:[#allocation2 + $0x68] sm:$0xff]
        %v3907 = vld [vmem:[#allocation2 + $0x78] sm:$0xff]
        %v3908 = vld [vmem:[#allocation2 + $0x88] sm:$0xff]
        %v3909 = vld [vmem:[#allocation2 + $0x98] sm:$0xff]
        %v3910 = vld [vmem:[#allocation2 + $0xa8] sm:$0xff]
        %v3911 = vld [vmem:[#allocation2 + $0xb8] sm:$0xff]
        %v3912 = vld [vmem:[#allocation2 + $0xc8] sm:$0xff]
        %v3913 = vld [vmem:[#allocation2 + $0xd8] sm:$0xff]
        %v3914 = vld [vmem:[#allocation2 + $0xe8] sm:$0xff]
        %v3915 = vld [vmem:[#allocation2 + $0xf8] sm:$0xff]
        %v3916 = vld [vmem:[#allocation3 + $0x8] sm:$0xff]
        %v3917 = vld [vmem:[#allocation3 + $0x18] sm:$0xff]
        %v3918 = vld [vmem:[#allocation3 + $0x28] sm:$0xff]
        %v3919 = vld [vmem:[#allocation3 + $0x38] sm:$0xff]
        %v3920 = vld [vmem:[#allocation3 + $0x48] sm:$0xff]
        %v3921 = vld [vmem:[#allocation3 + $0x58] sm:$0xff]
        %v3922 = vld [vmem:[#allocation3 + $0x68] sm:$0xff]
        %v3923 = vld [vmem:[#allocation3 + $0x78] sm:$0xff]
        %v3924 = vld [vmem:[#allocation3 + $0x88] sm:$0xff]
        %v3925 = vld [vmem:[#allocation3 + $0x98] sm:$0xff]
        %v3926 = vld [vmem:[#allocation3 + $0xa8] sm:$0xff]
        %v3927 = vld [vmem:[#allocation3 + $0xb8] sm:$0xff]
        %v3928 = vld [vmem:[#allocation3 + $0xc8] sm:$0xff]
        %v3929 = vld [vmem:[#allocation3 + $0xd8] sm:$0xff]
        %v3930 = vld [vmem:[#allocation3 + $0xe8] sm:$0xff]
        %v3931 = vld [vmem:[#allocation3 + $0xf8] sm:$0xff]
        %v3933 = vsel %vm2333, %v2286, 0
        %v3936 = vsel %vm2333, %v2288, 0
        %v3939 = vsel %vm2333, %v2290, 0
        %v3942 = vsel %vm2333, %v2292, 0
        %v3945 = vsel %vm2333, %v2294, 0
        %v3948 = vsel %vm2333, %v2296, 0
        %v3951 = vsel %vm2333, %v2298, 0
        %v3954 = vsel %vm2333, %v2300, 0
        %v3957 = vsel %vm2333, %v3900, 0
        %v3960 = vsel %vm2333, %v3901, 0
        %v3963 = vsel %vm2333, %v3902, 0
        %v3966 = vsel %vm2333, %v3903, 0
        %v3969 = vsel %vm2333, %v3904, 0
        %v3972 = vsel %vm2333, %v3905, 0
        %v3975 = vsel %vm2333, %v3906, 0
        %v3978 = vsel %vm2333, %v3907, 0
        %v3981 = vsel %vm2333, %v3908, 0
        %v3984 = vsel %vm2333, %v3909, 0
        %v3987 = vsel %vm2333, %v3910, 0
        %v3990 = vsel %vm2333, %v3911, 0
        %v3993 = vsel %vm2333, %v3912, 0
        %v3996 = vsel %vm2333, %v3913, 0
        %v3999 = vsel %vm2333, %v3914, 0
        %v4002 = vsel %vm2333, %v3915, 0
        %4004 = vmatprep.subr.bf16.mxu0 0
        %4005 = vmatpush1.bf16.xpose.msra.mxu0 %v3957
        %4006 = vmatprep.subr.bf16.mxu0 0
        %4007 = vmatpush1.bf16.xpose.msra.mxu0 %v3960
        %4008 = vmatprep.subr.bf16.mxu0 0
        %4009 = vmatpush1.bf16.xpose.msra.mxu0 %v3963
        %4010 = vmatprep.subr.bf16.mxu0 0
        %4011 = vmatpush1.bf16.xpose.msra.mxu0 %v3966
        %4012 = vmatprep.subr.bf16.mxu0 0
        %4013 = vmatpush1.bf16.xpose.msra.mxu0 %v3969
        %4014 = vmatprep.subr.bf16.mxu0 0
        %4015 = vmatpush1.bf16.xpose.msra.mxu0 %v3972
        %4016 = vmatprep.subr.bf16.mxu0 0
        %4017 = vmatpush1.bf16.xpose.msra.mxu0 %v3975
        %4018 = vmatprep.subr.bf16.mxu0 0
        %4019 = vmatpush1.bf16.xpose.msra.mxu0 %v3978
        %4020 = vmatprep.subr.bf16.mxu0 0
        %4021 = vmatpush1.bf16.xpose.msra.mxu0 %v3981
        %4022 = vmatprep.subr.bf16.mxu0 0
        %4023 = vmatpush1.bf16.xpose.msra.mxu0 %v3984
        %4024 = vmatprep.subr.bf16.mxu0 0
        %4025 = vmatpush1.bf16.xpose.msra.mxu0 %v3987
        %4026 = vmatprep.subr.bf16.mxu0 0
        %4027 = vmatpush1.bf16.xpose.msra.mxu0 %v3990
        %4028 = vmatprep.subr.bf16.mxu0 0
        %4029 = vmatpush1.bf16.xpose.msra.mxu0 %v3993
        %4030 = vmatprep.subr.bf16.mxu0 0
        %4031 = vmatpush1.bf16.xpose.msra.mxu0 %v3996
        %4032 = vmatprep.subr.bf16.mxu0 0
        %4033 = vmatpush1.bf16.xpose.msra.mxu0 %v3999
        %4034 = vmatprep.subr.bf16.mxu0 0
        %4035 = vmatpush1.bf16.xpose.msra.mxu0 %v4002
        %4036 = vmatprep.mubr.bf16.mxu0 0
        %4037 = vmatmul.mubr.bf16.gmra.mrb[0].mxu0 %v3933
        %v4038 = vpop.f32.mrb[0].mxu0
        %v4039 = vadd.f32 0.0, %v4038
        %v4040 = vpop.f32.mrb[0].mxu0
        %v4041 = vadd.f32 0.0, %v4040
        %v4042 = vpop.f32.mrb[0].mxu0
        %v4043 = vadd.f32 0.0, %v4042
        %v4044 = vpop.f32.mrb[0].mxu0
        %v4045 = vadd.f32 0.0, %v4044
        %4046 = vmatprep.mubr.bf16.mxu0 0
        %4047 = vmatmul.mubr.bf16.gmra.mrb[0].mxu0 %v3936
        %v4048 = vpop.f32.mrb[0].mxu0
        %v4049 = vadd.f32 0.0, %v4048
        %v4050 = vpop.f32.mrb[0].mxu0
        %v4051 = vadd.f32 0.0, %v4050
        %v4052 = vpop.f32.mrb[0].mxu0
        %v4053 = vadd.f32 0.0, %v4052
        %v4054 = vpop.f32.mrb[0].mxu0
        %v4055 = vadd.f32 0.0, %v4054
        %4056 = vmatprep.mubr.bf16.mxu0 0
        %4057 = vmatmul.mubr.bf16.gmra.mrb[0].mxu0 %v3939
        %v4058 = vpop.f32.mrb[0].mxu0
        %v4059 = vadd.f32 0.0, %v4058
        %v4060 = vpop.f32.mrb[0].mxu0
        %v4061 = vadd.f32 0.0, %v4060
        %v4062 = vpop.f32.mrb[0].mxu0
        %v4063 = vadd.f32 0.0, %v4062
        %v4064 = vpop.f32.mrb[0].mxu0
        %v4065 = vadd.f32 0.0, %v4064
        %4066 = vmatprep.mubr.bf16.mxu0 0
        %4067 = vmatmul.mubr.bf16.gmra.mrb[0].mxu0 %v3942
        %v4068 = vpop.f32.mrb[0].mxu0
        %v4069 = vadd.f32 0.0, %v4068
        %v4070 = vpop.f32.mrb[0].mxu0
        %v4071 = vadd.f32 0.0, %v4070
        %v4072 = vpop.f32.mrb[0].mxu0
        %v4073 = vadd.f32 0.0, %v4072
        %v4074 = vpop.f32.mrb[0].mxu0
        %v4075 = vadd.f32 0.0, %v4074
        %4076 = vmatprep.mubr.bf16.mxu0 0
        %4077 = vmatmul.mubr.bf16.gmra.mrb[0].mxu0 %v3945
        %v4078 = vpop.f32.mrb[0].mxu0
        %v4079 = vadd.f32 0.0, %v4078
        %v4080 = vpop.f32.mrb[0].mxu0
        %v4081 = vadd.f32 0.0, %v4080
        %v4082 = vpop.f32.mrb[0].mxu0
        %v4083 = vadd.f32 0.0, %v4082
        %v4084 = vpop.f32.mrb[0].mxu0
        %v4085 = vadd.f32 0.0, %v4084
        %4086 = vmatprep.mubr.bf16.mxu0 0
        %4087 = vmatmul.mubr.bf16.gmra.mrb[0].mxu0 %v3948
        %v4088 = vpop.f32.mrb[0].mxu0
        %v4089 = vadd.f32 0.0, %v4088
        %v4090 = vpop.f32.mrb[0].mxu0
        %v4091 = vadd.f32 0.0, %v4090
        %v4092 = vpop.f32.mrb[0].mxu0
        %v4093 = vadd.f32 0.0, %v4092
        %v4094 = vpop.f32.mrb[0].mxu0
        %v4095 = vadd.f32 0.0, %v4094
        %4096 = vmatprep.mubr.bf16.mxu0 0
        %4097 = vmatmul.mubr.bf16.gmra.mrb[0].mxu0 %v3951
        %v4098 = vpop.f32.mrb[0].mxu0
        %v4099 = vadd.f32 0.0, %v4098
        %v4100 = vpop.f32.mrb[0].mxu0
        %v4101 = vadd.f32 0.0, %v4100
        %v4102 = vpop.f32.mrb[0].mxu0
        %v4103 = vadd.f32 0.0, %v4102
        %v4104 = vpop.f32.mrb[0].mxu0
        %v4105 = vadd.f32 0.0, %v4104
        %4106 = vmatprep.mubr.bf16.mxu0 0
        %4107 = vmatmul.mubr.bf16.gmra.mrb[0].mxu0 %v3954
        %v4108 = vpop.f32.mrb[0].mxu0
        %v4109 = vadd.f32 0.0, %v4108
        %v4110 = vpop.f32.mrb[0].mxu0
        %v4111 = vadd.f32 0.0, %v4110
        %v4112 = vpop.f32.mrb[0].mxu0
        %v4113 = vadd.f32 0.0, %v4112
        %v4114 = vpop.f32.mrb[0].mxu0
        %v4115 = vadd.f32 0.0, %v4114
        %4116 = vdwg.mxu0
        %v4117 = vmax.f32 %v4039, %v4041
        %4118 = vmax.xlane.f32.xlu0 %v4117
        %v4119 = vpop.xlane.xlu0 %4118
        %v4120 = vmax.f32 %v4043, %v4045
        %4121 = vmax.xlane.f32.xlu0 %v4120
        %v4122 = vpop.xlane.xlu0 %4121
        %v4123 = vmax.f32 %v4049, %v4051
        %4124 = vmax.xlane.f32.xlu0 %v4123
        %v4125 = vpop.xlane.xlu0 %4124
        %v4126 = vmax.f32 %v4053, %v4055
        %4127 = vmax.xlane.f32.xlu0 %v4126
        %v4128 = vpop.xlane.xlu0 %4127
        %v4129 = vmax.f32 %v4059, %v4061
        %4130 = vmax.xlane.f32.xlu0 %v4129
        %v4131 = vpop.xlane.xlu0 %4130
        %v4132 = vmax.f32 %v4063, %v4065
        %4133 = vmax.xlane.f32.xlu0 %v4132
        %v4134 = vpop.xlane.xlu0 %4133
        %v4135 = vmax.f32 %v4069, %v4071
        %4136 = vmax.xlane.f32.xlu0 %v4135
        %v4137 = vpop.xlane.xlu0 %4136
        %v4138 = vmax.f32 %v4073, %v4075
        %4139 = vmax.xlane.f32.xlu0 %v4138
        %v4140 = vpop.xlane.xlu0 %4139
        %v4141 = vmax.f32 %v4079, %v4081
        %4142 = vmax.xlane.f32.xlu0 %v4141
        %v4143 = vpop.xlane.xlu0 %4142
        %v4144 = vmax.f32 %v4083, %v4085
        %4145 = vmax.xlane.f32.xlu0 %v4144
        %v4146 = vpop.xlane.xlu0 %4145
        %v4147 = vmax.f32 %v4089, %v4091
        %4148 = vmax.xlane.f32.xlu0 %v4147
        %v4149 = vpop.xlane.xlu0 %4148
        %v4150 = vmax.f32 %v4093, %v4095
        %4151 = vmax.xlane.f32.xlu0 %v4150
        %v4152 = vpop.xlane.xlu0 %4151
        %v4153 = vmax.f32 %v4099, %v4101
        %4154 = vmax.xlane.f32.xlu0 %v4153
        %v4155 = vpop.xlane.xlu0 %4154
        %v4156 = vmax.f32 %v4103, %v4105
        %4157 = vmax.xlane.f32.xlu0 %v4156
        %v4158 = vpop.xlane.xlu0 %4157
        %v4159 = vmax.f32 %v4109, %v4111
        %4160 = vmax.xlane.f32.xlu0 %v4159
        %v4161 = vpop.xlane.xlu0 %4160
        %v4162 = vmax.f32 %v4113, %v4115
        %4163 = vmax.xlane.f32.xlu0 %v4162
        %v4164 = vpop.xlane.xlu0 %4163
        %v4165 = vsub.f32 %v4039, %v4119
        %v4166 = vsub.f32 %v4041, %v4119
        %v4167 = vsub.f32 %v4043, %v4122
        %v4168 = vsub.f32 %v4045, %v4122
        %v4169 = vsub.f32 %v4049, %v4125
        %v4170 = vsub.f32 %v4051, %v4125
        %v4171 = vsub.f32 %v4053, %v4128
        %v4172 = vsub.f32 %v4055, %v4128
        %v4173 = vsub.f32 %v4059, %v4131
        %v4174 = vsub.f32 %v4061, %v4131
        %v4175 = vsub.f32 %v4063, %v4134
        %v4176 = vsub.f32 %v4065, %v4134
        %v4177 = vsub.f32 %v4069, %v4137
        %v4178 = vsub.f32 %v4071, %v4137
        %v4179 = vsub.f32 %v4073, %v4140
        %v4180 = vsub.f32 %v4075, %v4140
        %v4181 = vsub.f32 %v4079, %v4143
        %v4182 = vsub.f32 %v4081, %v4143
        %v4183 = vsub.f32 %v4083, %v4146
        %v4184 = vsub.f32 %v4085, %v4146
        %v4185 = vsub.f32 %v4089, %v4149
        %v4186 = vsub.f32 %v4091, %v4149
        %v4187 = vsub.f32 %v4093, %v4152
        %v4188 = vsub.f32 %v4095, %v4152
        %v4189 = vsub.f32 %v4099, %v4155
        %v4190 = vsub.f32 %v4101, %v4155
        %v4191 = vsub.f32 %v4103, %v4158
        %v4192 = vsub.f32 %v4105, %v4158
        %v4193 = vsub.f32 %v4109, %v4161
        %v4194 = vsub.f32 %v4111, %v4161
        %v4195 = vsub.f32 %v4113, %v4164
        %v4196 = vsub.f32 %v4115, %v4164
        %v4197 = vmul.f32 %v4165, 1.442695
        %v4198 = vpow.pop %v4197
        %v4199 = vmul.f32 %v4166, 1.442695
        %v4200 = vpow.pop %v4199
        %v4201 = vmul.f32 %v4167, 1.442695
        %v4202 = vpow.pop %v4201
        %v4203 = vmul.f32 %v4168, 1.442695
        %v4204 = vpow.pop %v4203
        %v4205 = vmul.f32 %v4169, 1.442695
        %v4206 = vpow.pop %v4205
        %v4207 = vmul.f32 %v4170, 1.442695
        %v4208 = vpow.pop %v4207
        %v4209 = vmul.f32 %v4171, 1.442695
        %v4210 = vpow.pop %v4209
        %v4211 = vmul.f32 %v4172, 1.442695
        %v4212 = vpow.pop %v4211
        %v4213 = vmul.f32 %v4173, 1.442695
        %v4214 = vpow.pop %v4213
        %v4215 = vmul.f32 %v4174, 1.442695
        %v4216 = vpow.pop %v4215
        %v4217 = vmul.f32 %v4175, 1.442695
        %v4218 = vpow.pop %v4217
        %v4219 = vmul.f32 %v4176, 1.442695
        %v4220 = vpow.pop %v4219
        %v4221 = vmul.f32 %v4177, 1.442695
        %v4222 = vpow.pop %v4221
        %v4223 = vmul.f32 %v4178, 1.442695
        %v4224 = vpow.pop %v4223
        %v4225 = vmul.f32 %v4179, 1.442695
        %v4226 = vpow.pop %v4225
        %v4227 = vmul.f32 %v4180, 1.442695
        %v4228 = vpow.pop %v4227
        %v4229 = vmul.f32 %v4181, 1.442695
        %v4230 = vpow.pop %v4229
        %v4231 = vmul.f32 %v4182, 1.442695
        %v4232 = vpow.pop %v4231
        %v4233 = vmul.f32 %v4183, 1.442695
        %v4234 = vpow.pop %v4233
        %v4235 = vmul.f32 %v4184, 1.442695
        %v4236 = vpow.pop %v4235
        %v4237 = vmul.f32 %v4185, 1.442695
        %v4238 = vpow.pop %v4237
        %v4239 = vmul.f32 %v4186, 1.442695
        %v4240 = vpow.pop %v4239
        %v4241 = vmul.f32 %v4187, 1.442695
        %v4242 = vpow.pop %v4241
        %v4243 = vmul.f32 %v4188, 1.442695
        %v4244 = vpow.pop %v4243
        %v4245 = vmul.f32 %v4189, 1.442695
        %v4246 = vpow.pop %v4245
        %v4247 = vmul.f32 %v4190, 1.442695
        %v4248 = vpow.pop %v4247
        %v4249 = vmul.f32 %v4191, 1.442695
        %v4250 = vpow.pop %v4249
        %v4251 = vmul.f32 %v4192, 1.442695
        %v4252 = vpow.pop %v4251
        %v4253 = vmul.f32 %v4193, 1.442695
        %v4254 = vpow.pop %v4253
        %v4255 = vmul.f32 %v4194, 1.442695
        %v4256 = vpow.pop %v4255
        %v4257 = vmul.f32 %v4195, 1.442695
        %v4258 = vpow.pop %v4257
        %v4259 = vmul.f32 %v4196, 1.442695
        %v4260 = vpow.pop %v4259
        %v4261 = vadd.f32 %v4198, %v4200
        %4262 = vadd.xlane.f32.xlu0 %v4261
        %v4263 = vpop.xlane.xlu0 %4262
        %v4264 = vadd.f32 %v4202, %v4204
        %4265 = vadd.xlane.f32.xlu0 %v4264
        %v4266 = vpop.xlane.xlu0 %4265
        %v4267 = vadd.f32 %v4206, %v4208
        %4268 = vadd.xlane.f32.xlu0 %v4267
        %v4269 = vpop.xlane.xlu0 %4268
        %v4270 = vadd.f32 %v4210, %v4212
        %4271 = vadd.xlane.f32.xlu0 %v4270
        %v4272 = vpop.xlane.xlu0 %4271
        %v4273 = vadd.f32 %v4214, %v4216
        %4274 = vadd.xlane.f32.xlu0 %v4273
        %v4275 = vpop.xlane.xlu0 %4274
        %v4276 = vadd.f32 %v4218, %v4220
        %4277 = vadd.xlane.f32.xlu0 %v4276
        %v4278 = vpop.xlane.xlu0 %4277
        %v4279 = vadd.f32 %v4222, %v4224
        %4280 = vadd.xlane.f32.xlu0 %v4279
        %v4281 = vpop.xlane.xlu0 %4280
        %v4282 = vadd.f32 %v4226, %v4228
        %4283 = vadd.xlane.f32.xlu0 %v4282
        %v4284 = vpop.xlane.xlu0 %4283
        %v4285 = vadd.f32 %v4230, %v4232
        %4286 = vadd.xlane.f32.xlu0 %v4285
        %v4287 = vpop.xlane.xlu0 %4286
        %v4288 = vadd.f32 %v4234, %v4236
        %4289 = vadd.xlane.f32.xlu0 %v4288
        %v4290 = vpop.xlane.xlu0 %4289
        %v4291 = vadd.f32 %v4238, %v4240
        %4292 = vadd.xlane.f32.xlu0 %v4291
        %v4293 = vpop.xlane.xlu0 %4292
        %v4294 = vadd.f32 %v4242, %v4244
        %4295 = vadd.xlane.f32.xlu0 %v4294
        %v4296 = vpop.xlane.xlu0 %4295
        %v4297 = vadd.f32 %v4246, %v4248
        %4298 = vadd.xlane.f32.xlu0 %v4297
        %v4299 = vpop.xlane.xlu0 %4298
        %v4300 = vadd.f32 %v4250, %v4252
        %4301 = vadd.xlane.f32.xlu0 %v4300
        %v4302 = vpop.xlane.xlu0 %4301
        %v4303 = vadd.f32 %v4254, %v4256
        %4304 = vadd.xlane.f32.xlu0 %v4303
        %v4305 = vpop.xlane.xlu0 %4304
        %v4306 = vadd.f32 %v4258, %v4260
        %4307 = vadd.xlane.f32.xlu0 %v4306
        %v4308 = vpop.xlane.xlu0 %4307
        %v4309 = vpack.c.bf16 %v4202, %v4198
        %v4310 = vpack.c.bf16 %v4204, %v4200
        %v4311 = vpack.c.bf16 %v4210, %v4206
        %v4312 = vpack.c.bf16 %v4212, %v4208
        %v4313 = vpack.c.bf16 %v4218, %v4214
        %v4314 = vpack.c.bf16 %v4220, %v4216
        %v4315 = vpack.c.bf16 %v4226, %v4222
        %v4316 = vpack.c.bf16 %v4228, %v4224
        %v4317 = vpack.c.bf16 %v4234, %v4230
        %v4318 = vpack.c.bf16 %v4236, %v4232
        %v4319 = vpack.c.bf16 %v4242, %v4238
        %v4320 = vpack.c.bf16 %v4244, %v4240
        %v4321 = vpack.c.bf16 %v4250, %v4246
        %v4322 = vpack.c.bf16 %v4252, %v4248
        %v4323 = vpack.c.bf16 %v4258, %v4254
        %v4324 = vpack.c.bf16 %v4260, %v4256
        %4325 = vmatprep.subr.bf16.mxu0 0
        %4326 = vmatpush1.bf16.msra.mxu0 %v3916
        %4327 = vmatprep.subr.bf16.mxu0 0
        %4328 = vmatpush1.bf16.msra.mxu0 %v3917
        %4329 = vmatprep.subr.bf16.mxu0 0
        %4330 = vmatpush1.bf16.msra.mxu0 %v3918
        %4331 = vmatprep.subr.bf16.mxu0 0
        %4332 = vmatpush1.bf16.msra.mxu0 %v3919
        %4333 = vmatprep.subr.bf16.mxu0 0
        %4334 = vmatpush1.bf16.msra.mxu0 %v3920
        %4335 = vmatprep.subr.bf16.mxu0 0
        %4336 = vmatpush1.bf16.msra.mxu0 %v3921
        %4337 = vmatprep.subr.bf16.mxu0 0
        %4338 = vmatpush1.bf16.msra.mxu0 %v3922
        %4339 = vmatprep.subr.bf16.mxu0 0
        %4340 = vmatpush1.bf16.msra.mxu0 %v3923
        %4341 = vmatprep.subr.bf16.mxu0 0
        %4342 = vmatpush1.bf16.msra.mxu0 %v3924
        %4343 = vmatprep.subr.bf16.mxu0 0
        %4344 = vmatpush1.bf16.msra.mxu0 %v3925
        %4345 = vmatprep.subr.bf16.mxu0 0
        %4346 = vmatpush1.bf16.msra.mxu0 %v3926
        %4347 = vmatprep.subr.bf16.mxu0 0
        %4348 = vmatpush1.bf16.msra.mxu0 %v3927
        %4349 = vmatprep.subr.bf16.mxu0 0
        %4350 = vmatpush1.bf16.msra.mxu0 %v3928
        %4351 = vmatprep.subr.bf16.mxu0 0
        %4352 = vmatpush1.bf16.msra.mxu0 %v3929
        %4353 = vmatprep.subr.bf16.mxu0 0
        %4354 = vmatpush1.bf16.msra.mxu0 %v3930
        %4355 = vmatprep.subr.bf16.mxu0 0
        %4356 = vmatpush1.bf16.msra.mxu0 %v3931
        %4357 = vmatprep.mubr.bf16.mxu0 %v4310
        %4358 = vmatmul.mubr.bf16.gmra.mrb[0].mxu0 %v4309
        %v4359 = vpop.f32.mrb[0].mxu0
        %v4360 = vadd.f32 0.0, %v4359
        %v4361 = vpop.f32.mrb[0].mxu0
        %v4362 = vpop.f32.mrb[0].mxu0
        %v4363 = vadd.f32 0.0, %v4362
        %v4364 = vpop.f32.mrb[0].mxu0
        %4365 = vmatprep.mubr.bf16.mxu0 %v4312
        %4366 = vmatmul.mubr.bf16.gmra.mrb[0].mxu0 %v4311
        %v4367 = vpop.f32.mrb[0].mxu0
        %v4368 = vadd.f32 0.0, %v4367
        %v4369 = vpop.f32.mrb[0].mxu0
        %v4370 = vpop.f32.mrb[0].mxu0
        %v4371 = vadd.f32 0.0, %v4370
        %v4372 = vpop.f32.mrb[0].mxu0
        %4373 = vmatprep.mubr.bf16.mxu0 %v4314
        %4374 = vmatmul.mubr.bf16.gmra.mrb[0].mxu0 %v4313
        %v4375 = vpop.f32.mrb[0].mxu0
        %v4376 = vadd.f32 0.0, %v4375
        %v4377 = vpop.f32.mrb[0].mxu0
        %v4378 = vpop.f32.mrb[0].mxu0
        %v4379 = vadd.f32 0.0, %v4378
        %v4380 = vpop.f32.mrb[0].mxu0
        %4381 = vmatprep.mubr.bf16.mxu0 %v4316
        %4382 = vmatmul.mubr.bf16.gmra.mrb[0].mxu0 %v4315
        %v4383 = vpop.f32.mrb[0].mxu0
        %v4384 = vadd.f32 0.0, %v4383
        %v4385 = vpop.f32.mrb[0].mxu0
        %v4386 = vpop.f32.mrb[0].mxu0
        %v4387 = vadd.f32 0.0, %v4386
        %v4388 = vpop.f32.mrb[0].mxu0
        %4389 = vmatprep.mubr.bf16.mxu0 %v4318
        %4390 = vmatmul.mubr.bf16.gmra.mrb[0].mxu0 %v4317
        %v4391 = vpop.f32.mrb[0].mxu0
        %v4392 = vadd.f32 0.0, %v4391
        %v4393 = vpop.f32.mrb[0].mxu0
        %v4394 = vpop.f32.mrb[0].mxu0
        %v4395 = vadd.f32 0.0, %v4394
        %v4396 = vpop.f32.mrb[0].mxu0
        %4397 = vmatprep.mubr.bf16.mxu0 %v4320
        %4398 = vmatmul.mubr.bf16.gmra.mrb[0].mxu0 %v4319
        %v4399 = vpop.f32.mrb[0].mxu0
        %v4400 = vadd.f32 0.0, %v4399
        %v4401 = vpop.f32.mrb[0].mxu0
        %v4402 = vpop.f32.mrb[0].mxu0
        %v4403 = vadd.f32 0.0, %v4402
        %v4404 = vpop.f32.mrb[0].mxu0
        %4405 = vmatprep.mubr.bf16.mxu0 %v4322
        %4406 = vmatmul.mubr.bf16.gmra.mrb[0].mxu0 %v4321
        %v4407 = vpop.f32.mrb[0].mxu0
        %v4408 = vadd.f32 0.0, %v4407
        %v4409 = vpop.f32.mrb[0].mxu0
        %v4410 = vpop.f32.mrb[0].mxu0
        %v4411 = vadd.f32 0.0, %v4410
        %v4412 = vpop.f32.mrb[0].mxu0
        %4413 = vmatprep.mubr.bf16.mxu0 %v4324
        %4414 = vmatmul.mubr.bf16.gmra.mrb[0].mxu0 %v4323
        %v4415 = vpop.f32.mrb[0].mxu0
        %v4416 = vadd.f32 0.0, %v4415
        %v4417 = vpop.f32.mrb[0].mxu0
        %v4418 = vpop.f32.mrb[0].mxu0
        %v4419 = vadd.f32 0.0, %v4418
        %v4420 = vpop.f32.mrb[0].mxu0
        %4421 = vdwg.mxu0
        %v4422 = vrcp.pop %v4263
        %v4423 = vrcp.pop %v4266
        %v4424 = vrcp.pop %v4269
        %v4425 = vrcp.pop %v4272
        %v4426 = vrcp.pop %v4275
        %v4427 = vrcp.pop %v4278
        %v4428 = vrcp.pop %v4281
        %v4429 = vrcp.pop %v4284
        %v4430 = vrcp.pop %v4287
        %v4431 = vrcp.pop %v4290
        %v4432 = vrcp.pop %v4293
        %v4433 = vrcp.pop %v4296
        %v4434 = vrcp.pop %v4299
        %v4435 = vrcp.pop %v4302
        %v4436 = vrcp.pop %v4305
        %v4437 = vrcp.pop %v4308
        %v4438 = vmul.f32 %v4360, %v4422
        %v4439 = vmul.f32 %v4363, %v4423
        %v4440 = vmul.f32 %v4368, %v4424
        %v4441 = vmul.f32 %v4371, %v4425
        %v4442 = vmul.f32 %v4376, %v4426
        %v4443 = vmul.f32 %v4379, %v4427
        %v4444 = vmul.f32 %v4384, %v4428
        %v4445 = vmul.f32 %v4387, %v4429
        %v4446 = vmul.f32 %v4392, %v4430
        %v4447 = vmul.f32 %v4395, %v4431
        %v4448 = vmul.f32 %v4400, %v4432
        %v4449 = vmul.f32 %v4403, %v4433
        %v4450 = vmul.f32 %v4408, %v4434
        %v4451 = vmul.f32 %v4411, %v4435
        %v4452 = vmul.f32 %v4416, %v4436
        %v4453 = vmul.f32 %v4419, %v4437
        %v4454 = vpack.c.bf16 %v4439, %v4438
        %v4455 = vpack.c.bf16 %v4441, %v4440
        %v4456 = vpack.c.bf16 %v4443, %v4442
        %v4457 = vpack.c.bf16 %v4445, %v4444
        %v4458 = vpack.c.bf16 %v4447, %v4446
        %v4459 = vpack.c.bf16 %v4449, %v4448
        %v4460 = vpack.c.bf16 %v4451, %v4450
        %v4461 = vpack.c.bf16 %v4453, %v4452
        %v4462 = vld [vmem:[#allocation15 + $0x80] sm:$0xff]
        %v4463 = vld [vmem:[#allocation15 + $0x88] sm:$0xff]
        %v4464 = vld [vmem:[#allocation15 + $0x90] sm:$0xff]
        %v4465 = vld [vmem:[#allocation15 + $0x98] sm:$0xff]
        %v4466 = vld [vmem:[#allocation15 + $0xa0] sm:$0xff]
        %v4467 = vld [vmem:[#allocation15 + $0xa8] sm:$0xff]
        %v4468 = vld [vmem:[#allocation15 + $0xb0] sm:$0xff]
        %v4469 = vld [vmem:[#allocation15 + $0xb8] sm:$0xff]
        %v4478 = vunpack.c.l.b16 %v4462
        %v4479 = vunpack.c.h.b16 %v4462
        %v4480 = vunpack.c.l.b16 %v4463
        %v4481 = vunpack.c.h.b16 %v4463
        %v4482 = vunpack.c.l.b16 %v4464
        %v4483 = vunpack.c.h.b16 %v4464
        %v4484 = vunpack.c.l.b16 %v4465
        %v4485 = vunpack.c.h.b16 %v4465
        %v4486 = vunpack.c.l.b16 %v4466
        %v4487 = vunpack.c.h.b16 %v4466
        %v4488 = vunpack.c.l.b16 %v4467
        %v4489 = vunpack.c.h.b16 %v4467
        %v4490 = vunpack.c.l.b16 %v4468
        %v4491 = vunpack.c.h.b16 %v4468
        %v4492 = vunpack.c.l.b16 %v4469
        %v4493 = vunpack.c.h.b16 %v4469
        %v4494 = vpack.c.b16 %v4480, %v4478
        %v4495 = vpack.c.b16 %v4481, %v4479
        %v4496 = vpack.c.b16 %v4484, %v4482
        %v4497 = vpack.c.b16 %v4485, %v4483
        %v4498 = vpack.c.b16 %v4488, %v4486
        %v4499 = vpack.c.b16 %v4489, %v4487
        %v4500 = vpack.c.b16 %v4492, %v4490
        %v4501 = vpack.c.b16 %v4493, %v4491
        %v4511 = vsel %vm2333, %v4454, 0
        %v4514 = vsel %vm2333, %v4455, 0
        %v4517 = vsel %vm2333, %v4456, 0
        %v4520 = vsel %vm2333, %v4457, 0
        %v4523 = vsel %vm2333, %v4458, 0
        %v4526 = vsel %vm2333, %v4459, 0
        %v4529 = vsel %vm2333, %v4460, 0
        %v4532 = vsel %vm2333, %v4461, 0
        %4534 = vmatprep.subr.bf16.mxu0 %v4495
        %4535 = vmatpush1.bf16.msra.mxu0 %v4494
        %4536 = vmatprep.subr.bf16.mxu0 %v4497
        %4537 = vmatpush1.bf16.msra.mxu0 %v4496
        %4538 = vmatprep.subr.bf16.mxu0 %v4499
        %4539 = vmatpush1.bf16.msra.mxu0 %v4498
        %4540 = vmatprep.subr.bf16.mxu0 %v4501
        %4541 = vmatpush1.bf16.msra.mxu0 %v4500
        %4542 = vmatprep.subr.bf16.mxu0 0
        %4543 = vmatpush1.bf16.msra.mxu0 0
        %4544 = vmatprep.subr.bf16.mxu0 0
        %4545 = vmatpush1.bf16.msra.mxu0 0
        %4546 = vmatprep.subr.bf16.mxu0 0
        %4547 = vmatpush1.bf16.msra.mxu0 0
        %4548 = vmatprep.subr.bf16.mxu0 0
        %4549 = vmatpush1.bf16.msra.mxu0 0
        %4550 = vmatprep.subr.bf16.mxu0 0
        %4551 = vmatpush1.bf16.msra.mxu0 0
        %4552 = vmatprep.subr.bf16.mxu0 0
        %4553 = vmatpush1.bf16.msra.mxu0 0
        %4554 = vmatprep.subr.bf16.mxu0 0
        %4555 = vmatpush1.bf16.msra.mxu0 0
        %4556 = vmatprep.subr.bf16.mxu0 0
        %4557 = vmatpush1.bf16.msra.mxu0 0
        %4558 = vmatprep.subr.bf16.mxu0 0
        %4559 = vmatpush1.bf16.msra.mxu0 0
        %4560 = vmatprep.subr.bf16.mxu0 0
        %4561 = vmatpush1.bf16.msra.mxu0 0
        %4562 = vmatprep.subr.bf16.mxu0 0
        %4563 = vmatpush1.bf16.msra.mxu0 0
        %4564 = vmatprep.subr.bf16.mxu0 0
        %4565 = vmatpush1.bf16.msra.mxu0 0
        %4566 = vmatprep.mubr.bf16.mxu0 0
        %4567 = vmatmul.mubr.bf16.gmra.mrb[0].mxu0 %v4511
        %v4568 = vpop.f32.mrb[0].mxu0
        %v4569 = vadd.f32 0.0, %v4568
        %v4570 = vpop.f32.mrb[0].mxu0
        %v4571 = vadd.f32 0.0, %v4570
        %v4572 = vpop.f32.mrb[0].mxu0
        %v4573 = vadd.f32 0.0, %v4572
        %v4574 = vpop.f32.mrb[0].mxu0
        %v4575 = vadd.f32 0.0, %v4574
        %4576 = vmatprep.mubr.bf16.mxu0 0
        %4577 = vmatmul.mubr.bf16.gmra.mrb[0].mxu0 %v4514
        %v4578 = vpop.f32.mrb[0].mxu0
        %v4579 = vadd.f32 0.0, %v4578
        %v4580 = vpop.f32.mrb[0].mxu0
        %v4581 = vadd.f32 0.0, %v4580
        %v4582 = vpop.f32.mrb[0].mxu0
        %v4583 = vadd.f32 0.0, %v4582
        %v4584 = vpop.f32.mrb[0].mxu0
        %v4585 = vadd.f32 0.0, %v4584
        %4586 = vmatprep.mubr.bf16.mxu0 0
        %4587 = vmatmul.mubr.bf16.gmra.mrb[0].mxu0 %v4517
        %v4588 = vpop.f32.mrb[0].mxu0
        %v4589 = vadd.f32 0.0, %v4588
        %v4590 = vpop.f32.mrb[0].mxu0
        %v4591 = vadd.f32 0.0, %v4590
        %v4592 = vpop.f32.mrb[0].mxu0
        %v4593 = vadd.f32 0.0, %v4592
        %v4594 = vpop.f32.mrb[0].mxu0
        %v4595 = vadd.f32 0.0, %v4594
        %4596 = vmatprep.mubr.bf16.mxu0 0
        %4597 = vmatmul.mubr.bf16.gmra.mrb[0].mxu0 %v4520
        %v4598 = vpop.f32.mrb[0].mxu0
        %v4599 = vadd.f32 0.0, %v4598
        %v4600 = vpop.f32.mrb[0].mxu0
        %v4601 = vadd.f32 0.0, %v4600
        %v4602 = vpop.f32.mrb[0].mxu0
        %v4603 = vadd.f32 0.0, %v4602
        %v4604 = vpop.f32.mrb[0].mxu0
        %v4605 = vadd.f32 0.0, %v4604
        %4606 = vmatprep.mubr.bf16.mxu0 0
        %4607 = vmatmul.mubr.bf16.gmra.mrb[0].mxu0 %v4523
        %v4608 = vpop.f32.mrb[0].mxu0
        %v4609 = vadd.f32 0.0, %v4608
        %v4610 = vpop.f32.mrb[0].mxu0
        %v4611 = vadd.f32 0.0, %v4610
        %v4612 = vpop.f32.mrb[0].mxu0
        %v4613 = vadd.f32 0.0, %v4612
        %v4614 = vpop.f32.mrb[0].mxu0
        %v4615 = vadd.f32 0.0, %v4614
        %4616 = vmatprep.mubr.bf16.mxu0 0
        %4617 = vmatmul.mubr.bf16.gmra.mrb[0].mxu0 %v4526
        %v4618 = vpop.f32.mrb[0].mxu0
        %v4619 = vadd.f32 0.0, %v4618
        %v4620 = vpop.f32.mrb[0].mxu0
        %v4621 = vadd.f32 0.0, %v4620
        %v4622 = vpop.f32.mrb[0].mxu0
        %v4623 = vadd.f32 0.0, %v4622
        %v4624 = vpop.f32.mrb[0].mxu0
        %v4625 = vadd.f32 0.0, %v4624
        %4626 = vmatprep.mubr.bf16.mxu0 0
        %4627 = vmatmul.mubr.bf16.gmra.mrb[0].mxu0 %v4529
        %v4628 = vpop.f32.mrb[0].mxu0
        %v4629 = vadd.f32 0.0, %v4628
        %v4630 = vpop.f32.mrb[0].mxu0
        %v4631 = vadd.f32 0.0, %v4630
        %v4632 = vpop.f32.mrb[0].mxu0
        %v4633 = vadd.f32 0.0, %v4632
        %v4634 = vpop.f32.mrb[0].mxu0
        %v4635 = vadd.f32 0.0, %v4634
        %4636 = vmatprep.mubr.bf16.mxu0 0
        %4637 = vmatmul.mubr.bf16.gmra.mrb[0].mxu0 %v4532
        %v4638 = vpop.f32.mrb[0].mxu0
        %v4639 = vadd.f32 0.0, %v4638
        %v4640 = vpop.f32.mrb[0].mxu0
        %v4641 = vadd.f32 0.0, %v4640
        %v4642 = vpop.f32.mrb[0].mxu0
        %v4643 = vadd.f32 0.0, %v4642
        %v4644 = vpop.f32.mrb[0].mxu0
        %v4645 = vadd.f32 0.0, %v4644
        %4646 = vdwg.mxu0
        %v4647 = vadd.f32 %v3822, %v4569
        %v4648 = vadd.f32 %v3824, %v4571
        %v4649 = vadd.f32 %v3826, %v4573
        %v4650 = vadd.f32 %v3828, %v4575
        %v4651 = vadd.f32 %v3832, %v4579
        %v4652 = vadd.f32 %v3834, %v4581
        %v4653 = vadd.f32 %v3836, %v4583
        %v4654 = vadd.f32 %v3838, %v4585
        %v4655 = vadd.f32 %v3842, %v4589
        %v4656 = vadd.f32 %v3844, %v4591
        %v4657 = vadd.f32 %v3846, %v4593
        %v4658 = vadd.f32 %v3848, %v4595
        %v4659 = vadd.f32 %v3852, %v4599
        %v4660 = vadd.f32 %v3854, %v4601
        %v4661 = vadd.f32 %v3856, %v4603
        %v4662 = vadd.f32 %v3858, %v4605
        %v4663 = vadd.f32 %v3862, %v4609
        %v4664 = vadd.f32 %v3864, %v4611
        %v4665 = vadd.f32 %v3866, %v4613
        %v4666 = vadd.f32 %v3868, %v4615
        %v4667 = vadd.f32 %v3872, %v4619
        %v4668 = vadd.f32 %v3874, %v4621
        %v4669 = vadd.f32 %v3876, %v4623
        %v4670 = vadd.f32 %v3878, %v4625
        %v4671 = vadd.f32 %v3882, %v4629
        %v4672 = vadd.f32 %v3884, %v4631
        %v4673 = vadd.f32 %v3886, %v4633
        %v4674 = vadd.f32 %v3888, %v4635
        %v4675 = vadd.f32 %v3892, %v4639
        %v4676 = vadd.f32 %v3894, %v4641
        %v4677 = vadd.f32 %v3896, %v4643
        %v4678 = vadd.f32 %v3898, %v4645
        %4687 = vrot.lane.b32.xlu0 %v2286, 64
        %v4688 = vpop.permute.xlu0 %4687
        %4689 = vrot.lane.b32.xlu0 %v2288, 64
        %v4690 = vpop.permute.xlu0 %4689
        %4691 = vrot.lane.b32.xlu0 %v2290, 64
        %v4692 = vpop.permute.xlu0 %4691
        %4693 = vrot.lane.b32.xlu0 %v2292, 64
        %v4694 = vpop.permute.xlu0 %4693
        %4695 = vrot.lane.b32.xlu0 %v2294, 64
        %v4696 = vpop.permute.xlu0 %4695
        %4697 = vrot.lane.b32.xlu0 %v2296, 64
        %v4698 = vpop.permute.xlu0 %4697
        %4699 = vrot.lane.b32.xlu0 %v2298, 64
        %v4700 = vpop.permute.xlu0 %4699
        %4701 = vrot.lane.b32.xlu0 %v2300, 64
        %v4702 = vpop.permute.xlu0 %4701
        %4719 = vrot.lane.b32.xlu0 %v3900, 64
        %v4720 = vpop.permute.xlu0 %4719
        %4721 = vrot.lane.b32.xlu0 %v3901, 64
        %v4722 = vpop.permute.xlu0 %4721
        %4723 = vrot.lane.b32.xlu0 %v3902, 64
        %v4724 = vpop.permute.xlu0 %4723
        %4725 = vrot.lane.b32.xlu0 %v3903, 64
        %v4726 = vpop.permute.xlu0 %4725
        %4727 = vrot.lane.b32.xlu0 %v3904, 64
        %v4728 = vpop.permute.xlu0 %4727
        %4729 = vrot.lane.b32.xlu0 %v3905, 64
        %v4730 = vpop.permute.xlu0 %4729
        %4731 = vrot.lane.b32.xlu0 %v3906, 64
        %v4732 = vpop.permute.xlu0 %4731
        %4733 = vrot.lane.b32.xlu0 %v3907, 64
        %v4734 = vpop.permute.xlu0 %4733
        %4735 = vrot.lane.b32.xlu0 %v3908, 64
        %v4736 = vpop.permute.xlu0 %4735
        %4737 = vrot.lane.b32.xlu0 %v3909, 64
        %v4738 = vpop.permute.xlu0 %4737
        %4739 = vrot.lane.b32.xlu0 %v3910, 64
        %v4740 = vpop.permute.xlu0 %4739
        %4741 = vrot.lane.b32.xlu0 %v3911, 64
        %v4742 = vpop.permute.xlu0 %4741
        %4743 = vrot.lane.b32.xlu0 %v3912, 64
        %v4744 = vpop.permute.xlu0 %4743
        %4745 = vrot.lane.b32.xlu0 %v3913, 64
        %v4746 = vpop.permute.xlu0 %4745
        %4747 = vrot.lane.b32.xlu0 %v3914, 64
        %v4748 = vpop.permute.xlu0 %4747
        %4749 = vrot.lane.b32.xlu0 %v3915, 64
        %v4750 = vpop.permute.xlu0 %4749
        %v4752 = vsel %vm2333, %v4688, 0
        %v4755 = vsel %vm2333, %v4690, 0
        %v4758 = vsel %vm2333, %v4692, 0
        %v4761 = vsel %vm2333, %v4694, 0
        %v4764 = vsel %vm2333, %v4696, 0
        %v4767 = vsel %vm2333, %v4698, 0
        %v4770 = vsel %vm2333, %v4700, 0
        %v4773 = vsel %vm2333, %v4702, 0
        %v4776 = vsel %vm2333, %v4720, 0
        %v4779 = vsel %vm2333, %v4722, 0
        %v4782 = vsel %vm2333, %v4724, 0
        %v4785 = vsel %vm2333, %v4726, 0
        %v4788 = vsel %vm2333, %v4728, 0
        %v4791 = vsel %vm2333, %v4730, 0
        %v4794 = vsel %vm2333, %v4732, 0
        %v4797 = vsel %vm2333, %v4734, 0
        %v4800 = vsel %vm2333, %v4736, 0
        %v4803 = vsel %vm2333, %v4738, 0
        %v4806 = vsel %vm2333, %v4740, 0
        %v4809 = vsel %vm2333, %v4742, 0
        %v4812 = vsel %vm2333, %v4744, 0
        %v4815 = vsel %vm2333, %v4746, 0
        %v4818 = vsel %vm2333, %v4748, 0
        %v4821 = vsel %vm2333, %v4750, 0
        %4823 = vmatprep.subr.bf16.mxu0 0
        %4824 = vmatpush1.bf16.xpose.msra.mxu0 %v4776
        %4825 = vmatprep.subr.bf16.mxu0 0
        %4826 = vmatpush1.bf16.xpose.msra.mxu0 %v4779
        %4827 = vmatprep.subr.bf16.mxu0 0
        %4828 = vmatpush1.bf16.xpose.msra.mxu0 %v4782
        %4829 = vmatprep.subr.bf16.mxu0 0
        %4830 = vmatpush1.bf16.xpose.msra.mxu0 %v4785
        %4831 = vmatprep.subr.bf16.mxu0 0
        %4832 = vmatpush1.bf16.xpose.msra.mxu0 %v4788
        %4833 = vmatprep.subr.bf16.mxu0 0
        %4834 = vmatpush1.bf16.xpose.msra.mxu0 %v4791
        %4835 = vmatprep.subr.bf16.mxu0 0
        %4836 = vmatpush1.bf16.xpose.msra.mxu0 %v4794
        %4837 = vmatprep.subr.bf16.mxu0 0
        %4838 = vmatpush1.bf16.xpose.msra.mxu0 %v4797
        %4839 = vmatprep.subr.bf16.mxu0 0
        %4840 = vmatpush1.bf16.xpose.msra.mxu0 %v4800
        %4841 = vmatprep.subr.bf16.mxu0 0
        %4842 = vmatpush1.bf16.xpose.msra.mxu0 %v4803
        %4843 = vmatprep.subr.bf16.mxu0 0
        %4844 = vmatpush1.bf16.xpose.msra.mxu0 %v4806
        %4845 = vmatprep.subr.bf16.mxu0 0
        %4846 = vmatpush1.bf16.xpose.msra.mxu0 %v4809
        %4847 = vmatprep.subr.bf16.mxu0 0
        %4848 = vmatpush1.bf16.xpose.msra.mxu0 %v4812
        %4849 = vmatprep.subr.bf16.mxu0 0
        %4850 = vmatpush1.bf16.xpose.msra.mxu0 %v4815
        %4851 = vmatprep.subr.bf16.mxu0 0
        %4852 = vmatpush1.bf16.xpose.msra.mxu0 %v4818
        %4853 = vmatprep.subr.bf16.mxu0 0
        %4854 = vmatpush1.bf16.xpose.msra.mxu0 %v4821
        %4855 = vmatprep.mubr.bf16.mxu0 0
        %4856 = vmatmul.mubr.bf16.gmra.mrb[0].mxu0 %v4752
        %v4857 = vpop.f32.mrb[0].mxu0
        %v4858 = vadd.f32 0.0, %v4857
        %v4859 = vpop.f32.mrb[0].mxu0
        %v4860 = vadd.f32 0.0, %v4859
        %v4861 = vpop.f32.mrb[0].mxu0
        %v4862 = vadd.f32 0.0, %v4861
        %v4863 = vpop.f32.mrb[0].mxu0
        %v4864 = vadd.f32 0.0, %v4863
        %4865 = vmatprep.mubr.bf16.mxu0 0
        %4866 = vmatmul.mubr.bf16.gmra.mrb[0].mxu0 %v4755
        %v4867 = vpop.f32.mrb[0].mxu0
        %v4868 = vadd.f32 0.0, %v4867
        %v4869 = vpop.f32.mrb[0].mxu0
        %v4870 = vadd.f32 0.0, %v4869
        %v4871 = vpop.f32.mrb[0].mxu0
        %v4872 = vadd.f32 0.0, %v4871
        %v4873 = vpop.f32.mrb[0].mxu0
        %v4874 = vadd.f32 0.0, %v4873
        %4875 = vmatprep.mubr.bf16.mxu0 0
        %4876 = vmatmul.mubr.bf16.gmra.mrb[0].mxu0 %v4758
        %v4877 = vpop.f32.mrb[0].mxu0
        %v4878 = vadd.f32 0.0, %v4877
        %v4879 = vpop.f32.mrb[0].mxu0
        %v4880 = vadd.f32 0.0, %v4879
        %v4881 = vpop.f32.mrb[0].mxu0
        %v4882 = vadd.f32 0.0, %v4881
        %v4883 = vpop.f32.mrb[0].mxu0
        %v4884 = vadd.f32 0.0, %v4883
        %4885 = vmatprep.mubr.bf16.mxu0 0
        %4886 = vmatmul.mubr.bf16.gmra.mrb[0].mxu0 %v4761
        %v4887 = vpop.f32.mrb[0].mxu0
        %v4888 = vadd.f32 0.0, %v4887
        %v4889 = vpop.f32.mrb[0].mxu0
        %v4890 = vadd.f32 0.0, %v4889
        %v4891 = vpop.f32.mrb[0].mxu0
        %v4892 = vadd.f32 0.0, %v4891
        %v4893 = vpop.f32.mrb[0].mxu0
        %v4894 = vadd.f32 0.0, %v4893
        %4895 = vmatprep.mubr.bf16.mxu0 0
        %4896 = vmatmul.mubr.bf16.gmra.mrb[0].mxu0 %v4764
        %v4897 = vpop.f32.mrb[0].mxu0
        %v4898 = vadd.f32 0.0, %v4897
        %v4899 = vpop.f32.mrb[0].mxu0
        %v4900 = vadd.f32 0.0, %v4899
        %v4901 = vpop.f32.mrb[0].mxu0
        %v4902 = vadd.f32 0.0, %v4901
        %v4903 = vpop.f32.mrb[0].mxu0
        %v4904 = vadd.f32 0.0, %v4903
        %4905 = vmatprep.mubr.bf16.mxu0 0
        %4906 = vmatmul.mubr.bf16.gmra.mrb[0].mxu0 %v4767
        %v4907 = vpop.f32.mrb[0].mxu0
        %v4908 = vadd.f32 0.0, %v4907
        %v4909 = vpop.f32.mrb[0].mxu0
        %v4910 = vadd.f32 0.0, %v4909
        %v4911 = vpop.f32.mrb[0].mxu0
        %v4912 = vadd.f32 0.0, %v4911
        %v4913 = vpop.f32.mrb[0].mxu0
        %v4914 = vadd.f32 0.0, %v4913
        %4915 = vmatprep.mubr.bf16.mxu0 0
        %4916 = vmatmul.mubr.bf16.gmra.mrb[0].mxu0 %v4770
        %v4917 = vpop.f32.mrb[0].mxu0
        %v4918 = vadd.f32 0.0, %v4917
        %v4919 = vpop.f32.mrb[0].mxu0
        %v4920 = vadd.f32 0.0, %v4919
        %v4921 = vpop.f32.mrb[0].mxu0
        %v4922 = vadd.f32 0.0, %v4921
        %v4923 = vpop.f32.mrb[0].mxu0
        %v4924 = vadd.f32 0.0, %v4923
        %4925 = vmatprep.mubr.bf16.mxu0 0
        %4926 = vmatmul.mubr.bf16.gmra.mrb[0].mxu0 %v4773
        %v4927 = vpop.f32.mrb[0].mxu0
        %v4928 = vadd.f32 0.0, %v4927
        %v4929 = vpop.f32.mrb[0].mxu0
        %v4930 = vadd.f32 0.0, %v4929
        %v4931 = vpop.f32.mrb[0].mxu0
        %v4932 = vadd.f32 0.0, %v4931
        %v4933 = vpop.f32.mrb[0].mxu0
        %v4934 = vadd.f32 0.0, %v4933
        %4935 = vdwg.mxu0
        %v4936 = vmax.f32 %v4858, %v4860
        %4937 = vmax.xlane.f32.xlu0 %v4936
        %v4938 = vpop.xlane.xlu0 %4937
        %v4939 = vmax.f32 %v4862, %v4864
        %4940 = vmax.xlane.f32.xlu0 %v4939
        %v4941 = vpop.xlane.xlu0 %4940
        %v4942 = vmax.f32 %v4868, %v4870
        %4943 = vmax.xlane.f32.xlu0 %v4942
        %v4944 = vpop.xlane.xlu0 %4943
        %v4945 = vmax.f32 %v4872, %v4874
        %4946 = vmax.xlane.f32.xlu0 %v4945
        %v4947 = vpop.xlane.xlu0 %4946
        %v4948 = vmax.f32 %v4878, %v4880
        %4949 = vmax.xlane.f32.xlu0 %v4948
        %v4950 = vpop.xlane.xlu0 %4949
        %v4951 = vmax.f32 %v4882, %v4884
        %4952 = vmax.xlane.f32.xlu0 %v4951
        %v4953 = vpop.xlane.xlu0 %4952
        %v4954 = vmax.f32 %v4888, %v4890
        %4955 = vmax.xlane.f32.xlu0 %v4954
        %v4956 = vpop.xlane.xlu0 %4955
        %v4957 = vmax.f32 %v4892, %v4894
        %4958 = vmax.xlane.f32.xlu0 %v4957
        %v4959 = vpop.xlane.xlu0 %4958
        %v4960 = vmax.f32 %v4898, %v4900
        %4961 = vmax.xlane.f32.xlu0 %v4960
        %v4962 = vpop.xlane.xlu0 %4961
        %v4963 = vmax.f32 %v4902, %v4904
        %4964 = vmax.xlane.f32.xlu0 %v4963
        %v4965 = vpop.xlane.xlu0 %4964
        %v4966 = vmax.f32 %v4908, %v4910
        %4967 = vmax.xlane.f32.xlu0 %v4966
        %v4968 = vpop.xlane.xlu0 %4967
        %v4969 = vmax.f32 %v4912, %v4914
        %4970 = vmax.xlane.f32.xlu0 %v4969
        %v4971 = vpop.xlane.xlu0 %4970
        %v4972 = vmax.f32 %v4918, %v4920
        %4973 = vmax.xlane.f32.xlu0 %v4972
        %v4974 = vpop.xlane.xlu0 %4973
        %v4975 = vmax.f32 %v4922, %v4924
        %4976 = vmax.xlane.f32.xlu0 %v4975
        %v4977 = vpop.xlane.xlu0 %4976
        %v4978 = vmax.f32 %v4928, %v4930
        %4979 = vmax.xlane.f32.xlu0 %v4978
        %v4980 = vpop.xlane.xlu0 %4979
        %v4981 = vmax.f32 %v4932, %v4934
        %4982 = vmax.xlane.f32.xlu0 %v4981
        %v4983 = vpop.xlane.xlu0 %4982
        %v4984 = vsub.f32 %v4858, %v4938
        %v4985 = vsub.f32 %v4860, %v4938
        %v4986 = vsub.f32 %v4862, %v4941
        %v4987 = vsub.f32 %v4864, %v4941
        %v4988 = vsub.f32 %v4868, %v4944
        %v4989 = vsub.f32 %v4870, %v4944
        %v4990 = vsub.f32 %v4872, %v4947
        %v4991 = vsub.f32 %v4874, %v4947
        %v4992 = vsub.f32 %v4878, %v4950
        %v4993 = vsub.f32 %v4880, %v4950
        %v4994 = vsub.f32 %v4882, %v4953
        %v4995 = vsub.f32 %v4884, %v4953
        %v4996 = vsub.f32 %v4888, %v4956
        %v4997 = vsub.f32 %v4890, %v4956
        %v4998 = vsub.f32 %v4892, %v4959
        %v4999 = vsub.f32 %v4894, %v4959
        %v5000 = vsub.f32 %v4898, %v4962
        %v5001 = vsub.f32 %v4900, %v4962
        %v5002 = vsub.f32 %v4902, %v4965
        %v5003 = vsub.f32 %v4904, %v4965
        %v5004 = vsub.f32 %v4908, %v4968
        %v5005 = vsub.f32 %v4910, %v4968
        %v5006 = vsub.f32 %v4912, %v4971
        %v5007 = vsub.f32 %v4914, %v4971
        %v5008 = vsub.f32 %v4918, %v4974
        %v5009 = vsub.f32 %v4920, %v4974
        %v5010 = vsub.f32 %v4922, %v4977
        %v5011 = vsub.f32 %v4924, %v4977
        %v5012 = vsub.f32 %v4928, %v4980
        %v5013 = vsub.f32 %v4930, %v4980
        %v5014 = vsub.f32 %v4932, %v4983
        %v5015 = vsub.f32 %v4934, %v4983
        %v5016 = vmul.f32 %v4984, 1.442695
        %v5017 = vpow.pop %v5016
        %v5018 = vmul.f32 %v4985, 1.442695
        %v5019 = vpow.pop %v5018
        %v5020 = vmul.f32 %v4986, 1.442695
        %v5021 = vpow.pop %v5020
        %v5022 = vmul.f32 %v4987, 1.442695
        %v5023 = vpow.pop %v5022
        %v5024 = vmul.f32 %v4988, 1.442695
        %v5025 = vpow.pop %v5024
        %v5026 = vmul.f32 %v4989, 1.442695
        %v5027 = vpow.pop %v5026
        %v5028 = vmul.f32 %v4990, 1.442695
        %v5029 = vpow.pop %v5028
        %v5030 = vmul.f32 %v4991, 1.442695
        %v5031 = vpow.pop %v5030
        %v5032 = vmul.f32 %v4992, 1.442695
        %v5033 = vpow.pop %v5032
        %v5034 = vmul.f32 %v4993, 1.442695
        %v5035 = vpow.pop %v5034
        %v5036 = vmul.f32 %v4994, 1.442695
        %v5037 = vpow.pop %v5036
        %v5038 = vmul.f32 %v4995, 1.442695
        %v5039 = vpow.pop %v5038
        %v5040 = vmul.f32 %v4996, 1.442695
        %v5041 = vpow.pop %v5040
        %v5042 = vmul.f32 %v4997, 1.442695
        %v5043 = vpow.pop %v5042
        %v5044 = vmul.f32 %v4998, 1.442695
        %v5045 = vpow.pop %v5044
        %v5046 = vmul.f32 %v4999, 1.442695
        %v5047 = vpow.pop %v5046
        %v5048 = vmul.f32 %v5000, 1.442695
        %v5049 = vpow.pop %v5048
        %v5050 = vmul.f32 %v5001, 1.442695
        %v5051 = vpow.pop %v5050
        %v5052 = vmul.f32 %v5002, 1.442695
        %v5053 = vpow.pop %v5052
        %v5054 = vmul.f32 %v5003, 1.442695
        %v5055 = vpow.pop %v5054
        %v5056 = vmul.f32 %v5004, 1.442695
        %v5057 = vpow.pop %v5056
        %v5058 = vmul.f32 %v5005, 1.442695
        %v5059 = vpow.pop %v5058
        %v5060 = vmul.f32 %v5006, 1.442695
        %v5061 = vpow.pop %v5060
        %v5062 = vmul.f32 %v5007, 1.442695
        %v5063 = vpow.pop %v5062
        %v5064 = vmul.f32 %v5008, 1.442695
        %v5065 = vpow.pop %v5064
        %v5066 = vmul.f32 %v5009, 1.442695
        %v5067 = vpow.pop %v5066
        %v5068 = vmul.f32 %v5010, 1.442695
        %v5069 = vpow.pop %v5068
        %v5070 = vmul.f32 %v5011, 1.442695
        %v5071 = vpow.pop %v5070
        %v5072 = vmul.f32 %v5012, 1.442695
        %v5073 = vpow.pop %v5072
        %v5074 = vmul.f32 %v5013, 1.442695
        %v5075 = vpow.pop %v5074
        %v5076 = vmul.f32 %v5014, 1.442695
        %v5077 = vpow.pop %v5076
        %v5078 = vmul.f32 %v5015, 1.442695
        %v5079 = vpow.pop %v5078
        %v5080 = vadd.f32 %v5017, %v5019
        %5081 = vadd.xlane.f32.xlu0 %v5080
        %v5082 = vpop.xlane.xlu0 %5081
        %v5083 = vadd.f32 %v5021, %v5023
        %5084 = vadd.xlane.f32.xlu0 %v5083
        %v5085 = vpop.xlane.xlu0 %5084
        %v5086 = vadd.f32 %v5025, %v5027
        %5087 = vadd.xlane.f32.xlu0 %v5086
        %v5088 = vpop.xlane.xlu0 %5087
        %v5089 = vadd.f32 %v5029, %v5031
        %5090 = vadd.xlane.f32.xlu0 %v5089
        %v5091 = vpop.xlane.xlu0 %5090
        %v5092 = vadd.f32 %v5033, %v5035
        %5093 = vadd.xlane.f32.xlu0 %v5092
        %v5094 = vpop.xlane.xlu0 %5093
        %v5095 = vadd.f32 %v5037, %v5039
        %5096 = vadd.xlane.f32.xlu0 %v5095
        %v5097 = vpop.xlane.xlu0 %5096
        %v5098 = vadd.f32 %v5041, %v5043
        %5099 = vadd.xlane.f32.xlu0 %v5098
        %v5100 = vpop.xlane.xlu0 %5099
        %v5101 = vadd.f32 %v5045, %v5047
        %5102 = vadd.xlane.f32.xlu0 %v5101
        %v5103 = vpop.xlane.xlu0 %5102
        %v5104 = vadd.f32 %v5049, %v5051
        %5105 = vadd.xlane.f32.xlu0 %v5104
        %v5106 = vpop.xlane.xlu0 %5105
        %v5107 = vadd.f32 %v5053, %v5055
        %5108 = vadd.xlane.f32.xlu0 %v5107
        %v5109 = vpop.xlane.xlu0 %5108
        %v5110 = vadd.f32 %v5057, %v5059
        %5111 = vadd.xlane.f32.xlu0 %v5110
        %v5112 = vpop.xlane.xlu0 %5111
        %v5113 = vadd.f32 %v5061, %v5063
        %5114 = vadd.xlane.f32.xlu0 %v5113
        %v5115 = vpop.xlane.xlu0 %5114
        %v5116 = vadd.f32 %v5065, %v5067
        %5117 = vadd.xlane.f32.xlu0 %v5116
        %v5118 = vpop.xlane.xlu0 %5117
        %v5119 = vadd.f32 %v5069, %v5071
        %5120 = vadd.xlane.f32.xlu0 %v5119
        %v5121 = vpop.xlane.xlu0 %5120
        %v5122 = vadd.f32 %v5073, %v5075
        %5123 = vadd.xlane.f32.xlu0 %v5122
        %v5124 = vpop.xlane.xlu0 %5123
        %v5125 = vadd.f32 %v5077, %v5079
        %5126 = vadd.xlane.f32.xlu0 %v5125
        %v5127 = vpop.xlane.xlu0 %5126
        %v5128 = vpack.c.bf16 %v5021, %v5017
        %v5129 = vpack.c.bf16 %v5023, %v5019
        %v5130 = vpack.c.bf16 %v5029, %v5025
        %v5131 = vpack.c.bf16 %v5031, %v5027
        %v5132 = vpack.c.bf16 %v5037, %v5033
        %v5133 = vpack.c.bf16 %v5039, %v5035
        %v5134 = vpack.c.bf16 %v5045, %v5041
        %v5135 = vpack.c.bf16 %v5047, %v5043
        %v5136 = vpack.c.bf16 %v5053, %v5049
        %v5137 = vpack.c.bf16 %v5055, %v5051
        %v5138 = vpack.c.bf16 %v5061, %v5057
        %v5139 = vpack.c.bf16 %v5063, %v5059
        %v5140 = vpack.c.bf16 %v5069, %v5065
        %v5141 = vpack.c.bf16 %v5071, %v5067
        %v5142 = vpack.c.bf16 %v5077, %v5073
        %v5143 = vpack.c.bf16 %v5079, %v5075
        %5160 = vrot.lane.b32.xlu0 %v3916, 64
        %v5161 = vpop.permute.xlu0 %5160
        %5162 = vrot.lane.b32.xlu0 %v3917, 64
        %v5163 = vpop.permute.xlu0 %5162
        %5164 = vrot.lane.b32.xlu0 %v3918, 64
        %v5165 = vpop.permute.xlu0 %5164
        %5166 = vrot.lane.b32.xlu0 %v3919, 64
        %v5167 = vpop.permute.xlu0 %5166
        %5168 = vrot.lane.b32.xlu0 %v3920, 64
        %v5169 = vpop.permute.xlu0 %5168
        %5170 = vrot.lane.b32.xlu0 %v3921, 64
        %v5171 = vpop.permute.xlu0 %5170
        %5172 = vrot.lane.b32.xlu0 %v3922, 64
        %v5173 = vpop.permute.xlu0 %5172
        %5174 = vrot.lane.b32.xlu0 %v3923, 64
        %v5175 = vpop.permute.xlu0 %5174
        %5176 = vrot.lane.b32.xlu0 %v3924, 64
        %v5177 = vpop.permute.xlu0 %5176
        %5178 = vrot.lane.b32.xlu0 %v3925, 64
        %v5179 = vpop.permute.xlu0 %5178
        %5180 = vrot.lane.b32.xlu0 %v3926, 64
        %v5181 = vpop.permute.xlu0 %5180
        %5182 = vrot.lane.b32.xlu0 %v3927, 64
        %v5183 = vpop.permute.xlu0 %5182
        %5184 = vrot.lane.b32.xlu0 %v3928, 64
        %v5185 = vpop.permute.xlu0 %5184
        %5186 = vrot.lane.b32.xlu0 %v3929, 64
        %v5187 = vpop.permute.xlu0 %5186
        %5188 = vrot.lane.b32.xlu0 %v3930, 64
        %v5189 = vpop.permute.xlu0 %5188
        %5190 = vrot.lane.b32.xlu0 %v3931, 64
        %v5191 = vpop.permute.xlu0 %5190
        %5208 = vmatprep.subr.bf16.mxu0 0
        %5209 = vmatpush1.bf16.msra.mxu0 %v5161
        %5210 = vmatprep.subr.bf16.mxu0 0
        %5211 = vmatpush1.bf16.msra.mxu0 %v5163
        %5212 = vmatprep.subr.bf16.mxu0 0
        %5213 = vmatpush1.bf16.msra.mxu0 %v5165
        %5214 = vmatprep.subr.bf16.mxu0 0
        %5215 = vmatpush1.bf16.msra.mxu0 %v5167
        %5216 = vmatprep.subr.bf16.mxu0 0
        %5217 = vmatpush1.bf16.msra.mxu0 %v5169
        %5218 = vmatprep.subr.bf16.mxu0 0
        %5219 = vmatpush1.bf16.msra.mxu0 %v5171
        %5220 = vmatprep.subr.bf16.mxu0 0
        %5221 = vmatpush1.bf16.msra.mxu0 %v5173
        %5222 = vmatprep.subr.bf16.mxu0 0
        %5223 = vmatpush1.bf16.msra.mxu0 %v5175
        %5224 = vmatprep.subr.bf16.mxu0 0
        %5225 = vmatpush1.bf16.msra.mxu0 %v5177
        %5226 = vmatprep.subr.bf16.mxu0 0
        %5227 = vmatpush1.bf16.msra.mxu0 %v5179
        %5228 = vmatprep.subr.bf16.mxu0 0
        %5229 = vmatpush1.bf16.msra.mxu0 %v5181
        %5230 = vmatprep.subr.bf16.mxu0 0
        %5231 = vmatpush1.bf16.msra.mxu0 %v5183
        %5232 = vmatprep.subr.bf16.mxu0 0
        %5233 = vmatpush1.bf16.msra.mxu0 %v5185
        %5234 = vmatprep.subr.bf16.mxu0 0
        %5235 = vmatpush1.bf16.msra.mxu0 %v5187
        %5236 = vmatprep.subr.bf16.mxu0 0
        %5237 = vmatpush1.bf16.msra.mxu0 %v5189
        %5238 = vmatprep.subr.bf16.mxu0 0
        %5239 = vmatpush1.bf16.msra.mxu0 %v5191
        %5240 = vmatprep.mubr.bf16.mxu0 %v5129
        %5241 = vmatmul.mubr.bf16.gmra.mrb[0].mxu0 %v5128
        %v5242 = vpop.f32.mrb[0].mxu0
        %v5243 = vadd.f32 0.0, %v5242
        %v5244 = vpop.f32.mrb[0].mxu0
        %v5245 = vpop.f32.mrb[0].mxu0
        %v5246 = vadd.f32 0.0, %v5245
        %v5247 = vpop.f32.mrb[0].mxu0
        %5248 = vmatprep.mubr.bf16.mxu0 %v5131
        %5249 = vmatmul.mubr.bf16.gmra.mrb[0].mxu0 %v5130
        %v5250 = vpop.f32.mrb[0].mxu0
        %v5251 = vadd.f32 0.0, %v5250
        %v5252 = vpop.f32.mrb[0].mxu0
        %v5253 = vpop.f32.mrb[0].mxu0
        %v5254 = vadd.f32 0.0, %v5253
        %v5255 = vpop.f32.mrb[0].mxu0
        %5256 = vmatprep.mubr.bf16.mxu0 %v5133
        %5257 = vmatmul.mubr.bf16.gmra.mrb[0].mxu0 %v5132
        %v5258 = vpop.f32.mrb[0].mxu0
        %v5259 = vadd.f32 0.0, %v5258
        %v5260 = vpop.f32.mrb[0].mxu0
        %v5261 = vpop.f32.mrb[0].mxu0
        %v5262 = vadd.f32 0.0, %v5261
        %v5263 = vpop.f32.mrb[0].mxu0
        %5264 = vmatprep.mubr.bf16.mxu0 %v5135
        %5265 = vmatmul.mubr.bf16.gmra.mrb[0].mxu0 %v5134
        %v5266 = vpop.f32.mrb[0].mxu0
        %v5267 = vadd.f32 0.0, %v5266
        %v5268 = vpop.f32.mrb[0].mxu0
        %v5269 = vpop.f32.mrb[0].mxu0
        %v5270 = vadd.f32 0.0, %v5269
        %v5271 = vpop.f32.mrb[0].mxu0
        %5272 = vmatprep.mubr.bf16.mxu0 %v5137
        %5273 = vmatmul.mubr.bf16.gmra.mrb[0].mxu0 %v5136
        %v5274 = vpop.f32.mrb[0].mxu0
        %v5275 = vadd.f32 0.0, %v5274
        %v5276 = vpop.f32.mrb[0].mxu0
        %v5277 = vpop.f32.mrb[0].mxu0
        %v5278 = vadd.f32 0.0, %v5277
        %v5279 = vpop.f32.mrb[0].mxu0
        %5280 = vmatprep.mubr.bf16.mxu0 %v5139
        %5281 = vmatmul.mubr.bf16.gmra.mrb[0].mxu0 %v5138
        %v5282 = vpop.f32.mrb[0].mxu0
        %v5283 = vadd.f32 0.0, %v5282
        %v5284 = vpop.f32.mrb[0].mxu0
        %v5285 = vpop.f32.mrb[0].mxu0
        %v5286 = vadd.f32 0.0, %v5285
        %v5287 = vpop.f32.mrb[0].mxu0
        %5288 = vmatprep.mubr.bf16.mxu0 %v5141
        %5289 = vmatmul.mubr.bf16.gmra.mrb[0].mxu0 %v5140
        %v5290 = vpop.f32.mrb[0].mxu0
        %v5291 = vadd.f32 0.0, %v5290
        %v5292 = vpop.f32.mrb[0].mxu0
        %v5293 = vpop.f32.mrb[0].mxu0
        %v5294 = vadd.f32 0.0, %v5293
        %v5295 = vpop.f32.mrb[0].mxu0
        %5296 = vmatprep.mubr.bf16.mxu0 %v5143
        %5297 = vmatmul.mubr.bf16.gmra.mrb[0].mxu0 %v5142
        %v5298 = vpop.f32.mrb[0].mxu0
        %v5299 = vadd.f32 0.0, %v5298
        %v5300 = vpop.f32.mrb[0].mxu0
        %v5301 = vpop.f32.mrb[0].mxu0
        %v5302 = vadd.f32 0.0, %v5301
        %v5303 = vpop.f32.mrb[0].mxu0
        %5304 = vdwg.mxu0
        %v5305 = vrcp.pop %v5082
        %v5306 = vrcp.pop %v5085
        %v5307 = vrcp.pop %v5088
        %v5308 = vrcp.pop %v5091
        %v5309 = vrcp.pop %v5094
        %v5310 = vrcp.pop %v5097
        %v5311 = vrcp.pop %v5100
        %v5312 = vrcp.pop %v5103
        %v5313 = vrcp.pop %v5106
        %v5314 = vrcp.pop %v5109
        %v5315 = vrcp.pop %v5112
        %v5316 = vrcp.pop %v5115
        %v5317 = vrcp.pop %v5118
        %v5318 = vrcp.pop %v5121
        %v5319 = vrcp.pop %v5124
        %v5320 = vrcp.pop %v5127
        %v5321 = vmul.f32 %v5243, %v5305
        %v5322 = vmul.f32 %v5246, %v5306
        %v5323 = vmul.f32 %v5251, %v5307
        %v5324 = vmul.f32 %v5254, %v5308
        %v5325 = vmul.f32 %v5259, %v5309
        %v5326 = vmul.f32 %v5262, %v5310
        %v5327 = vmul.f32 %v5267, %v5311
        %v5328 = vmul.f32 %v5270, %v5312
        %v5329 = vmul.f32 %v5275, %v5313
        %v5330 = vmul.f32 %v5278, %v5314
        %v5331 = vmul.f32 %v5283, %v5315
        %v5332 = vmul.f32 %v5286, %v5316
        %v5333 = vmul.f32 %v5291, %v5317
        %v5334 = vmul.f32 %v5294, %v5318
        %v5335 = vmul.f32 %v5299, %v5319
        %v5336 = vmul.f32 %v5302, %v5320
        %v5337 = vpack.c.bf16 %v5322, %v5321
        %v5338 = vpack.c.bf16 %v5324, %v5323
        %v5339 = vpack.c.bf16 %v5326, %v5325
        %v5340 = vpack.c.bf16 %v5328, %v5327
        %v5341 = vpack.c.bf16 %v5330, %v5329
        %v5342 = vpack.c.bf16 %v5332, %v5331
        %v5343 = vpack.c.bf16 %v5334, %v5333
        %v5344 = vpack.c.bf16 %v5336, %v5335
        %v5345 = vld [vmem:[#allocation15 + $0xc0] sm:$0xff]
        %v5346 = vld [vmem:[#allocation15 + $0xc8] sm:$0xff]
        %v5347 = vld [vmem:[#allocation15 + $0xd0] sm:$0xff]
        %v5348 = vld [vmem:[#allocation15 + $0xd8] sm:$0xff]
        %v5349 = vld [vmem:[#allocation15 + $0xe0] sm:$0xff]
        %v5350 = vld [vmem:[#allocation15 + $0xe8] sm:$0xff]
        %v5351 = vld [vmem:[#allocation15 + $0xf0] sm:$0xff]
        %v5352 = vld [vmem:[#allocation15 + $0xf8] sm:$0xff]
        %v5361 = vunpack.c.l.b16 %v5345
        %v5362 = vunpack.c.h.b16 %v5345
        %v5363 = vunpack.c.l.b16 %v5346
        %v5364 = vunpack.c.h.b16 %v5346
        %v5365 = vunpack.c.l.b16 %v5347
        %v5366 = vunpack.c.h.b16 %v5347
        %v5367 = vunpack.c.l.b16 %v5348
        %v5368 = vunpack.c.h.b16 %v5348
        %v5369 = vunpack.c.l.b16 %v5349
        %v5370 = vunpack.c.h.b16 %v5349
        %v5371 = vunpack.c.l.b16 %v5350
        %v5372 = vunpack.c.h.b16 %v5350
        %v5373 = vunpack.c.l.b16 %v5351
        %v5374 = vunpack.c.h.b16 %v5351
        %v5375 = vunpack.c.l.b16 %v5352
        %v5376 = vunpack.c.h.b16 %v5352
        %v5377 = vpack.c.b16 %v5363, %v5361
        %v5378 = vpack.c.b16 %v5364, %v5362
        %v5379 = vpack.c.b16 %v5367, %v5365
        %v5380 = vpack.c.b16 %v5368, %v5366
        %v5381 = vpack.c.b16 %v5371, %v5369
        %v5382 = vpack.c.b16 %v5372, %v5370
        %v5383 = vpack.c.b16 %v5375, %v5373
        %v5384 = vpack.c.b16 %v5376, %v5374
        %v5394 = vsel %vm2333, %v5337, 0
        %v5397 = vsel %vm2333, %v5338, 0
        %v5400 = vsel %vm2333, %v5339, 0
        %v5403 = vsel %vm2333, %v5340, 0
        %v5406 = vsel %vm2333, %v5341, 0
        %v5409 = vsel %vm2333, %v5342, 0
        %v5412 = vsel %vm2333, %v5343, 0
        %v5415 = vsel %vm2333, %v5344, 0
        %5417 = vmatprep.subr.bf16.mxu0 %v5378
        %5418 = vmatpush1.bf16.msra.mxu0 %v5377
        %5419 = vmatprep.subr.bf16.mxu0 %v5380
        %5420 = vmatpush1.bf16.msra.mxu0 %v5379
        %5421 = vmatprep.subr.bf16.mxu0 %v5382
        %5422 = vmatpush1.bf16.msra.mxu0 %v5381
        %5423 = vmatprep.subr.bf16.mxu0 %v5384
        %5424 = vmatpush1.bf16.msra.mxu0 %v5383
        %5425 = vmatprep.subr.bf16.mxu0 0
        %5426 = vmatpush1.bf16.msra.mxu0 0
        %5427 = vmatprep.subr.bf16.mxu0 0
        %5428 = vmatpush1.bf16.msra.mxu0 0
        %5429 = vmatprep.subr.bf16.mxu0 0
        %5430 = vmatpush1.bf16.msra.mxu0 0
        %5431 = vmatprep.subr.bf16.mxu0 0
        %5432 = vmatpush1.bf16.msra.mxu0 0
        %5433 = vmatprep.subr.bf16.mxu0 0
        %5434 = vmatpush1.bf16.msra.mxu0 0
        %5435 = vmatprep.subr.bf16.mxu0 0
        %5436 = vmatpush1.bf16.msra.mxu0 0
        %5437 = vmatprep.subr.bf16.mxu0 0
        %5438 = vmatpush1.bf16.msra.mxu0 0
        %5439 = vmatprep.subr.bf16.mxu0 0
        %5440 = vmatpush1.bf16.msra.mxu0 0
        %5441 = vmatprep.subr.bf16.mxu0 0
        %5442 = vmatpush1.bf16.msra.mxu0 0
        %5443 = vmatprep.subr.bf16.mxu0 0
        %5444 = vmatpush1.bf16.msra.mxu0 0
        %5445 = vmatprep.subr.bf16.mxu0 0
        %5446 = vmatpush1.bf16.msra.mxu0 0
        %5447 = vmatprep.subr.bf16.mxu0 0
        %5448 = vmatpush1.bf16.msra.mxu0 0
        %5449 = vmatprep.mubr.bf16.mxu0 0
        %5450 = vmatmul.mubr.bf16.gmra.mrb[0].mxu0 %v5394
        %v5451 = vpop.f32.mrb[0].mxu0
        %v5452 = vadd.f32 0.0, %v5451
        %v5453 = vpop.f32.mrb[0].mxu0
        %v5454 = vadd.f32 0.0, %v5453
        %v5455 = vpop.f32.mrb[0].mxu0
        %v5456 = vadd.f32 0.0, %v5455
        %v5457 = vpop.f32.mrb[0].mxu0
        %v5458 = vadd.f32 0.0, %v5457
        %5459 = vmatprep.mubr.bf16.mxu0 0
        %5460 = vmatmul.mubr.bf16.gmra.mrb[0].mxu0 %v5397
        %v5461 = vpop.f32.mrb[0].mxu0
        %v5462 = vadd.f32 0.0, %v5461
        %v5463 = vpop.f32.mrb[0].mxu0
        %v5464 = vadd.f32 0.0, %v5463
        %v5465 = vpop.f32.mrb[0].mxu0
        %v5466 = vadd.f32 0.0, %v5465
        %v5467 = vpop.f32.mrb[0].mxu0
        %v5468 = vadd.f32 0.0, %v5467
        %5469 = vmatprep.mubr.bf16.mxu0 0
        %5470 = vmatmul.mubr.bf16.gmra.mrb[0].mxu0 %v5400
        %v5471 = vpop.f32.mrb[0].mxu0
        %v5472 = vadd.f32 0.0, %v5471
        %v5473 = vpop.f32.mrb[0].mxu0
        %v5474 = vadd.f32 0.0, %v5473
        %v5475 = vpop.f32.mrb[0].mxu0
        %v5476 = vadd.f32 0.0, %v5475
        %v5477 = vpop.f32.mrb[0].mxu0
        %v5478 = vadd.f32 0.0, %v5477
        %5479 = vmatprep.mubr.bf16.mxu0 0
        %5480 = vmatmul.mubr.bf16.gmra.mrb[0].mxu0 %v5403
        %v5481 = vpop.f32.mrb[0].mxu0
        %v5482 = vadd.f32 0.0, %v5481
        %v5483 = vpop.f32.mrb[0].mxu0
        %v5484 = vadd.f32 0.0, %v5483
        %v5485 = vpop.f32.mrb[0].mxu0
        %v5486 = vadd.f32 0.0, %v5485
        %v5487 = vpop.f32.mrb[0].mxu0
        %v5488 = vadd.f32 0.0, %v5487
        %5489 = vmatprep.mubr.bf16.mxu0 0
        %5490 = vmatmul.mubr.bf16.gmra.mrb[0].mxu0 %v5406
        %v5491 = vpop.f32.mrb[0].mxu0
        %v5492 = vadd.f32 0.0, %v5491
        %v5493 = vpop.f32.mrb[0].mxu0
        %v5494 = vadd.f32 0.0, %v5493
        %v5495 = vpop.f32.mrb[0].mxu0
        %v5496 = vadd.f32 0.0, %v5495
        %v5497 = vpop.f32.mrb[0].mxu0
        %v5498 = vadd.f32 0.0, %v5497
        %5499 = vmatprep.mubr.bf16.mxu0 0
        %5500 = vmatmul.mubr.bf16.gmra.mrb[0].mxu0 %v5409
        %v5501 = vpop.f32.mrb[0].mxu0
        %v5502 = vadd.f32 0.0, %v5501
        %v5503 = vpop.f32.mrb[0].mxu0
        %v5504 = vadd.f32 0.0, %v5503
        %v5505 = vpop.f32.mrb[0].mxu0
        %v5506 = vadd.f32 0.0, %v5505
        %v5507 = vpop.f32.mrb[0].mxu0
        %v5508 = vadd.f32 0.0, %v5507
        %5509 = vmatprep.mubr.bf16.mxu0 0
        %5510 = vmatmul.mubr.bf16.gmra.mrb[0].mxu0 %v5412
        %v5511 = vpop.f32.mrb[0].mxu0
        %v5512 = vadd.f32 0.0, %v5511
        %v5513 = vpop.f32.mrb[0].mxu0
        %v5514 = vadd.f32 0.0, %v5513
        %v5515 = vpop.f32.mrb[0].mxu0
        %v5516 = vadd.f32 0.0, %v5515
        %v5517 = vpop.f32.mrb[0].mxu0
        %v5518 = vadd.f32 0.0, %v5517
        %5519 = vmatprep.mubr.bf16.mxu0 0
        %5520 = vmatmul.mubr.bf16.gmra.mrb[0].mxu0 %v5415
        %v5521 = vpop.f32.mrb[0].mxu0
        %v5522 = vadd.f32 0.0, %v5521
        %v5523 = vpop.f32.mrb[0].mxu0
        %v5524 = vadd.f32 0.0, %v5523
        %v5525 = vpop.f32.mrb[0].mxu0
        %v5526 = vadd.f32 0.0, %v5525
        %v5527 = vpop.f32.mrb[0].mxu0
        %v5528 = vadd.f32 0.0, %v5527
        %5529 = vdwg.mxu0
        %v5530 = vadd.f32 %v4647, %v5452
        %v5531 = vadd.f32 %v4648, %v5454
        %v5532 = vadd.f32 %v4649, %v5456
        %v5533 = vadd.f32 %v4650, %v5458
        %v5534 = vadd.f32 %v4651, %v5462
        %v5535 = vadd.f32 %v4652, %v5464
        %v5536 = vadd.f32 %v4653, %v5466
        %v5537 = vadd.f32 %v4654, %v5468
        %v5538 = vadd.f32 %v4655, %v5472
        %v5539 = vadd.f32 %v4656, %v5474
        %v5540 = vadd.f32 %v4657, %v5476
        %v5541 = vadd.f32 %v4658, %v5478
        %v5542 = vadd.f32 %v4659, %v5482
        %v5543 = vadd.f32 %v4660, %v5484
        %v5544 = vadd.f32 %v4661, %v5486
        %v5545 = vadd.f32 %v4662, %v5488
        %v5546 = vadd.f32 %v4663, %v5492
        %v5547 = vadd.f32 %v4664, %v5494
        %v5548 = vadd.f32 %v4665, %v5496
        %v5549 = vadd.f32 %v4666, %v5498
        %v5550 = vadd.f32 %v4667, %v5502
        %v5551 = vadd.f32 %v4668, %v5504
        %v5552 = vadd.f32 %v4669, %v5506
        %v5553 = vadd.f32 %v4670, %v5508
        %v5554 = vadd.f32 %v4671, %v5512
        %v5555 = vadd.f32 %v4672, %v5514
        %v5556 = vadd.f32 %v4673, %v5516
        %v5557 = vadd.f32 %v4674, %v5518
        %v5558 = vadd.f32 %v4675, %v5522
        %v5559 = vadd.f32 %v4676, %v5524
        %v5560 = vadd.f32 %v4677, %v5526
        %v5561 = vadd.f32 %v4678, %v5528
        %v5562 = vld [vmem:[%s10] sm:$0x3]
        %v5564 = vlaneseq
        %v5565 = vshrl.u32 %v5564, 7
        %v5566 = vsub.s32 0, %v5565
        %v5567 = vrot.slane %v5562, %v5566
        %v5568 = vlaneseq
        %v5569 = vshrl.u32 %v5568, 7
        %v5570 = vsub.s32 1, %v5569
        %v5571 = vrot.slane %v5562, %v5570
        %v5574 = vadd.f32 %v5530, %v5567
        %v5575 = vadd.f32 %v5531, %v5571
        %v5576 = vadd.f32 %v5532, %v5567
        %v5577 = vadd.f32 %v5533, %v5571
        %v5578 = vadd.f32 %v5534, %v5567
        %v5579 = vadd.f32 %v5535, %v5571
        %v5580 = vadd.f32 %v5536, %v5567
        %v5581 = vadd.f32 %v5537, %v5571
        %v5582 = vadd.f32 %v5538, %v5567
        %v5583 = vadd.f32 %v5539, %v5571
        %v5584 = vadd.f32 %v5540, %v5567
        %v5585 = vadd.f32 %v5541, %v5571
        %v5586 = vadd.f32 %v5542, %v5567
        %v5587 = vadd.f32 %v5543, %v5571
        %v5588 = vadd.f32 %v5544, %v5567
        %v5589 = vadd.f32 %v5545, %v5571
        %v5590 = vadd.f32 %v5546, %v5567
        %v5591 = vadd.f32 %v5547, %v5571
        %v5592 = vadd.f32 %v5548, %v5567
        %v5593 = vadd.f32 %v5549, %v5571
        %v5594 = vadd.f32 %v5550, %v5567
        %v5595 = vadd.f32 %v5551, %v5571
        %v5596 = vadd.f32 %v5552, %v5567
        %v5597 = vadd.f32 %v5553, %v5571
        %v5598 = vadd.f32 %v5554, %v5567
        %v5599 = vadd.f32 %v5555, %v5571
        %v5600 = vadd.f32 %v5556, %v5567
        %v5601 = vadd.f32 %v5557, %v5571
        %v5602 = vadd.f32 %v5558, %v5567
        %v5603 = vadd.f32 %v5559, %v5571
        %v5604 = vadd.f32 %v5560, %v5567
        %v5605 = vadd.f32 %v5561, %v5571
        %5606 = vst [vmem:[%s558] sm:$0xff] %v5574
        %5607 = vst [vmem:[%s558 + $0x8] sm:$0xff] %v5575
        %5608 = vst [vmem:[%s558 + $0x10] sm:$0xff] %v5576
        %5609 = vst [vmem:[%s558 + $0x18] sm:$0xff] %v5577
        %5610 = vst [vmem:[%s558 + $0x20] sm:$0xff] %v5578
        %5611 = vst [vmem:[%s558 + $0x28] sm:$0xff] %v5579
        %5612 = vst [vmem:[%s558 + $0x30] sm:$0xff] %v5580
        %5613 = vst [vmem:[%s558 + $0x38] sm:$0xff] %v5581
        %5614 = vst [vmem:[%s558 + $0x40] sm:$0xff] %v5582
        %5615 = vst [vmem:[%s558 + $0x48] sm:$0xff] %v5583
        %5616 = vst [vmem:[%s558 + $0x50] sm:$0xff] %v5584
        %5617 = vst [vmem:[%s558 + $0x58] sm:$0xff] %v5585
        %5618 = vst [vmem:[%s558 + $0x60] sm:$0xff] %v5586
        %5619 = vst [vmem:[%s558 + $0x68] sm:$0xff] %v5587
        %5620 = vst [vmem:[%s558 + $0x70] sm:$0xff] %v5588
        %5621 = vst [vmem:[%s558 + $0x78] sm:$0xff] %v5589
        %5622 = vst [vmem:[%s558 + $0x80] sm:$0xff] %v5590
        %5623 = vst [vmem:[%s558 + $0x88] sm:$0xff] %v5591
        %5624 = vst [vmem:[%s558 + $0x90] sm:$0xff] %v5592
        %5625 = vst [vmem:[%s558 + $0x98] sm:$0xff] %v5593
        %5626 = vst [vmem:[%s558 + $0xa0] sm:$0xff] %v5594
        %5627 = vst [vmem:[%s558 + $0xa8] sm:$0xff] %v5595
        %5628 = vst [vmem:[%s558 + $0xb0] sm:$0xff] %v5596
        %5629 = vst [vmem:[%s558 + $0xb8] sm:$0xff] %v5597
        %5630 = vst [vmem:[%s558 + $0xc0] sm:$0xff] %v5598
        %5631 = vst [vmem:[%s558 + $0xc8] sm:$0xff] %v5599
        %5632 = vst [vmem:[%s558 + $0xd0] sm:$0xff] %v5600
        %5633 = vst [vmem:[%s558 + $0xd8] sm:$0xff] %v5601
        %5634 = vst [vmem:[%s558 + $0xe0] sm:$0xff] %v5602
        %5635 = vst [vmem:[%s558 + $0xe8] sm:$0xff] %v5603
        %5636 = vst [vmem:[%s558 + $0xf0] sm:$0xff] %v5604
        %5637 = vst [vmem:[%s558 + $0xf8] sm:$0xff] %v5605
        %s5638 = sand.u32 %s303, 1
        %s5639 = scalar_lea.sflag [#allocation6], %s5638
        %s5640 = sand.u32 %s303, 1
        %s5641 = smul.addr %s5640, 256
        %s5642 = scalar_lea.vmem [#allocation16], %s5641
        // Predicated region
        $region97: #{tpu_custom_call.1} parent=63 // pred_check
          %p5643 = pneg %p313
        $region98: #{tpu_custom_call.1} parent=63 // pred_check_branch
          %5645 = sbr.rel (%p5643) target = $region100
        $region99: #{tpu_custom_call.1} parent=63 // pred_region
          %s5646 = smul.u32 16, %s38
          %s5648 = ssub.s32 4096, 4096
          %5649 = vsyncadd %s5639, %s5648
          %s5650 = smul.addr %s5646, 2
          %s5651 = smul.addr %s37, 64
          %s5652 = sadd.s32 %s5650, %s5651
          %s5653 = smul.addr %s5652, 128
          %s5654 = scalar_lea.hbm %s11, %s5653
          %s5655 = sshll.u32 %s5642, 4
          %s5656 = int_to_ptr.vmem [resolvable:$true] %s5655
          %5661 = dma.vmem_to_hbm [thread:$0]  %s5656, 4096, %s5654, %s5639, 256, 256, 16
        $region100: #{tpu_custom_call.1} parent=63 // pred_fallthru
          _
      $region64: #{tpu_custom_call.1} parent=5 // pred_fallthru
        _
      %p5662 = scmp.le.s32.totalorder 2, %s28
      // Predicated region
      $region101: #{tpu_custom_call.1} parent=5 // pred_check
        %p5663 = pneg %p5662
      $region102: #{tpu_custom_call.1} parent=5 // pred_check_branch
        %5665 = sbr.rel (%p5663) target = $region104
      $region103: #{tpu_custom_call.1} parent=5 // pred_region
        %s5666 = ssub.s32 %s28, 2
        // Predicated region
        $region105: #{tpu_custom_call.1} parent=103 // pred_check
          %p5667 = pneg %p319
        $region106: #{tpu_custom_call.1} parent=103 // pred_check_branch
          %5669 = sbr.rel (%p5667) target = $region108
        $region107: #{tpu_custom_call.1} parent=103 // pred_region
          %s5670 = sand.u32 %s304, 1
          %s5671 = scalar_lea.sflag [#allocation6], %s5670
          %s5672 = sand.u32 %s304, 1
          %s5673 = smul.addr %s5672, 256
          %s5674 = scalar_lea.vmem [#allocation16], %s5673
          %5675 = dma.done %s5671, 4096
        $region108: #{tpu_custom_call.1} parent=103 // pred_fallthru
          _
      $region104: #{tpu_custom_call.1} parent=5 // pred_fallthru
        _
    $region6: #{tpu_custom_call.1} parent=1 // loop_footer
      %s32 = sadd.s32 1, %s28
    $region7: #{tpu_custom_call.1} parent=1 // loop_footer_branch
      %27 = sbr.rel target = $region3
    $region8: #{tpu_custom_call.1} parent=1 // loop_exit
      _
    %5676 = vsyncpa [#allocation5], 1
    %s5677 = scalar_lea.sflag [#allocation5], 1
    %5678 = vsyncpa %s5677, 1
    %5679 = vsyncpa [#allocation8], 1
    %s5680 = scalar_lea.sflag [#allocation8], 1
    %5681 = vsyncpa %s5680, 1
    %5682 = vsyncpa [#allocation11], 1
    %5683 = vsyncpa [#allocation14], 1
    %5684 = vsyncpa [#allocation6], 1
    %s5685 = scalar_lea.sflag [#allocation6], 1
    %5686 = vsyncpa %s5685, 1

</llo_original>
